<compile_context>
chip_gen: v5e
topology: v5e:2x2
jax: 0.10.0
libtpu: 0.0.40
codegen_flags: <defaults>
</compile_context>

<pallas_src>
import functools
import math

import jax
import jax.numpy as jnp
from jax import lax
from jax.experimental import pallas as pl
from jax.experimental.pallas import tpu as pltpu


# ------------------------------ small helpers -------------------------------

def _round_up(x, m):
    return ((x + m - 1) // m) * m


def _pad2(a, rows, cols):
    pr, pc = rows - a.shape[0], cols - a.shape[1]
    if pr == 0 and pc == 0:
        return a
    return jnp.pad(a, ((0, pr), (0, pc)))


# ----------------------------- Pallas kernels ------------------------------

def _mm_kernel(*refs, use_ln, use_res, activation, eps):
    """Tiled matmul with optional fused input-LayerNorm, bias, GELU, residual.

    Ref order: x, w, bias, [gamma, beta], [residual], out, acc_scratch.
    x block [tm, tk], w block [tk, tn], bias [1, tn], gamma/beta [1, tk],
    residual/out [tm, tn], acc f32 [tm, tn].
    """
    idx = 0
    x_ref = refs[idx]; idx += 1
    w_ref = refs[idx]; idx += 1
    b_ref = refs[idx]; idx += 1
    if use_ln:
        g_ref = refs[idx]; idx += 1
        be_ref = refs[idx]; idx += 1
    if use_res:
        r_ref = refs[idx]; idx += 1
    o_ref = refs[idx]; idx += 1
    acc_ref = refs[idx]

    k_idx = pl.program_id(2)
    nk = pl.num_programs(2)

    @pl.when(k_idx == 0)
    def _():
        acc_ref[...] = jnp.zeros_like(acc_ref)

    x = x_ref[...]
    if use_ln:
        # LayerNorm over the (full-K) feature axis, stats in f32.
        xf = x.astype(jnp.float32)
        mean = jnp.mean(xf, axis=-1, keepdims=True)
        var = jnp.mean(jnp.square(xf - mean), axis=-1, keepdims=True)
        xn = (xf - mean) * lax.rsqrt(var + eps)
        x = (xn * g_ref[...] + be_ref[...]).astype(x_ref.dtype)

    acc_ref[...] += jnp.dot(x, w_ref[...], preferred_element_type=jnp.float32)

    @pl.when(k_idx == nk - 1)
    def _():
        out = acc_ref[...] + b_ref[...]
        if activation == "gelu":
            # exact (erf) GELU, matching torch.nn.functional.gelu default
            out = 0.5 * out * (1.0 + lax.erf(out * (1.0 / math.sqrt(2.0))))
        if use_res:
            out = out + r_ref[...].astype(jnp.float32)
        o_ref[...] = out.astype(o_ref.dtype)


def _attn_proj_kernel(qkv_ref, res_ref, wp_ref, bp_ref, o_ref, *,
                      num_heads, scale):
    """Per-batch attention over all heads + output projection + residual.

    qkv_ref block [1, S, 3D] with columns laid out [Q_allheads|K_allheads|V_allheads]
    (weight columns pre-permuted).  Output block [1, S, D] is lane-dense.
    """
    S = qkv_ref.shape[1]
    D = qkv_ref.shape[2] // 3
    hd = D // num_heads

    ctxs = []
    for h in range(num_heads):                       # static loop over heads
        q = qkv_ref[0, :, h * hd:(h + 1) * hd]                     # [S, hd] bf16
        k = qkv_ref[0, :, D + h * hd:D + (h + 1) * hd]
        v = qkv_ref[0, :, 2 * D + h * hd:2 * D + (h + 1) * hd]
        # contract over hd without an explicit transpose (MXU-native layout)
        s = lax.dot_general(q, k, (((1,), (1,)), ((), ())),
                            preferred_element_type=jnp.float32) * scale
        s = s - jnp.max(s, axis=-1, keepdims=True)
        p = jnp.exp(s)
        denom = jnp.sum(p, axis=-1, keepdims=True)
        ctx = jnp.dot(p.astype(qkv_ref.dtype), v,
                      preferred_element_type=jnp.float32)
        ctx = ctx * pl.reciprocal(denom, approx=True)
        ctxs.append(ctx)
    ctx_all = jnp.concatenate(ctxs, axis=-1)          # [S, D] f32, one dense store

    proj = jnp.dot(ctx_all.astype(wp_ref.dtype), wp_ref[...],
                   preferred_element_type=jnp.float32)
    out = proj + bp_ref[...] + res_ref[0].astype(jnp.float32)
    o_ref[0] = out.astype(o_ref.dtype)


# ------------------------------ kernel wrappers -----------------------------

def matmul_fused(x, w, bias, *, ln=None, residual=None, activation=None,
                 eps=1e-6, out_dtype=jnp.bfloat16):
    """y = [residual +] act( LN?(x) @ w + bias ), tiled & pipelined on TPU."""
    M, K = x.shape
    _, N = w.shape
    use_ln = ln is not None
    use_res = residual is not None

    # Tile sizes: big enough to feed the MXU, small enough for v7x's 64 MiB VMEM.
    tm = 256 if M >= 256 else _round_up(M, 16)
    tn = 256 if N >= 256 else _round_up(N, 128)
    if use_ln:
        tk = K                      # LN needs the whole feature row; no K tiling
        Kp = K
    else:
        tk = 512 if K >= 512 else _round_up(K, 128)
        Kp = _round_up(K, tk)
    Mp = _round_up(M, tm)
    Np = _round_up(N, tn)

    xp = _pad2(x.astype(jnp.bfloat16), Mp, Kp)
    wp = _pad2(w.astype(jnp.bfloat16), Kp, Np)
    bp = _pad2(bias.reshape(1, N).astype(jnp.float32), 1, Np)

    inputs = [xp, wp, bp]
    in_specs = [
        pl.BlockSpec((tm, tk), lambda i, j, k: (i, k)),
        pl.BlockSpec((tk, tn), lambda i, j, k: (k, j)),
        pl.BlockSpec((1, tn), lambda i, j, k: (0, j)),
    ]
    if use_ln:
        g, b2 = ln
        inputs += [g.reshape(1, K).astype(jnp.float32),
                   b2.reshape(1, K).astype(jnp.float32)]
        in_specs += [pl.BlockSpec((1, tk), lambda i, j, k: (0, k))] * 2
    if use_res:
        inputs.append(_pad2(residual.astype(jnp.bfloat16), Mp, Np))
        in_specs.append(pl.BlockSpec((tm, tn), lambda i, j, k: (i, j)))

    # explicit VMEM budget from the tile footprint (double-buffered) + margin
    per_set = tm * tk * 2 + tk * tn * 2 + tn * 4 + tm * tn * jnp.dtype(out_dtype).itemsize
    if use_ln:
        per_set += 2 * tk * 4
    if use_res:
        per_set += tm * tn * 2
    vmem_bytes = int(min(max(4 * per_set + tm * tn * 4, 4 << 20), 64 << 20))

    out = pl.pallas_call(
        functools.partial(_mm_kernel, use_ln=use_ln, use_res=use_res,
                          activation=activation, eps=eps),
        out_shape=jax.ShapeDtypeStruct((Mp, Np), out_dtype),
        grid=(Mp // tm, Np // tn, Kp // tk),
        in_specs=in_specs,
        out_specs=pl.BlockSpec((tm, tn), lambda i, j, k: (i, j)),
        scratch_shapes=[pltpu.VMEM((tm, tn), jnp.float32)],
        compiler_params=pltpu.CompilerParams(
            dimension_semantics=("parallel", "parallel", "arbitrary"),
            vmem_limit_bytes=vmem_bytes),
    )(*inputs)

    return out[:M, :N]


def attention_block(qkv, x_res, w_proj, b_proj, *, num_heads,
                    out_dtype=jnp.bfloat16):
    """out = x_res + (softmax(QK^T/sqrt(hd)) V) @ w_proj + b_proj, per batch."""
    B, S, D3 = qkv.shape
    D = D3 // 3
    scale = 1.0 / math.sqrt(D // num_heads)

    return pl.pallas_call(
        functools.partial(_attn_proj_kernel, num_heads=num_heads, scale=scale),
        out_shape=jax.ShapeDtypeStruct((B, S, D), out_dtype),
        grid=(B,),
        in_specs=[
            pl.BlockSpec((1, S, D3), lambda b: (b, 0, 0)),
            pl.BlockSpec((1, S, D), lambda b: (b, 0, 0)),
            pl.BlockSpec((D, D), lambda b: (0, 0)),   # resident across batches
            pl.BlockSpec((1, D), lambda b: (0, 0)),
        ],
        out_specs=pl.BlockSpec((1, S, D), lambda b: (b, 0, 0)),
        compiler_params=pltpu.CompilerParams(
            dimension_semantics=("parallel",)),
    )(qkv.astype(jnp.bfloat16), x_res.astype(jnp.bfloat16),
      w_proj.astype(jnp.bfloat16), b_proj.reshape(1, D).astype(jnp.float32))


# ------------------------------- model glue ---------------------------------

def extract_patches(x, p):
    # NCHW -> [B, num_patches, C*p*p], flattening each patch in (C, ph, pw)
    # order to match Conv2d(weight=[D, C, p, p]) patch embedding.
    B, C, H, W = x.shape
    gh, gw = H // p, W // p
    x = x.reshape(B, C, gh, p, gw, p)
    x = x.transpose(0, 2, 4, 1, 3, 5)          # [B, gh, gw, C, p, p]
    return x.reshape(B, gh * gw, C * p * p)


def vit_block(x, blk, num_heads, eps):
    B, S, D = x.shape
    xf = x.reshape(B * S, D)

    # --- attention sub-block: (LN1 + QKV)  then  (attn + proj + residual) ---
    qkv = matmul_fused(xf, blk["w_qkv"], blk["b_qkv"],
                       ln=(blk["ln1_g"], blk["ln1_b"]), eps=eps)   # [B*S, 3D]
    x2 = attention_block(qkv.reshape(B, S, 3 * D), x,
                         blk["w_proj"], blk["b_proj"], num_heads=num_heads)

    # --- MLP sub-block: (LN2 + fc1 + GELU)  then  (fc2 + residual) ---
    x2f = x2.reshape(B * S, D)
    h = matmul_fused(x2f, blk["w_fc1"], blk["b_fc1"],
                     ln=(blk["ln2_g"], blk["ln2_b"]), activation="gelu", eps=eps)
    x3 = matmul_fused(h, blk["w_fc2"], blk["b_fc2"], residual=x2f)

    return x3.reshape(B, S, D)


def vit_forward(params, x, cfg):
    B = x.shape[0]
    p = cfg["patch_size"]
    D = cfg["dim"]
    eps = cfg["layernorm_epsilon"]
    H = cfg["num_heads"]

    # ---- ViTEmbedding: patch embedding (conv == patch-flatten + matmul) ----
    patches = extract_patches(x, p)                          # [B, N, C*p*p]
    N = patches.shape[1]
    emb = matmul_fused(patches.reshape(B * N, -1),
                       params["patch_w"], params["patch_b"])  # [B*N, D] bf16
    emb = emb.reshape(B, N, D)
    cls = jnp.broadcast_to(params["cls_token"], (B, 1, D))
    tokens = jnp.concatenate([cls, emb], axis=1) + params["pos_embed"]
    tokens = tokens.astype(jnp.bfloat16)
    # Dropout1D -> identity at inference.

    # ---- transformer blocks ----
    for blk in params["blocks"]:
        tokens = vit_block(tokens, blk, H, eps)

    # ---- final norm + ViTHead (LayerNorm is per-token, so selecting the
    #      cls token before LN is equivalent and avoids normalizing B*S rows) ---
    cls_tok = tokens[:, 0, :]                                 # [B, D]
    logits = matmul_fused(cls_tok, params["head_w"], params["head_b"],
                          ln=(params["norm_g"], params["norm_b"]), eps=eps,
                          out_dtype=jnp.float32)
    return logits


# ------------------------------ parameter init -------------------------------
# Deterministic synthetic init (shapes follow the torch module __init__);
# exact kaiming/xavier statistics are not reproduced, only shapes/semantics.

def init_params(key, cfg):
    p, C, D = cfg["patch_size"], cfg["in_chans"], cfg["dim"]
    mlp_dim = cfg["mlp_ratio"] * D
    num_patches = (cfg["img_size"] // p) ** 2
    S = num_patches + 1

    def nrm(k, shape, std=0.02):
        return (std * jax.random.normal(k, shape)).astype(jnp.float32)

    keys = iter(jax.random.split(key, 8 + 8 * cfg["depth"]))
    params = {
        # Conv2d weight [D, C, p, p] flattened -> [C*p*p, D]
        "patch_w": nrm(next(keys), (C * p * p, D)),
        "patch_b": jnp.zeros((D,), jnp.float32),
        "cls_token": nrm(next(keys), (1, 1, D)),
        "pos_embed": nrm(next(keys), (1, S, D)),
        "norm_g": jnp.ones((D,), jnp.float32),
        "norm_b": jnp.zeros((D,), jnp.float32),
        "head_w": nrm(next(keys), (D, cfg["num_classes"])),
        "head_b": jnp.zeros((cfg["num_classes"],), jnp.float32),
        "blocks": [],
    }
    for _ in range(cfg["depth"]):
        params["blocks"].append({
            "ln1_g": jnp.ones((D,), jnp.float32),
            "ln1_b": jnp.zeros((D,), jnp.float32),
            "w_qkv": nrm(next(keys), (D, 3 * D)),
            "b_qkv": nrm(next(keys), (3 * D,), std=0.01),
            "w_proj": nrm(next(keys), (D, D)),
            "b_proj": nrm(next(keys), (D,), std=0.01),
            "ln2_g": jnp.ones((D,), jnp.float32),
            "ln2_b": jnp.zeros((D,), jnp.float32),
            "w_fc1": nrm(next(keys), (D, mlp_dim)),
            "b_fc1": nrm(next(keys), (mlp_dim,), std=0.01),
            "w_fc2": nrm(next(keys), (mlp_dim, D)),
            "b_fc2": nrm(next(keys), (D,), std=0.01),
        })
    return params


def prepare_params(params, cfg):
    """One-time prep: cast weights to bf16 and permute QKV output columns from
    the torch layout (head-major [h][q|k|v]) to [Q_allheads|K_allheads|V_allheads]
    so the attention kernel reads head-contiguous Q/K/V without JAX-level
    slice/transpose glue.  Semantics are unchanged (pure column reorder of the
    same Linear)."""
    D, H = cfg["dim"], cfg["num_heads"]
    hd = D // H
    t = jnp.arange(3)[:, None, None]
    h = jnp.arange(H)[None, :, None]
    j = jnp.arange(hd)[None, None, :]
    perm = (h * 3 * hd + t * hd + j).reshape(-1)   # new col t*D+h*hd+j <- old col

    bf = lambda a: a.astype(jnp.bfloat16)
    f32 = lambda a: a.astype(jnp.float32)
    out = {
        "patch_w": bf(params["patch_w"]), "patch_b": f32(params["patch_b"]),
        "cls_token": bf(params["cls_token"]), "pos_embed": bf(params["pos_embed"]),
        "norm_g": f32(params["norm_g"]), "norm_b": f32(params["norm_b"]),
        "head_w": bf(params["head_w"]), "head_b": f32(params["head_b"]),
        "blocks": [],
    }
    for blk in params["blocks"]:
        out["blocks"].append({
            "ln1_g": f32(blk["ln1_g"]), "ln1_b": f32(blk["ln1_b"]),
            "w_qkv": bf(blk["w_qkv"][:, perm]), "b_qkv": f32(blk["b_qkv"][perm]),
            "w_proj": bf(blk["w_proj"]), "b_proj": f32(blk["b_proj"]),
            "ln2_g": f32(blk["ln2_g"]), "ln2_b": f32(blk["ln2_b"]),
            "w_fc1": bf(blk["w_fc1"]), "b_fc1": f32(blk["b_fc1"]),
            "w_fc2": bf(blk["w_fc2"]), "b_fc2": f32(blk["b_fc2"]),
        })
    return out


# ---------------------------------- main -------------------------------------

if __name__ == "__main__":
    cfg = dict(
        img_size=16,
        patch_size=4,
        in_chans=4,
        num_classes=10,
        depth=2,
        num_heads=4,
        dim=32,
        mlp_ratio=4,
        layernorm_epsilon=1e-6,
    )

    key = jax.random.PRNGKey(0)
    k_param, k_in = jax.random.split(key)
    params = prepare_params(init_params(k_param, cfg), cfg)

    # NCHW input, like torch
    x = jax.random.normal(k_in, (2, cfg["in_chans"], cfg["img_size"], cfg["img_size"]),
                          dtype=jnp.float32)

    fwd = jax.jit(lambda p_, x_: vit_forward(p_, x_, cfg))
    logits = jax.block_until_ready(fwd(params, x))
    assert logits.shape == (2, cfg["num_classes"]), logits.shape
    assert bool(jnp.all(jnp.isfinite(logits)))
    print("KERNEL_OK")
</pallas_src>

<mosaic_0001>
module attributes {stable_mosaic.version = 11 : i64} {
  func.func @_mm_kernel(%arg0: i32, %arg1: i32, %arg2: i32, %arg3: memref<32x128xbf16, #tpu.memory_space<vmem>>, %arg4: memref<128x128xbf16, #tpu.memory_space<vmem>>, %arg5: memref<1x128xf32, #tpu.memory_space<vmem>>, %arg6: memref<32x128xbf16, #tpu.memory_space<vmem>>, %arg7: memref<32x128xf32, #tpu.memory_space<vmem>>) attributes {dimension_semantics = [#tpu.dimension_semantics<parallel>, #tpu.dimension_semantics<parallel>, #tpu.dimension_semantics<arbitrary>], iteration_bounds = array<i64: 1, 1, 1>, scalar_prefetch = 0 : i64, scratch_operands = 1 : i64, tpu.core_type = #tpu.core_type<tc>, window_params = [{transform_indices = @transform_0, window_bounds = array<i64: 32, 128>}, {transform_indices = @transform_1, window_bounds = array<i64: 128, 128>}, {transform_indices = @transform_2, window_bounds = array<i64: 1, 128>}, {transform_indices = @transform_3, window_bounds = array<i64: 32, 128>}]} {
    %c0_i32 = arith.constant 0 : i32
    %0 = arith.cmpi eq, %arg2, %c0_i32 : i32
    %1 = arith.extui %0 : i1 to i32
    %c0_i32_0 = arith.constant 0 : i32
    %2 = arith.cmpi ne, %1, %c0_i32_0 : i32
    scf.if %2 {
      %cst_10 = arith.constant 0.000000e+00 : f32
      %12 = vector.broadcast %cst_10 : f32 to vector<32x128xf32>
      %c0_11 = arith.constant 0 : index
      %c0_12 = arith.constant 0 : index
      %13 = vector.load %arg7[%c0_11, %c0_12] : memref<32x128xf32, #tpu.memory_space<vmem>>, vector<32x128xf32>
      tpu.vector_store %arg7[%c0_11, %c0_12], %12 {strides = array<i32>} : memref<32x128xf32, #tpu.memory_space<vmem>>, vector<32x128xf32>,
    } else {
    }
    %c0 = arith.constant 0 : index
    %c0_1 = arith.constant 0 : index
    %3 = vector.load %arg3[%c0, %c0_1] : memref<32x128xbf16, #tpu.memory_space<vmem>>, vector<32x128xbf16>
    %c0_2 = arith.constant 0 : index
    %c0_3 = arith.constant 0 : index
    %4 = vector.load %arg7[%c0_2, %c0_3] : memref<32x128xf32, #tpu.memory_space<vmem>>, vector<32x128xf32>
    %c0_4 = arith.constant 0 : index
    %c0_5 = arith.constant 0 : index
    %5 = vector.load %arg4[%c0_4, %c0_5] : memref<128x128xbf16, #tpu.memory_space<vmem>>, vector<128x128xbf16>
    %cst = arith.constant dense<0.000000e+00> : vector<32x128xf32>
    %6 = tpu.matmul %3, %5, %cst {dimension_numbers = #tpu.dot_dimension_numbers<[1], [0], [0], [1], [0, 0, 1, 1], [], []>} : vector<32x128xbf16>, vector<128x128xbf16>, vector<32x128xf32> -> vector<32x128xf32>
    %7 = arith.addf %4, %6 : vector<32x128xf32>
    %c0_6 = arith.constant 0 : index
    %c0_7 = arith.constant 0 : index
    %8 = vector.load %arg7[%c0_6, %c0_7] : memref<32x128xf32, #tpu.memory_space<vmem>>, vector<32x128xf32>
    tpu.vector_store %arg7[%c0_6, %c0_7], %7 {strides = array<i32>} : memref<32x128xf32, #tpu.memory_space<vmem>>, vector<32x128xf32>,
    %c0_i32_8 = arith.constant 0 : i32
    %9 = arith.cmpi eq, %arg2, %c0_i32_8 : i32
    %10 = arith.extui %9 : i1 to i32
    %c0_i32_9 = arith.constant 0 : i32
    %11 = arith.cmpi ne, %10, %c0_i32_9 : i32
    scf.if %11 {
      %c0_10 = arith.constant 0 : index
      %c0_11 = arith.constant 0 : index
      %12 = vector.load %arg7[%c0_10, %c0_11] : memref<32x128xf32, #tpu.memory_space<vmem>>, vector<32x128xf32>
      %c0_12 = arith.constant 0 : index
      %c0_13 = arith.constant 0 : index
      %13 = vector.load %arg5[%c0_12, %c0_13] : memref<1x128xf32, #tpu.memory_space<vmem>>, vector<1x128xf32>
      %14 = vector.broadcast %13 : vector<1x128xf32> to vector<32x128xf32>
      %15 = arith.addf %12, %14 : vector<32x128xf32>
      %16 = arith.truncf %15 : vector<32x128xf32> to vector<32x128xbf16>
      %c0_14 = arith.constant 0 : index
      %c0_15 = arith.constant 0 : index
      %17 = vector.load %arg6[%c0_14, %c0_15] : memref<32x128xbf16, #tpu.memory_space<vmem>>, vector<32x128xbf16>
      tpu.vector_store %arg6[%c0_14, %c0_15], %16 {strides = array<i32>} : memref<32x128xbf16, #tpu.memory_space<vmem>>, vector<32x128xbf16>,
    } else {
    }
    return
  }
  func.func @transform_0(%arg0: i32, %arg1: i32, %arg2: i32) -> (i32, i32) {
    %c0_i32 = arith.constant 0 : i32
    return %arg0, %arg2 : i32, i32
  }
  func.func @transform_1(%arg0: i32, %arg1: i32, %arg2: i32) -> (i32, i32) {
    %c0_i32 = arith.constant 0 : i32
    return %arg2, %arg1 : i32, i32
  }
  func.func @transform_2(%arg0: i32, %arg1: i32, %arg2: i32) -> (i32, i32) {
    %c0_i32 = arith.constant 0 : i32
    %c0_i32_0 = arith.constant 0 : i32
    return %c0_i32, %arg1 : i32, i32
  }
  func.func @transform_3(%arg0: i32, %arg1: i32, %arg2: i32) -> (i32, i32) {
    %c0_i32 = arith.constant 0 : i32
    return %arg0, %arg1 : i32, i32
  }
}

module attributes {stable_mosaic.version = 11 : i64} {
  func.func @_mm_kernel(%arg0: i32, %arg1: i32, %arg2: i32, %arg3: memref<48x32xbf16, #tpu.memory_space<vmem>>, %arg4: memref<32x128xbf16, #tpu.memory_space<vmem>>, %arg5: memref<1x128xf32, #tpu.memory_space<vmem>>, %arg6: memref<1x32xf32, #tpu.memory_space<vmem>>, %arg7: memref<1x32xf32, #tpu.memory_space<vmem>>, %arg8: memref<48x128xbf16, #tpu.memory_space<vmem>>, %arg9: memref<48x128xf32, #tpu.memory_space<vmem>>) attributes {dimension_semantics = [#tpu.dimension_semantics<parallel>, #tpu.dimension_semantics<parallel>, #tpu.dimension_semantics<arbitrary>], iteration_bounds = array<i64: 1, 1, 1>, scalar_prefetch = 0 : i64, scratch_operands = 1 : i64, tpu.core_type = #tpu.core_type<tc>, window_params = [{transform_indices = @transform_0, window_bounds = array<i64: 48, 32>}, {transform_indices = @transform_1, window_bounds = array<i64: 32, 128>}, {transform_indices = @transform_2, window_bounds = array<i64: 1, 128>}, {transform_indices = @transform_3, window_bounds = array<i64: 1, 32>}, {transform_indices = @transform_4, window_bounds = array<i64: 1, 32>}, {transform_indices = @transform_5, window_bounds = array<i64: 48, 128>}]} {
    %c0_i32 = arith.constant 0 : i32
    %0 = arith.cmpi eq, %arg2, %c0_i32 : i32
    %1 = arith.extui %0 : i1 to i32
    %c0_i32_0 = arith.constant 0 : i32
    %2 = arith.cmpi ne, %1, %c0_i32_0 : i32
    scf.if %2 {
      %cst_19 = arith.constant 0.000000e+00 : f32
      %38 = vector.broadcast %cst_19 : f32 to vector<48x128xf32>
      %c0_20 = arith.constant 0 : index
      %c0_21 = arith.constant 0 : index
      %39 = vector.load %arg9[%c0_20, %c0_21] : memref<48x128xf32, #tpu.memory_space<vmem>>, vector<48x128xf32>
      tpu.vector_store %arg9[%c0_20, %c0_21], %38 {strides = array<i32>} : memref<48x128xf32, #tpu.memory_space<vmem>>, vector<48x128xf32>,
    } else {
    }
    %c0 = arith.constant 0 : index
    %c0_1 = arith.constant 0 : index
    %3 = vector.load %arg3[%c0, %c0_1] : memref<48x32xbf16, #tpu.memory_space<vmem>>, vector<48x32xbf16>
    %4 = arith.extf %3 : vector<48x32xbf16> to vector<48x32xf32>
    %cst = arith.constant dense<0.000000e+00> : vector<48xf32>
    %5 = vector.multi_reduction <add>, %4, %cst [1] : vector<48x32xf32> to vector<48xf32>
    %6 = vector.shape_cast %5 : vector<48xf32> to vector<48x1xf32>
    %cst_2 = arith.constant 3.200000e+01 : f32
    %7 = vector.broadcast %cst_2 : f32 to vector<48x1xf32>
    %8 = arith.divf %6, %7 : vector<48x1xf32>
    %9 = vector.broadcast %8 : vector<48x1xf32> to vector<48x32xf32>
    %10 = arith.subf %4, %9 : vector<48x32xf32>
    %11 = arith.mulf %10, %10 : vector<48x32xf32>
    %cst_3 = arith.constant dense<0.000000e+00> : vector<48xf32>
    %12 = vector.multi_reduction <add>, %11, %cst_3 [1] : vector<48x32xf32> to vector<48xf32>
    %13 = vector.shape_cast %12 : vector<48xf32> to vector<48x1xf32>
    %cst_4 = arith.constant 3.200000e+01 : f32
    %14 = vector.broadcast %cst_4 : f32 to vector<48x1xf32>
    %15 = arith.divf %13, %14 : vector<48x1xf32>
    %16 = vector.broadcast %8 : vector<48x1xf32> to vector<48x32xf32>
    %17 = arith.subf %4, %16 : vector<48x32xf32>
    %cst_5 = arith.constant 9.99999997E-7 : f32
    %18 = vector.broadcast %cst_5 : f32 to vector<48x1xf32>
    %19 = arith.addf %15, %18 : vector<48x1xf32>
    %20 = math.rsqrt %19 : vector<48x1xf32>
    %21 = vector.broadcast %20 : vector<48x1xf32> to vector<48x32xf32>
    %22 = arith.mulf %17, %21 : vector<48x32xf32>
    %c0_6 = arith.constant 0 : index
    %c0_7 = arith.constant 0 : index
    %23 = vector.load %arg6[%c0_6, %c0_7] : memref<1x32xf32, #tpu.memory_space<vmem>>, vector<1x32xf32>
    %24 = vector.broadcast %23 : vector<1x32xf32> to vector<48x32xf32>
    %25 = arith.mulf %22, %24 : vector<48x32xf32>
    %c0_8 = arith.constant 0 : index
    %c0_9 = arith.constant 0 : index
    %26 = vector.load %arg7[%c0_8, %c0_9] : memref<1x32xf32, #tpu.memory_space<vmem>>, vector<1x32xf32>
    %27 = vector.broadcast %26 : vector<1x32xf32> to vector<48x32xf32>
    %28 = arith.addf %25, %27 : vector<48x32xf32>
    %29 = arith.truncf %28 : vector<48x32xf32> to vector<48x32xbf16>
    %c0_10 = arith.constant 0 : index
    %c0_11 = arith.constant 0 : index
    %30 = vector.load %arg9[%c0_10, %c0_11] : memref<48x128xf32, #tpu.memory_space<vmem>>, vector<48x128xf32>
    %c0_12 = arith.constant 0 : index
    %c0_13 = arith.constant 0 : index
    %31 = vector.load %arg4[%c0_12, %c0_13] : memref<32x128xbf16, #tpu.memory_space<vmem>>, vector<32x128xbf16>
    %cst_14 = arith.constant dense<0.000000e+00> : vector<48x128xf32>
    %32 = tpu.matmul %29, %31, %cst_14 {dimension_numbers = #tpu.dot_dimension_numbers<[1], [0], [0], [1], [0, 0, 1, 1], [], []>} : vector<48x32xbf16>, vector<32x128xbf16>, vector<48x128xf32> -> vector<48x128xf32>
    %33 = arith.addf %30, %32 : vector<48x128xf32>
    %c0_15 = arith.constant 0 : index
    %c0_16 = arith.constant 0 : index
    %34 = vector.load %arg9[%c0_15, %c0_16] : memref<48x128xf32, #tpu.memory_space<vmem>>, vector<48x128xf32>
    tpu.vector_store %arg9[%c0_15, %c0_16], %33 {strides = array<i32>} : memref<48x128xf32, #tpu.memory_space<vmem>>, vector<48x128xf32>,
    %c0_i32_17 = arith.constant 0 : i32
    %35 = arith.cmpi eq, %arg2, %c0_i32_17 : i32
    %36 = arith.extui %35 : i1 to i32
    %c0_i32_18 = arith.constant 0 : i32
    %37 = arith.cmpi ne, %36, %c0_i32_18 : i32
    scf.if %37 {
      %c0_19 = arith.constant 0 : index
      %c0_20 = arith.constant 0 : index
      %38 = vector.load %arg9[%c0_19, %c0_20] : memref<48x128xf32, #tpu.memory_space<vmem>>, vector<48x128xf32>
      %c0_21 = arith.constant 0 : index
      %c0_22 = arith.constant 0 : index
      %39 = vector.load %arg5[%c0_21, %c0_22] : memref<1x128xf32, #tpu.memory_space<vmem>>, vector<1x128xf32>
      %40 = vector.broadcast %39 : vector<1x128xf32> to vector<48x128xf32>
      %41 = arith.addf %38, %40 : vector<48x128xf32>
      %42 = arith.truncf %41 : vector<48x128xf32> to vector<48x128xbf16>
      %c0_23 = arith.constant 0 : index
      %c0_24 = arith.constant 0 : index
      %43 = vector.load %arg8[%c0_23, %c0_24] : memref<48x128xbf16, #tpu.memory_space<vmem>>, vector<48x128xbf16>
      tpu.vector_store %arg8[%c0_23, %c0_24], %42 {strides = array<i32>} : memref<48x128xbf16, #tpu.memory_space<vmem>>, vector<48x128xbf16>,
    } else {
    }
    return
  }
  func.func @transform_0(%arg0: i32, %arg1: i32, %arg2: i32) -> (i32, i32) {
    %c0_i32 = arith.constant 0 : i32
    return %arg0, %arg2 : i32, i32
  }
  func.func @transform_1(%arg0: i32, %arg1: i32, %arg2: i32) -> (i32, i32) {
    %c0_i32 = arith.constant 0 : i32
    return %arg2, %arg1 : i32, i32
  }
  func.func @transform_2(%arg0: i32, %arg1: i32, %arg2: i32) -> (i32, i32) {
    %c0_i32 = arith.constant 0 : i32
    %c0_i32_0 = arith.constant 0 : i32
    return %c0_i32, %arg1 : i32, i32
  }
  func.func @transform_3(%arg0: i32, %arg1: i32, %arg2: i32) -> (i32, i32) {
    %c0_i32 = arith.constant 0 : i32
    %c0_i32_0 = arith.constant 0 : i32
    return %c0_i32, %arg2 : i32, i32
  }
  func.func @transform_4(%arg0: i32, %arg1: i32, %arg2: i32) -> (i32, i32) {
    %c0_i32 = arith.constant 0 : i32
    %c0_i32_0 = arith.constant 0 : i32
    return %c0_i32, %arg2 : i32, i32
  }
  func.func @transform_5(%arg0: i32, %arg1: i32, %arg2: i32) -> (i32, i32) {
    %c0_i32 = arith.constant 0 : i32
    return %arg0, %arg1 : i32, i32
  }
}

module attributes {stable_mosaic.version = 11 : i64} {
  func.func @_attn_proj_kernel(%arg0: i32, %arg1: memref<1x17x96xbf16, #tpu.memory_space<vmem>>, %arg2: memref<1x17x32xbf16, #tpu.memory_space<vmem>>, %arg3: memref<32x32xbf16, #tpu.memory_space<vmem>>, %arg4: memref<1x32xf32, #tpu.memory_space<vmem>>, %arg5: memref<1x17x32xbf16, #tpu.memory_space<vmem>>) attributes {dimension_semantics = [#tpu.dimension_semantics<parallel>], iteration_bounds = array<i64: 2>, scalar_prefetch = 0 : i64, scratch_operands = 0 : i64, tpu.core_type = #tpu.core_type<tc>, window_params = [{transform_indices = @transform_0, window_bounds = array<i64: 1, 17, 96>}, {transform_indices = @transform_1, window_bounds = array<i64: 1, 17, 32>}, {pipeline_mode = #tpu.pipeline_mode<synchronous>, transform_indices = @transform_2, window_bounds = array<i64: 32, 32>}, {pipeline_mode = #tpu.pipeline_mode<synchronous>, transform_indices = @transform_3, window_bounds = array<i64: 1, 32>}, {transform_indices = @transform_4, window_bounds = array<i64: 1, 17, 32>}]} {
    %c0 = arith.constant 0 : index
    %c0_0 = arith.constant 0 : index
    %c0_1 = arith.constant 0 : index
    %0 = vector.load %arg1[%c0, %c0_0, %c0_1] : memref<1x17x96xbf16, #tpu.memory_space<vmem>>, vector<1x17x8xbf16>
    %1 = vector.shape_cast %0 : vector<1x17x8xbf16> to vector<17x8xbf16>
    %c0_2 = arith.constant 0 : index
    %c0_3 = arith.constant 0 : index
    %c32 = arith.constant 32 : index
    %2 = vector.load %arg1[%c0_2, %c0_3, %c32] : memref<1x17x96xbf16, #tpu.memory_space<vmem>>, vector<1x17x8xbf16>
    %3 = vector.shape_cast %2 : vector<1x17x8xbf16> to vector<17x8xbf16>
    %c0_4 = arith.constant 0 : index
    %c0_5 = arith.constant 0 : index
    %c64 = arith.constant 64 : index
    %4 = vector.load %arg1[%c0_4, %c0_5, %c64] : memref<1x17x96xbf16, #tpu.memory_space<vmem>>, vector<1x17x8xbf16>
    %5 = vector.shape_cast %4 : vector<1x17x8xbf16> to vector<17x8xbf16>
    %cst = arith.constant dense<0.000000e+00> : vector<17x17xf32>
    %6 = tpu.matmul %1, %3, %cst {dimension_numbers = #tpu.dot_dimension_numbers<[1], [1], [0], [0], [0, 0, 1, 0], [], []>} : vector<17x8xbf16>, vector<17x8xbf16>, vector<17x17xf32> -> vector<17x17xf32>
    %cst_6 = arith.constant 0.353553385 : f32
    %7 = vector.broadcast %cst_6 : f32 to vector<17x17xf32>
    %8 = arith.mulf %6, %7 : vector<17x17xf32>
    %cst_7 = arith.constant dense<0xFF800000> : vector<17xf32>
    %9 = vector.multi_reduction <maximumf>, %8, %cst_7 [1] : vector<17x17xf32> to vector<17xf32>
    %10 = vector.shape_cast %9 : vector<17xf32> to vector<17x1xf32>
    %11 = vector.broadcast %10 : vector<17x1xf32> to vector<17x17xf32>
    %12 = arith.subf %8, %11 : vector<17x17xf32>
    %13 = math.exp %12 : vector<17x17xf32>
    %cst_8 = arith.constant dense<0.000000e+00> : vector<17xf32>
    %14 = vector.multi_reduction <add>, %13, %cst_8 [1] : vector<17x17xf32> to vector<17xf32>
    %15 = vector.shape_cast %14 : vector<17xf32> to vector<17x1xf32>
    %16 = arith.truncf %13 : vector<17x17xf32> to vector<17x17xbf16>
    %cst_9 = arith.constant dense<0.000000e+00> : vector<17x8xf32>
    %17 = tpu.matmul %16, %5, %cst_9 {dimension_numbers = #tpu.dot_dimension_numbers<[1], [0], [0], [1], [0, 0, 1, 1], [], []>} : vector<17x17xbf16>, vector<17x8xbf16>, vector<17x8xf32> -> vector<17x8xf32>
    %18 = tpu.reciprocal %15 {approx = true} : vector<17x1xf32> -> vector<17x1xf32>
    %19 = vector.broadcast %18 : vector<17x1xf32> to vector<17x8xf32>
    %20 = arith.mulf %17, %19 : vector<17x8xf32>
    %c0_10 = arith.constant 0 : index
    %c0_11 = arith.constant 0 : index
    %c8 = arith.constant 8 : index
    %21 = vector.load %arg1[%c0_10, %c0_11, %c8] : memref<1x17x96xbf16, #tpu.memory_space<vmem>>, vector<1x17x8xbf16>
    %22 = vector.shape_cast %21 : vector<1x17x8xbf16> to vector<17x8xbf16>
    %c0_12 = arith.constant 0 : index
    %c0_13 = arith.constant 0 : index
    %c40 = arith.constant 40 : index
    %23 = vector.load %arg1[%c0_12, %c0_13, %c40] : memref<1x17x96xbf16, #tpu.memory_space<vmem>>, vector<1x17x8xbf16>
    %24 = vector.shape_cast %23 : vector<1x17x8xbf16> to vector<17x8xbf16>
    %c0_14 = arith.constant 0 : index
    %c0_15 = arith.constant 0 : index
    %c72 = arith.constant 72 : index
    %25 = vector.load %arg1[%c0_14, %c0_15, %c72] : memref<1x17x96xbf16, #tpu.memory_space<vmem>>, vector<1x17x8xbf16>
    %26 = vector.shape_cast %25 : vector<1x17x8xbf16> to vector<17x8xbf16>
    %cst_16 = arith.constant dense<0.000000e+00> : vector<17x17xf32>
    %27 = tpu.matmul %22, %24, %cst_16 {dimension_numbers = #tpu.dot_dimension_numbers<[1], [1], [0], [0], [0, 0, 1, 0], [], []>} : vector<17x8xbf16>, vector<17x8xbf16>, vector<17x17xf32> -> vector<17x17xf32>
    %cst_17 = arith.constant 0.353553385 : f32
    %28 = vector.broadcast %cst_17 : f32 to vector<17x17xf32>
    %29 = arith.mulf %27, %28 : vector<17x17xf32>
    %cst_18 = arith.constant dense<0xFF800000> : vector<17xf32>
    %30 = vector.multi_reduction <maximumf>, %29, %cst_18 [1] : vector<17x17xf32> to vector<17xf32>
    %31 = vector.shape_cast %30 : vector<17xf32> to vector<17x1xf32>
    %32 = vector.broadcast %31 : vector<17x1xf32> to vector<17x17xf32>
    %33 = arith.subf %29, %32 : vector<17x17xf32>
    %34 = math.exp %33 : vector<17x17xf32>
    %cst_19 = arith.constant dense<0.000000e+00> : vector<17xf32>
    %35 = vector.multi_reduction <add>, %34, %cst_19 [1] : vector<17x17xf32> to vector<17xf32>
    %36 = vector.shape_cast %35 : vector<17xf32> to vector<17x1xf32>
    %37 = arith.truncf %34 : vector<17x17xf32> to vector<17x17xbf16>
    %cst_20 = arith.constant dense<0.000000e+00> : vector<17x8xf32>
    %38 = tpu.matmul %37, %26, %cst_20 {dimension_numbers = #tpu.dot_dimension_numbers<[1], [0], [0], [1], [0, 0, 1, 1], [], []>} : vector<17x17xbf16>, vector<17x8xbf16>, vector<17x8xf32> -> vector<17x8xf32>
    %39 = tpu.reciprocal %36 {approx = true} : vector<17x1xf32> -> vector<17x1xf32>
    %40 = vector.broadcast %39 : vector<17x1xf32> to vector<17x8xf32>
    %41 = arith.mulf %38, %40 : vector<17x8xf32>
    %c0_21 = arith.constant 0 : index
    %c0_22 = arith.constant 0 : index
    %c16 = arith.constant 16 : index
    %42 = vector.load %arg1[%c0_21, %c0_22, %c16] : memref<1x17x96xbf16, #tpu.memory_space<vmem>>, vector<1x17x8xbf16>
    %43 = vector.shape_cast %42 : vector<1x17x8xbf16> to vector<17x8xbf16>
    %c0_23 = arith.constant 0 : index
    %c0_24 = arith.constant 0 : index
    %c48 = arith.constant 48 : index
    %44 = vector.load %arg1[%c0_23, %c0_24, %c48] : memref<1x17x96xbf16, #tpu.memory_space<vmem>>, vector<1x17x8xbf16>
    %45 = vector.shape_cast %44 : vector<1x17x8xbf16> to vector<17x8xbf16>
    %c0_25 = arith.constant 0 : index
    %c0_26 = arith.constant 0 : index
    %c80 = arith.constant 80 : index
    %46 = vector.load %arg1[%c0_25, %c0_26, %c80] : memref<1x17x96xbf16, #tpu.memory_space<vmem>>, vector<1x17x8xbf16>
    %47 = vector.shape_cast %46 : vector<1x17x8xbf16> to vector<17x8xbf16>
    %cst_27 = arith.constant dense<0.000000e+00> : vector<17x17xf32>
    %48 = tpu.matmul %43, %45, %cst_27 {dimension_numbers = #tpu.dot_dimension_numbers<[1], [1], [0], [0], [0, 0, 1, 0], [], []>} : vector<17x8xbf16>, vector<17x8xbf16>, vector<17x17xf32> -> vector<17x17xf32>
    %cst_28 = arith.constant 0.353553385 : f32
    %49 = vector.broadcast %cst_28 : f32 to vector<17x17xf32>
    %50 = arith.mulf %48, %49 : vector<17x17xf32>
    %cst_29 = arith.constant dense<0xFF800000> : vector<17xf32>
    %51 = vector.multi_reduction <maximumf>, %50, %cst_29 [1] : vector<17x17xf32> to vector<17xf32>
    %52 = vector.shape_cast %51 : vector<17xf32> to vector<17x1xf32>
    %53 = vector.broadcast %52 : vector<17x1xf32> to vector<17x17xf32>
    %54 = arith.subf %50, %53 : vector<17x17xf32>
    %55 = math.exp %54 : vector<17x17xf32>
    %cst_30 = arith.constant dense<0.000000e+00> : vector<17xf32>
    %56 = vector.multi_reduction <add>, %55, %cst_30 [1] : vector<17x17xf32> to vector<17xf32>
    %57 = vector.shape_cast %56 : vector<17xf32> to vector<17x1xf32>
    %58 = arith.truncf %55 : vector<17x17xf32> to vector<17x17xbf16>
    %cst_31 = arith.constant dense<0.000000e+00> : vector<17x8xf32>
    %59 = tpu.matmul %58, %47, %cst_31 {dimension_numbers = #tpu.dot_dimension_numbers<[1], [0], [0], [1], [0, 0, 1, 1], [], []>} : vector<17x17xbf16>, vector<17x8xbf16>, vector<17x8xf32> -> vector<17x8xf32>
    %60 = tpu.reciprocal %57 {approx = true} : vector<17x1xf32> -> vector<17x1xf32>
    %61 = vector.broadcast %60 : vector<17x1xf32> to vector<17x8xf32>
    %62 = arith.mulf %59, %61 : vector<17x8xf32>
    %c0_32 = arith.constant 0 : index
    %c0_33 = arith.constant 0 : index
    %c24 = arith.constant 24 : index
    %63 = vector.load %arg1[%c0_32, %c0_33, %c24] : memref<1x17x96xbf16, #tpu.memory_space<vmem>>, vector<1x17x8xbf16>
    %64 = vector.shape_cast %63 : vector<1x17x8xbf16> to vector<17x8xbf16>
    %c0_34 = arith.constant 0 : index
    %c0_35 = arith.constant 0 : index
    %c56 = arith.constant 56 : index
    %65 = vector.load %arg1[%c0_34, %c0_35, %c56] : memref<1x17x96xbf16, #tpu.memory_space<vmem>>, vector<1x17x8xbf16>
    %66 = vector.shape_cast %65 : vector<1x17x8xbf16> to vector<17x8xbf16>
    %c0_36 = arith.constant 0 : index
    %c0_37 = arith.constant 0 : index
    %c88 = arith.constant 88 : index
    %67 = vector.load %arg1[%c0_36, %c0_37, %c88] : memref<1x17x96xbf16, #tpu.memory_space<vmem>>, vector<1x17x8xbf16>
    %68 = vector.shape_cast %67 : vector<1x17x8xbf16> to vector<17x8xbf16>
    %cst_38 = arith.constant dense<0.000000e+00> : vector<17x17xf32>
    %69 = tpu.matmul %64, %66, %cst_38 {dimension_numbers = #tpu.dot_dimension_numbers<[1], [1], [0], [0], [0, 0, 1, 0], [], []>} : vector<17x8xbf16>, vector<17x8xbf16>, vector<17x17xf32> -> vector<17x17xf32>
    %cst_39 = arith.constant 0.353553385 : f32
    %70 = vector.broadcast %cst_39 : f32 to vector<17x17xf32>
    %71 = arith.mulf %69, %70 : vector<17x17xf32>
    %cst_40 = arith.constant dense<0xFF800000> : vector<17xf32>
    %72 = vector.multi_reduction <maximumf>, %71, %cst_40 [1] : vector<17x17xf32> to vector<17xf32>
    %73 = vector.shape_cast %72 : vector<17xf32> to vector<17x1xf32>
    %74 = vector.broadcast %73 : vector<17x1xf32> to vector<17x17xf32>
    %75 = arith.subf %71, %74 : vector<17x17xf32>
    %76 = math.exp %75 : vector<17x17xf32>
    %cst_41 = arith.constant dense<0.000000e+00> : vector<17xf32>
    %77 = vector.multi_reduction <add>, %76, %cst_41 [1] : vector<17x17xf32> to vector<17xf32>
    %78 = vector.shape_cast %77 : vector<17xf32> to vector<17x1xf32>
    %79 = arith.truncf %76 : vector<17x17xf32> to vector<17x17xbf16>
    %cst_42 = arith.constant dense<0.000000e+00> : vector<17x8xf32>
    %80 = tpu.matmul %79, %68, %cst_42 {dimension_numbers = #tpu.dot_dimension_numbers<[1], [0], [0], [1], [0, 0, 1, 1], [], []>} : vector<17x17xbf16>, vector<17x8xbf16>, vector<17x8xf32> -> vector<17x8xf32>
    %81 = tpu.reciprocal %78 {approx = true} : vector<17x1xf32> -> vector<17x1xf32>
    %82 = vector.broadcast %81 : vector<17x1xf32> to vector<17x8xf32>
    %83 = arith.mulf %80, %82 : vector<17x8xf32>
    %84 = tpu.concatenate %20, %41, %62, %83 in 1 : vector<17x8xf32>, vector<17x8xf32>, vector<17x8xf32>, vector<17x8xf32> -> vector<17x32xf32>
    %85 = arith.truncf %84 : vector<17x32xf32> to vector<17x32xbf16>
    %c0_43 = arith.constant 0 : index
    %c0_44 = arith.constant 0 : index
    %86 = vector.load %arg3[%c0_43, %c0_44] : memref<32x32xbf16, #tpu.memory_space<vmem>>, vector<32x32xbf16>
    %cst_45 = arith.constant dense<0.000000e+00> : vector<17x32xf32>
    %87 = tpu.matmul %85, %86, %cst_45 {dimension_numbers = #tpu.dot_dimension_numbers<[1], [0], [0], [1], [0, 0, 1, 1], [], []>} : vector<17x32xbf16>, vector<32x32xbf16>, vector<17x32xf32> -> vector<17x32xf32>
    %c0_46 = arith.constant 0 : index
    %c0_47 = arith.constant 0 : index
    %88 = vector.load %arg4[%c0_46, %c0_47] : memref<1x32xf32, #tpu.memory_space<vmem>>, vector<1x32xf32>
    %89 = vector.broadcast %88 : vector<1x32xf32> to vector<17x32xf32>
    %90 = arith.addf %87, %89 : vector<17x32xf32>
    %c0_48 = arith.constant 0 : index
    %c0_49 = arith.constant 0 : index
    %c0_50 = arith.constant 0 : index
    %91 = vector.load %arg2[%c0_48, %c0_49, %c0_50] : memref<1x17x32xbf16, #tpu.memory_space<vmem>>, vector<1x17x32xbf16>
    %92 = vector.shape_cast %91 : vector<1x17x32xbf16> to vector<17x32xbf16>
    %93 = arith.extf %92 : vector<17x32xbf16> to vector<17x32xf32>
    %94 = arith.addf %90, %93 : vector<17x32xf32>
    %95 = arith.truncf %94 : vector<17x32xf32> to vector<17x32xbf16>
    %c0_51 = arith.constant 0 : index
    %c0_52 = arith.constant 0 : index
    %c0_53 = arith.constant 0 : index
    %96 = vector.load %arg5[%c0_51, %c0_52, %c0_53] : memref<1x17x32xbf16, #tpu.memory_space<vmem>>, vector<1x17x32xbf16>
    %97 = vector.shape_cast %96 : vector<1x17x32xbf16> to vector<17x32xbf16>
    %98 = vector.shape_cast %95 : vector<17x32xbf16> to vector<1x17x32xbf16>
    tpu.vector_store %arg5[%c0_51, %c0_52, %c0_53], %98 {strides = array<i32>} : memref<1x17x32xbf16, #tpu.memory_space<vmem>>, vector<1x17x32xbf16>,
    return
  }
  func.func @transform_0(%arg0: i32) -> (i32, i32, i32) {
    %c0_i32 = arith.constant 0 : i32
    %c0_i32_0 = arith.constant 0 : i32
    %c0_i32_1 = arith.constant 0 : i32
    return %arg0, %c0_i32, %c0_i32_0 : i32, i32, i32
  }
  func.func @transform_1(%arg0: i32) -> (i32, i32, i32) {
    %c0_i32 = arith.constant 0 : i32
    %c0_i32_0 = arith.constant 0 : i32
    %c0_i32_1 = arith.constant 0 : i32
    return %arg0, %c0_i32, %c0_i32_0 : i32, i32, i32
  }
  func.func @transform_2(%arg0: i32) -> (i32, i32) {
    %c0_i32 = arith.constant 0 : i32
    %c0_i32_0 = arith.constant 0 : i32
    %c0_i32_1 = arith.constant 0 : i32
    return %c0_i32, %c0_i32_0 : i32, i32
  }
  func.func @transform_3(%arg0: i32) -> (i32, i32) {
    %c0_i32 = arith.constant 0 : i32
    %c0_i32_0 = arith.constant 0 : i32
    %c0_i32_1 = arith.constant 0 : i32
    return %c0_i32, %c0_i32_0 : i32, i32
  }
  func.func @transform_4(%arg0: i32) -> (i32, i32, i32) {
    %c0_i32 = arith.constant 0 : i32
    %c0_i32_0 = arith.constant 0 : i32
    %c0_i32_1 = arith.constant 0 : i32
    return %arg0, %c0_i32, %c0_i32_0 : i32, i32, i32
  }
}

module attributes {stable_mosaic.version = 11 : i64} {
  func.func @_mm_kernel(%arg0: i32, %arg1: i32, %arg2: i32, %arg3: memref<48x32xbf16, #tpu.memory_space<vmem>>, %arg4: memref<32x128xbf16, #tpu.memory_space<vmem>>, %arg5: memref<1x128xf32, #tpu.memory_space<vmem>>, %arg6: memref<1x32xf32, #tpu.memory_space<vmem>>, %arg7: memref<1x32xf32, #tpu.memory_space<vmem>>, %arg8: memref<48x128xbf16, #tpu.memory_space<vmem>>, %arg9: memref<48x128xf32, #tpu.memory_space<vmem>>) attributes {dimension_semantics = [#tpu.dimension_semantics<parallel>, #tpu.dimension_semantics<parallel>, #tpu.dimension_semantics<arbitrary>], iteration_bounds = array<i64: 1, 1, 1>, scalar_prefetch = 0 : i64, scratch_operands = 1 : i64, tpu.core_type = #tpu.core_type<tc>, window_params = [{transform_indices = @transform_0, window_bounds = array<i64: 48, 32>}, {transform_indices = @transform_1, window_bounds = array<i64: 32, 128>}, {transform_indices = @transform_2, window_bounds = array<i64: 1, 128>}, {transform_indices = @transform_3, window_bounds = array<i64: 1, 32>}, {transform_indices = @transform_4, window_bounds = array<i64: 1, 32>}, {transform_indices = @transform_5, window_bounds = array<i64: 48, 128>}]} {
    %c0_i32 = arith.constant 0 : i32
    %0 = arith.cmpi eq, %arg2, %c0_i32 : i32
    %1 = arith.extui %0 : i1 to i32
    %c0_i32_0 = arith.constant 0 : i32
    %2 = arith.cmpi ne, %1, %c0_i32_0 : i32
    scf.if %2 {
      %cst_19 = arith.constant 0.000000e+00 : f32
      %38 = vector.broadcast %cst_19 : f32 to vector<48x128xf32>
      %c0_20 = arith.constant 0 : index
      %c0_21 = arith.constant 0 : index
      %39 = vector.load %arg9[%c0_20, %c0_21] : memref<48x128xf32, #tpu.memory_space<vmem>>, vector<48x128xf32>
      tpu.vector_store %arg9[%c0_20, %c0_21], %38 {strides = array<i32>} : memref<48x128xf32, #tpu.memory_space<vmem>>, vector<48x128xf32>,
    } else {
    }
    %c0 = arith.constant 0 : index
    %c0_1 = arith.constant 0 : index
    %3 = vector.load %arg3[%c0, %c0_1] : memref<48x32xbf16, #tpu.memory_space<vmem>>, vector<48x32xbf16>
    %4 = arith.extf %3 : vector<48x32xbf16> to vector<48x32xf32>
    %cst = arith.constant dense<0.000000e+00> : vector<48xf32>
    %5 = vector.multi_reduction <add>, %4, %cst [1] : vector<48x32xf32> to vector<48xf32>
    %6 = vector.shape_cast %5 : vector<48xf32> to vector<48x1xf32>
    %cst_2 = arith.constant 3.200000e+01 : f32
    %7 = vector.broadcast %cst_2 : f32 to vector<48x1xf32>
    %8 = arith.divf %6, %7 : vector<48x1xf32>
    %9 = vector.broadcast %8 : vector<48x1xf32> to vector<48x32xf32>
    %10 = arith.subf %4, %9 : vector<48x32xf32>
    %11 = arith.mulf %10, %10 : vector<48x32xf32>
    %cst_3 = arith.constant dense<0.000000e+00> : vector<48xf32>
    %12 = vector.multi_reduction <add>, %11, %cst_3 [1] : vector<48x32xf32> to vector<48xf32>
    %13 = vector.shape_cast %12 : vector<48xf32> to vector<48x1xf32>
    %cst_4 = arith.constant 3.200000e+01 : f32
    %14 = vector.broadcast %cst_4 : f32 to vector<48x1xf32>
    %15 = arith.divf %13, %14 : vector<48x1xf32>
    %16 = vector.broadcast %8 : vector<48x1xf32> to vector<48x32xf32>
    %17 = arith.subf %4, %16 : vector<48x32xf32>
    %cst_5 = arith.constant 9.99999997E-7 : f32
    %18 = vector.broadcast %cst_5 : f32 to vector<48x1xf32>
    %19 = arith.addf %15, %18 : vector<48x1xf32>
    %20 = math.rsqrt %19 : vector<48x1xf32>
    %21 = vector.broadcast %20 : vector<48x1xf32> to vector<48x32xf32>
    %22 = arith.mulf %17, %21 : vector<48x32xf32>
    %c0_6 = arith.constant 0 : index
    %c0_7 = arith.constant 0 : index
    %23 = vector.load %arg6[%c0_6, %c0_7] : memref<1x32xf32, #tpu.memory_space<vmem>>, vector<1x32xf32>
    %24 = vector.broadcast %23 : vector<1x32xf32> to vector<48x32xf32>
    %25 = arith.mulf %22, %24 : vector<48x32xf32>
    %c0_8 = arith.constant 0 : index
    %c0_9 = arith.constant 0 : index
    %26 = vector.load %arg7[%c0_8, %c0_9] : memref<1x32xf32, #tpu.memory_space<vmem>>, vector<1x32xf32>
    %27 = vector.broadcast %26 : vector<1x32xf32> to vector<48x32xf32>
    %28 = arith.addf %25, %27 : vector<48x32xf32>
    %29 = arith.truncf %28 : vector<48x32xf32> to vector<48x32xbf16>
    %c0_10 = arith.constant 0 : index
    %c0_11 = arith.constant 0 : index
    %30 = vector.load %arg9[%c0_10, %c0_11] : memref<48x128xf32, #tpu.memory_space<vmem>>, vector<48x128xf32>
    %c0_12 = arith.constant 0 : index
    %c0_13 = arith.constant 0 : index
    %31 = vector.load %arg4[%c0_12, %c0_13] : memref<32x128xbf16, #tpu.memory_space<vmem>>, vector<32x128xbf16>
    %cst_14 = arith.constant dense<0.000000e+00> : vector<48x128xf32>
    %32 = tpu.matmul %29, %31, %cst_14 {dimension_numbers = #tpu.dot_dimension_numbers<[1], [0], [0], [1], [0, 0, 1, 1], [], []>} : vector<48x32xbf16>, vector<32x128xbf16>, vector<48x128xf32> -> vector<48x128xf32>
    %33 = arith.addf %30, %32 : vector<48x128xf32>
    %c0_15 = arith.constant 0 : index
    %c0_16 = arith.constant 0 : index
    %34 = vector.load %arg9[%c0_15, %c0_16] : memref<48x128xf32, #tpu.memory_space<vmem>>, vector<48x128xf32>
    tpu.vector_store %arg9[%c0_15, %c0_16], %33 {strides = array<i32>} : memref<48x128xf32, #tpu.memory_space<vmem>>, vector<48x128xf32>,
    %c0_i32_17 = arith.constant 0 : i32
    %35 = arith.cmpi eq, %arg2, %c0_i32_17 : i32
    %36 = arith.extui %35 : i1 to i32
    %c0_i32_18 = arith.constant 0 : i32
    %37 = arith.cmpi ne, %36, %c0_i32_18 : i32
    scf.if %37 {
      %c0_19 = arith.constant 0 : index
      %c0_20 = arith.constant 0 : index
      %38 = vector.load %arg9[%c0_19, %c0_20] : memref<48x128xf32, #tpu.memory_space<vmem>>, vector<48x128xf32>
      %c0_21 = arith.constant 0 : index
      %c0_22 = arith.constant 0 : index
      %39 = vector.load %arg5[%c0_21, %c0_22] : memref<1x128xf32, #tpu.memory_space<vmem>>, vector<1x128xf32>
      %40 = vector.broadcast %39 : vector<1x128xf32> to vector<48x128xf32>
      %41 = arith.addf %38, %40 : vector<48x128xf32>
      %cst_23 = arith.constant 5.000000e-01 : f32
      %42 = vector.broadcast %cst_23 : f32 to vector<48x128xf32>
      %43 = arith.mulf %42, %41 : vector<48x128xf32>
      %cst_24 = arith.constant 0.707106769 : f32
      %44 = vector.broadcast %cst_24 : f32 to vector<48x128xf32>
      %45 = arith.mulf %41, %44 : vector<48x128xf32>
      %46 = math.erf %45 : vector<48x128xf32>
      %cst_25 = arith.constant 1.000000e+00 : f32
      %47 = vector.broadcast %cst_25 : f32 to vector<48x128xf32>
      %48 = arith.addf %47, %46 : vector<48x128xf32>
      %49 = arith.mulf %43, %48 : vector<48x128xf32>
      %50 = arith.truncf %49 : vector<48x128xf32> to vector<48x128xbf16>
      %c0_26 = arith.constant 0 : index
      %c0_27 = arith.constant 0 : index
      %51 = vector.load %arg8[%c0_26, %c0_27] : memref<48x128xbf16, #tpu.memory_space<vmem>>, vector<48x128xbf16>
      tpu.vector_store %arg8[%c0_26, %c0_27], %50 {strides = array<i32>} : memref<48x128xbf16, #tpu.memory_space<vmem>>, vector<48x128xbf16>,
    } else {
    }
    return
  }
  func.func @transform_0(%arg0: i32, %arg1: i32, %arg2: i32) -> (i32, i32) {
    %c0_i32 = arith.constant 0 : i32
    return %arg0, %arg2 : i32, i32
  }
  func.func @transform_1(%arg0: i32, %arg1: i32, %arg2: i32) -> (i32, i32) {
    %c0_i32 = arith.constant 0 : i32
    return %arg2, %arg1 : i32, i32
  }
  func.func @transform_2(%arg0: i32, %arg1: i32, %arg2: i32) -> (i32, i32) {
    %c0_i32 = arith.constant 0 : i32
    %c0_i32_0 = arith.constant 0 : i32
    return %c0_i32, %arg1 : i32, i32
  }
  func.func @transform_3(%arg0: i32, %arg1: i32, %arg2: i32) -> (i32, i32) {
    %c0_i32 = arith.constant 0 : i32
    %c0_i32_0 = arith.constant 0 : i32
    return %c0_i32, %arg2 : i32, i32
  }
  func.func @transform_4(%arg0: i32, %arg1: i32, %arg2: i32) -> (i32, i32) {
    %c0_i32 = arith.constant 0 : i32
    %c0_i32_0 = arith.constant 0 : i32
    return %c0_i32, %arg2 : i32, i32
  }
  func.func @transform_5(%arg0: i32, %arg1: i32, %arg2: i32) -> (i32, i32) {
    %c0_i32 = arith.constant 0 : i32
    return %arg0, %arg1 : i32, i32
  }
}

module attributes {stable_mosaic.version = 11 : i64} {
  func.func @_mm_kernel(%arg0: i32, %arg1: i32, %arg2: i32, %arg3: memref<48x128xbf16, #tpu.memory_space<vmem>>, %arg4: memref<128x128xbf16, #tpu.memory_space<vmem>>, %arg5: memref<1x128xf32, #tpu.memory_space<vmem>>, %arg6: memref<48x128xbf16, #tpu.memory_space<vmem>>, %arg7: memref<48x128xbf16, #tpu.memory_space<vmem>>, %arg8: memref<48x128xf32, #tpu.memory_space<vmem>>) attributes {dimension_semantics = [#tpu.dimension_semantics<parallel>, #tpu.dimension_semantics<parallel>, #tpu.dimension_semantics<arbitrary>], iteration_bounds = array<i64: 1, 1, 1>, scalar_prefetch = 0 : i64, scratch_operands = 1 : i64, tpu.core_type = #tpu.core_type<tc>, window_params = [{transform_indices = @transform_0, window_bounds = array<i64: 48, 128>}, {transform_indices = @transform_1, window_bounds = array<i64: 128, 128>}, {transform_indices = @transform_2, window_bounds = array<i64: 1, 128>}, {transform_indices = @transform_3, window_bounds = array<i64: 48, 128>}, {transform_indices = @transform_4, window_bounds = array<i64: 48, 128>}]} {
    %c0_i32 = arith.constant 0 : i32
    %0 = arith.cmpi eq, %arg2, %c0_i32 : i32
    %1 = arith.extui %0 : i1 to i32
    %c0_i32_0 = arith.constant 0 : i32
    %2 = arith.cmpi ne, %1, %c0_i32_0 : i32
    scf.if %2 {
      %cst_10 = arith.constant 0.000000e+00 : f32
      %12 = vector.broadcast %cst_10 : f32 to vector<48x128xf32>
      %c0_11 = arith.constant 0 : index
      %c0_12 = arith.constant 0 : index
      %13 = vector.load %arg8[%c0_11, %c0_12] : memref<48x128xf32, #tpu.memory_space<vmem>>, vector<48x128xf32>
      tpu.vector_store %arg8[%c0_11, %c0_12], %12 {strides = array<i32>} : memref<48x128xf32, #tpu.memory_space<vmem>>, vector<48x128xf32>,
    } else {
    }
    %c0 = arith.constant 0 : index
    %c0_1 = arith.constant 0 : index
    %3 = vector.load %arg3[%c0, %c0_1] : memref<48x128xbf16, #tpu.memory_space<vmem>>, vector<48x128xbf16>
    %c0_2 = arith.constant 0 : index
    %c0_3 = arith.constant 0 : index
    %4 = vector.load %arg8[%c0_2, %c0_3] : memref<48x128xf32, #tpu.memory_space<vmem>>, vector<48x128xf32>
    %c0_4 = arith.constant 0 : index
    %c0_5 = arith.constant 0 : index
    %5 = vector.load %arg4[%c0_4, %c0_5] : memref<128x128xbf16, #tpu.memory_space<vmem>>, vector<128x128xbf16>
    %cst = arith.constant dense<0.000000e+00> : vector<48x128xf32>
    %6 = tpu.matmul %3, %5, %cst {dimension_numbers = #tpu.dot_dimension_numbers<[1], [0], [0], [1], [0, 0, 1, 1], [], []>} : vector<48x128xbf16>, vector<128x128xbf16>, vector<48x128xf32> -> vector<48x128xf32>
    %7 = arith.addf %4, %6 : vector<48x128xf32>
    %c0_6 = arith.constant 0 : index
    %c0_7 = arith.constant 0 : index
    %8 = vector.load %arg8[%c0_6, %c0_7] : memref<48x128xf32, #tpu.memory_space<vmem>>, vector<48x128xf32>
    tpu.vector_store %arg8[%c0_6, %c0_7], %7 {strides = array<i32>} : memref<48x128xf32, #tpu.memory_space<vmem>>, vector<48x128xf32>,
    %c0_i32_8 = arith.constant 0 : i32
    %9 = arith.cmpi eq, %arg2, %c0_i32_8 : i32
    %10 = arith.extui %9 : i1 to i32
    %c0_i32_9 = arith.constant 0 : i32
    %11 = arith.cmpi ne, %10, %c0_i32_9 : i32
    scf.if %11 {
      %c0_10 = arith.constant 0 : index
      %c0_11 = arith.constant 0 : index
      %12 = vector.load %arg8[%c0_10, %c0_11] : memref<48x128xf32, #tpu.memory_space<vmem>>, vector<48x128xf32>
      %c0_12 = arith.constant 0 : index
      %c0_13 = arith.constant 0 : index
      %13 = vector.load %arg5[%c0_12, %c0_13] : memref<1x128xf32, #tpu.memory_space<vmem>>, vector<1x128xf32>
      %14 = vector.broadcast %13 : vector<1x128xf32> to vector<48x128xf32>
      %15 = arith.addf %12, %14 : vector<48x128xf32>
      %c0_14 = arith.constant 0 : index
      %c0_15 = arith.constant 0 : index
      %16 = vector.load %arg6[%c0_14, %c0_15] : memref<48x128xbf16, #tpu.memory_space<vmem>>, vector<48x128xbf16>
      %17 = arith.extf %16 : vector<48x128xbf16> to vector<48x128xf32>
      %18 = arith.addf %15, %17 : vector<48x128xf32>
      %19 = arith.truncf %18 : vector<48x128xf32> to vector<48x128xbf16>
      %c0_16 = arith.constant 0 : index
      %c0_17 = arith.constant 0 : index
      %20 = vector.load %arg7[%c0_16, %c0_17] : memref<48x128xbf16, #tpu.memory_space<vmem>>, vector<48x128xbf16>
      tpu.vector_store %arg7[%c0_16, %c0_17], %19 {strides = array<i32>} : memref<48x128xbf16, #tpu.memory_space<vmem>>, vector<48x128xbf16>,
    } else {
    }
    return
  }
  func.func @transform_0(%arg0: i32, %arg1: i32, %arg2: i32) -> (i32, i32) {
    %c0_i32 = arith.constant 0 : i32
    return %arg0, %arg2 : i32, i32
  }
  func.func @transform_1(%arg0: i32, %arg1: i32, %arg2: i32) -> (i32, i32) {
    %c0_i32 = arith.constant 0 : i32
    return %arg2, %arg1 : i32, i32
  }
  func.func @transform_2(%arg0: i32, %arg1: i32, %arg2: i32) -> (i32, i32) {
    %c0_i32 = arith.constant 0 : i32
    %c0_i32_0 = arith.constant 0 : i32
    return %c0_i32, %arg1 : i32, i32
  }
  func.func @transform_3(%arg0: i32, %arg1: i32, %arg2: i32) -> (i32, i32) {
    %c0_i32 = arith.constant 0 : i32
    return %arg0, %arg1 : i32, i32
  }
  func.func @transform_4(%arg0: i32, %arg1: i32, %arg2: i32) -> (i32, i32) {
    %c0_i32 = arith.constant 0 : i32
    return %arg0, %arg1 : i32, i32
  }
}

module attributes {stable_mosaic.version = 11 : i64} {
  func.func @_mm_kernel(%arg0: i32, %arg1: i32, %arg2: i32, %arg3: memref<16x32xbf16, #tpu.memory_space<vmem>>, %arg4: memref<32x128xbf16, #tpu.memory_space<vmem>>, %arg5: memref<1x128xf32, #tpu.memory_space<vmem>>, %arg6: memref<1x32xf32, #tpu.memory_space<vmem>>, %arg7: memref<1x32xf32, #tpu.memory_space<vmem>>, %arg8: memref<16x128xf32, #tpu.memory_space<vmem>>, %arg9: memref<16x128xf32, #tpu.memory_space<vmem>>) attributes {dimension_semantics = [#tpu.dimension_semantics<parallel>, #tpu.dimension_semantics<parallel>, #tpu.dimension_semantics<arbitrary>], iteration_bounds = array<i64: 1, 1, 1>, scalar_prefetch = 0 : i64, scratch_operands = 1 : i64, tpu.core_type = #tpu.core_type<tc>, window_params = [{transform_indices = @transform_0, window_bounds = array<i64: 16, 32>}, {transform_indices = @transform_1, window_bounds = array<i64: 32, 128>}, {transform_indices = @transform_2, window_bounds = array<i64: 1, 128>}, {transform_indices = @transform_3, window_bounds = array<i64: 1, 32>}, {transform_indices = @transform_4, window_bounds = array<i64: 1, 32>}, {transform_indices = @transform_5, window_bounds = array<i64: 16, 128>}]} {
    %c0_i32 = arith.constant 0 : i32
    %0 = arith.cmpi eq, %arg2, %c0_i32 : i32
    %1 = arith.extui %0 : i1 to i32
    %c0_i32_0 = arith.constant 0 : i32
    %2 = arith.cmpi ne, %1, %c0_i32_0 : i32
    scf.if %2 {
      %cst_19 = arith.constant 0.000000e+00 : f32
      %38 = vector.broadcast %cst_19 : f32 to vector<16x128xf32>
      %c0_20 = arith.constant 0 : index
      %c0_21 = arith.constant 0 : index
      %39 = vector.load %arg9[%c0_20, %c0_21] : memref<16x128xf32, #tpu.memory_space<vmem>>, vector<16x128xf32>
      tpu.vector_store %arg9[%c0_20, %c0_21], %38 {strides = array<i32>} : memref<16x128xf32, #tpu.memory_space<vmem>>, vector<16x128xf32>,
    } else {
    }
    %c0 = arith.constant 0 : index
    %c0_1 = arith.constant 0 : index
    %3 = vector.load %arg3[%c0, %c0_1] : memref<16x32xbf16, #tpu.memory_space<vmem>>, vector<16x32xbf16>
    %4 = arith.extf %3 : vector<16x32xbf16> to vector<16x32xf32>
    %cst = arith.constant dense<0.000000e+00> : vector<16xf32>
    %5 = vector.multi_reduction <add>, %4, %cst [1] : vector<16x32xf32> to vector<16xf32>
    %6 = vector.shape_cast %5 : vector<16xf32> to vector<16x1xf32>
    %cst_2 = arith.constant 3.200000e+01 : f32
    %7 = vector.broadcast %cst_2 : f32 to vector<16x1xf32>
    %8 = arith.divf %6, %7 : vector<16x1xf32>
    %9 = vector.broadcast %8 : vector<16x1xf32> to vector<16x32xf32>
    %10 = arith.subf %4, %9 : vector<16x32xf32>
    %11 = arith.mulf %10, %10 : vector<16x32xf32>
    %cst_3 = arith.constant dense<0.000000e+00> : vector<16xf32>
    %12 = vector.multi_reduction <add>, %11, %cst_3 [1] : vector<16x32xf32> to vector<16xf32>
    %13 = vector.shape_cast %12 : vector<16xf32> to vector<16x1xf32>
    %cst_4 = arith.constant 3.200000e+01 : f32
    %14 = vector.broadcast %cst_4 : f32 to vector<16x1xf32>
    %15 = arith.divf %13, %14 : vector<16x1xf32>
    %16 = vector.broadcast %8 : vector<16x1xf32> to vector<16x32xf32>
    %17 = arith.subf %4, %16 : vector<16x32xf32>
    %cst_5 = arith.constant 9.99999997E-7 : f32
    %18 = vector.broadcast %cst_5 : f32 to vector<16x1xf32>
    %19 = arith.addf %15, %18 : vector<16x1xf32>
    %20 = math.rsqrt %19 : vector<16x1xf32>
    %21 = vector.broadcast %20 : vector<16x1xf32> to vector<16x32xf32>
    %22 = arith.mulf %17, %21 : vector<16x32xf32>
    %c0_6 = arith.constant 0 : index
    %c0_7 = arith.constant 0 : index
    %23 = vector.load %arg6[%c0_6, %c0_7] : memref<1x32xf32, #tpu.memory_space<vmem>>, vector<1x32xf32>
    %24 = vector.broadcast %23 : vector<1x32xf32> to vector<16x32xf32>
    %25 = arith.mulf %22, %24 : vector<16x32xf32>
    %c0_8 = arith.constant 0 : index
    %c0_9 = arith.constant 0 : index
    %26 = vector.load %arg7[%c0_8, %c0_9] : memref<1x32xf32, #tpu.memory_space<vmem>>, vector<1x32xf32>
    %27 = vector.broadcast %26 : vector<1x32xf32> to vector<16x32xf32>
    %28 = arith.addf %25, %27 : vector<16x32xf32>
    %29 = arith.truncf %28 : vector<16x32xf32> to vector<16x32xbf16>
    %c0_10 = arith.constant 0 : index
    %c0_11 = arith.constant 0 : index
    %30 = vector.load %arg9[%c0_10, %c0_11] : memref<16x128xf32, #tpu.memory_space<vmem>>, vector<16x128xf32>
    %c0_12 = arith.constant 0 : index
    %c0_13 = arith.constant 0 : index
    %31 = vector.load %arg4[%c0_12, %c0_13] : memref<32x128xbf16, #tpu.memory_space<vmem>>, vector<32x128xbf16>
    %cst_14 = arith.constant dense<0.000000e+00> : vector<16x128xf32>
    %32 = tpu.matmul %29, %31, %cst_14 {dimension_numbers = #tpu.dot_dimension_numbers<[1], [0], [0], [1], [0, 0, 1, 1], [], []>} : vector<16x32xbf16>, vector<32x128xbf16>, vector<16x128xf32> -> vector<16x128xf32>
    %33 = arith.addf %30, %32 : vector<16x128xf32>
    %c0_15 = arith.constant 0 : index
    %c0_16 = arith.constant 0 : index
    %34 = vector.load %arg9[%c0_15, %c0_16] : memref<16x128xf32, #tpu.memory_space<vmem>>, vector<16x128xf32>
    tpu.vector_store %arg9[%c0_15, %c0_16], %33 {strides = array<i32>} : memref<16x128xf32, #tpu.memory_space<vmem>>, vector<16x128xf32>,
    %c0_i32_17 = arith.constant 0 : i32
    %35 = arith.cmpi eq, %arg2, %c0_i32_17 : i32
    %36 = arith.extui %35 : i1 to i32
    %c0_i32_18 = arith.constant 0 : i32
    %37 = arith.cmpi ne, %36, %c0_i32_18 : i32
    scf.if %37 {
      %c0_19 = arith.constant 0 : index
      %c0_20 = arith.constant 0 : index
      %38 = vector.load %arg9[%c0_19, %c0_20] : memref<16x128xf32, #tpu.memory_space<vmem>>, vector<16x128xf32>
      %c0_21 = arith.constant 0 : index
      %c0_22 = arith.constant 0 : index
      %39 = vector.load %arg5[%c0_21, %c0_22] : memref<1x128xf32, #tpu.memory_space<vmem>>, vector<1x128xf32>
      %40 = vector.broadcast %39 : vector<1x128xf32> to vector<16x128xf32>
      %41 = arith.addf %38, %40 : vector<16x128xf32>
      %c0_23 = arith.constant 0 : index
      %c0_24 = arith.constant 0 : index
      %42 = vector.load %arg8[%c0_23, %c0_24] : memref<16x128xf32, #tpu.memory_space<vmem>>, vector<16x128xf32>
      tpu.vector_store %arg8[%c0_23, %c0_24], %41 {strides = array<i32>} : memref<16x128xf32, #tpu.memory_space<vmem>>, vector<16x128xf32>,
    } else {
    }
    return
  }
  func.func @transform_0(%arg0: i32, %arg1: i32, %arg2: i32) -> (i32, i32) {
    %c0_i32 = arith.constant 0 : i32
    return %arg0, %arg2 : i32, i32
  }
  func.func @transform_1(%arg0: i32, %arg1: i32, %arg2: i32) -> (i32, i32) {
    %c0_i32 = arith.constant 0 : i32
    return %arg2, %arg1 : i32, i32
  }
  func.func @transform_2(%arg0: i32, %arg1: i32, %arg2: i32) -> (i32, i32) {
    %c0_i32 = arith.constant 0 : i32
    %c0_i32_0 = arith.constant 0 : i32
    return %c0_i32, %arg1 : i32, i32
  }
  func.func @transform_3(%arg0: i32, %arg1: i32, %arg2: i32) -> (i32, i32) {
    %c0_i32 = arith.constant 0 : i32
    %c0_i32_0 = arith.constant 0 : i32
    return %c0_i32, %arg2 : i32, i32
  }
  func.func @transform_4(%arg0: i32, %arg1: i32, %arg2: i32) -> (i32, i32) {
    %c0_i32 = arith.constant 0 : i32
    %c0_i32_0 = arith.constant 0 : i32
    return %c0_i32, %arg2 : i32, i32
  }
  func.func @transform_5(%arg0: i32, %arg1: i32, %arg2: i32) -> (i32, i32) {
    %c0_i32 = arith.constant 0 : i32
    return %arg0, %arg1 : i32, i32
  }
}

</mosaic_0001>

<llo_original>
// kernel: _lambda_.10
$region0: #{_lambda_.10}
  #allocation0 [shape = 'u32[]', space=smem, size = 0x4, offset = 0x4, fixed_abs, tag = 'smem constant byte address 0x4 - core index']
  #allocation1 [shape = 'u32[72,128]{1,0:T(1,128)}', space=vmem, size = 0x9000, scoped, tag = 'internal scratch']
  #allocation2 [shape = 'f32[32,128]{1,0:T(8,128)}', space=vmem, size = 0x4000, scoped, tag = 'scratch operand']
  %s0 = inlined_call_operand.vmem [shape: bf16[32,128], index: 0, kind: input, shape index: {}]
  %s1 = inlined_call_operand.vmem [shape: bf16[128,128], index: 1, kind: input, shape index: {}]
  %s2 = inlined_call_operand.vmem [shape: f32[1,128], index: 2, kind: input, shape index: {}]
  %s3 = inlined_call_operand.vmem [shape: bf16[32,128], index: 3, kind: output, shape index: {}]
  %s4 = sld [smem:[#allocation0]]
  $region30: #{_lambda_.10} parent=0
    _
  %s6 = ssub.s32 1, %s4
  %s7 = scalar_select 0, %s6, %s4
  // Predicated region
  $region2: #{_lambda_.10} parent=0 // pred_check
    _
  $region3: #{_lambda_.10} parent=0 // pred_check_branch
    %9 = sbr.rel (0) target = $region5
  $region4: #{_lambda_.10} parent=0 // pred_region
    _
  $region5: #{_lambda_.10} parent=0 // pred_fallthru
    _
  // Predicated region
  $region6: #{_lambda_.10} parent=0 // pred_check
    _
  $region7: #{_lambda_.10} parent=0 // pred_check_branch
    %11 = sbr.rel (0) target = $region9
  $region8: #{_lambda_.10} parent=0 // pred_region
    _
  $region9: #{_lambda_.10} parent=0 // pred_fallthru
    _
  // Predicated region
  $region10: #{_lambda_.10} parent=0 // pred_check
    _
  $region11: #{_lambda_.10} parent=0 // pred_check_branch
    %13 = sbr.rel (0) target = $region13
  $region12: #{_lambda_.10} parent=0 // pred_region
    _
  $region13: #{_lambda_.10} parent=0 // pred_fallthru
    _
  %p14 = scmp.eq.s32.totalorder 0, 0
  // Predicated region
  $region14: #{_lambda_.10} parent=0 // pred_check
    %p15 = pneg %p14
  $region15: #{_lambda_.10} parent=0 // pred_check_branch
    %17 = sbr.rel (%p15) target = $region17
  $region16: #{_lambda_.10} parent=0 // pred_region
    %18 = vst [vmem:[#allocation2] sm:$0xff] 0.0
    %19 = vst [vmem:[#allocation2 + $0x8] sm:$0xff] 0.0
    %20 = vst [vmem:[#allocation2 + $0x10] sm:$0xff] 0.0
    %21 = vst [vmem:[#allocation2 + $0x18] sm:$0xff] 0.0
  $region17: #{_lambda_.10} parent=0 // pred_fallthru
    _
  %v22 = vld [vmem:[%s0] sm:$0xf]
  %v23 = vld [vmem:[%s0 + $0x4] sm:$0xf]
  %v24 = vld [vmem:[%s0 + $0x8] sm:$0xf]
  %v25 = vld [vmem:[%s0 + $0xc] sm:$0xf]
  %v26 = vld [vmem:[#allocation2] sm:$0xff]
  %v27 = vld [vmem:[#allocation2 + $0x8] sm:$0xff]
  %v28 = vld [vmem:[#allocation2 + $0x10] sm:$0xff]
  %v29 = vld [vmem:[#allocation2 + $0x18] sm:$0xff]
  %v30 = vld [vmem:[%s1] sm:$0xf]
  %v31 = vld [vmem:[%s1 + $0x4] sm:$0xf]
  %v32 = vld [vmem:[%s1 + $0x8] sm:$0xf]
  %v33 = vld [vmem:[%s1 + $0xc] sm:$0xf]
  %v34 = vld [vmem:[%s1 + $0x10] sm:$0xf]
  %v35 = vld [vmem:[%s1 + $0x14] sm:$0xf]
  %v36 = vld [vmem:[%s1 + $0x18] sm:$0xf]
  %v37 = vld [vmem:[%s1 + $0x1c] sm:$0xf]
  %v38 = vld [vmem:[%s1 + $0x20] sm:$0xf]
  %v39 = vld [vmem:[%s1 + $0x24] sm:$0xf]
  %v40 = vld [vmem:[%s1 + $0x28] sm:$0xf]
  %v41 = vld [vmem:[%s1 + $0x2c] sm:$0xf]
  %v42 = vld [vmem:[%s1 + $0x30] sm:$0xf]
  %v43 = vld [vmem:[%s1 + $0x34] sm:$0xf]
  %v44 = vld [vmem:[%s1 + $0x38] sm:$0xf]
  %v45 = vld [vmem:[%s1 + $0x3c] sm:$0xf]
  %v50 = vunpack.c.l.b16 %v22
  %v51 = vunpack.c.l.b16 %v23
  %v52 = vunpack.c.l.b16 %v24
  %v53 = vunpack.c.l.b16 %v25
  %v54 = vpack.c.b16 %v51, %v50
  %v55 = vpack.c.b16 %v53, %v52
  %v74 = vunpack.c.l.b16 %v30
  %v75 = vunpack.c.l.b16 %v31
  %v76 = vunpack.c.l.b16 %v32
  %v77 = vunpack.c.l.b16 %v33
  %v78 = vunpack.c.l.b16 %v34
  %v79 = vunpack.c.l.b16 %v35
  %v80 = vunpack.c.l.b16 %v36
  %v81 = vunpack.c.l.b16 %v37
  %v82 = vunpack.c.l.b16 %v38
  %v83 = vunpack.c.l.b16 %v39
  %v84 = vunpack.c.l.b16 %v40
  %v85 = vunpack.c.l.b16 %v41
  %v86 = vunpack.c.l.b16 %v42
  %v87 = vunpack.c.l.b16 %v43
  %v88 = vunpack.c.l.b16 %v44
  %v89 = vunpack.c.l.b16 %v45
  %v90 = vpack.c.b16 %v75, %v74
  %v91 = vpack.c.b16 %v77, %v76
  %v92 = vpack.c.b16 %v79, %v78
  %v93 = vpack.c.b16 %v81, %v80
  %v94 = vpack.c.b16 %v83, %v82
  %v95 = vpack.c.b16 %v85, %v84
  %v96 = vpack.c.b16 %v87, %v86
  %v97 = vpack.c.b16 %v89, %v88
  %106 = vmatpush.bf16.msra.mxu0 %v97
  %107 = vmatpush.bf16.msra.mxu0 %v96
  %108 = vmatpush.bf16.msra.mxu0 %v95
  %109 = vmatpush.bf16.msra.mxu0 %v94
  %110 = vmatpush.bf16.msra.mxu0 %v93
  %111 = vmatpush.bf16.msra.mxu0 %v92
  %112 = vmatpush.bf16.msra.mxu0 %v91
  %113 = vmatpush.bf16.msra.mxu0 %v90
  %114 = vmatmul.bf16.gmra.mxu0 %v54
  %v115 = vpop.f32.mrf.mxu0
  %v116 = vadd.f32 0.0, %v115
  %v117 = vpop.f32.mrf.mxu0
  %v118 = vadd.f32 0.0, %v117
  %119 = vmatmul.bf16.gmra.mxu0 %v55
  %v120 = vpop.f32.mrf.mxu0
  %v121 = vadd.f32 0.0, %v120
  %v122 = vpop.f32.mrf.mxu0
  %v123 = vadd.f32 0.0, %v122
  %124 = vdwg.mxu0
  %v125 = vadd.f32 %v26, %v116
  %v126 = vadd.f32 %v27, %v118
  %v127 = vadd.f32 %v28, %v121
  %v128 = vadd.f32 %v29, %v123
  %129 = vst [vmem:[#allocation2] sm:$0xff] %v125
  %130 = vst [vmem:[#allocation2 + $0x8] sm:$0xff] %v126
  %131 = vst [vmem:[#allocation2 + $0x10] sm:$0xff] %v127
  %132 = vst [vmem:[#allocation2 + $0x18] sm:$0xff] %v128
  // Predicated region
  $region18: #{_lambda_.10} parent=0 // pred_check
    %p133 = pneg %p14
  $region19: #{_lambda_.10} parent=0 // pred_check_branch
    %135 = sbr.rel (%p133) target = $region21
  $region20: #{_lambda_.10} parent=0 // pred_region
    %v136 = vld [vmem:[#allocation2] sm:$0xff]
    %v137 = vld [vmem:[#allocation2 + $0x8] sm:$0xff]
    %v138 = vld [vmem:[#allocation2 + $0x10] sm:$0xff]
    %v139 = vld [vmem:[#allocation2 + $0x18] sm:$0xff]
    %v140 = vld [vmem:[%s2] sm:$0x1]
    %v142 = vperm.slane %v140, 0
    %v144 = vadd.f32 %v136, %v142
    %v145 = vadd.f32 %v137, %v142
    %v146 = vadd.f32 %v138, %v142
    %v147 = vadd.f32 %v139, %v142
    %v148 = vpack.c.bf16 %v144, %v144
    %v149 = vpack.c.bf16 %v145, %v145
    %v150 = vpack.c.bf16 %v146, %v146
    %v151 = vpack.c.bf16 %v147, %v147
    %152 = vst [vmem:[%s3] sm:$0xf] %v148
    %153 = vst [vmem:[%s3 + $0x4] sm:$0xf] %v149
    %154 = vst [vmem:[%s3 + $0x8] sm:$0xf] %v150
    %155 = vst [vmem:[%s3 + $0xc] sm:$0xf] %v151
  $region21: #{_lambda_.10} parent=0 // pred_fallthru
    _
  // Predicated region
  $region22: #{_lambda_.10} parent=0 // pred_check
    _
  $region23: #{_lambda_.10} parent=0 // pred_check_branch
    %157 = sbr.rel (0) target = $region25
  $region24: #{_lambda_.10} parent=0 // pred_region
    _
  $region25: #{_lambda_.10} parent=0 // pred_fallthru
    _
  // Predicated region
  $region26: #{_lambda_.10} parent=0 // pred_check
    _
  $region27: #{_lambda_.10} parent=0 // pred_check_branch
    %159 = sbr.rel (0) target = $region29
  $region28: #{_lambda_.10} parent=0 // pred_region
    _
  $region29: #{_lambda_.10} parent=0 // pred_fallthru
    _

// kernel: _lambda_.11
$region0: #{_lambda_.11}
  #allocation0 [shape = 'u32[]', space=smem, size = 0x4, offset = 0x4, fixed_abs, tag = 'smem constant byte address 0x4 - core index']
  #allocation1 [shape = 'u32[72,128]{1,0:T(1,128)}', space=vmem, size = 0x9000, scoped, tag = 'internal scratch']
  #allocation2 [shape = 'f32[48,128]{1,0:T(8,128)}', space=vmem, size = 0x6000, scoped, tag = 'scratch operand']
  %s0 = inlined_call_operand.vmem [shape: bf16[48,32], index: 0, kind: input, shape index: {}]
  %s1 = inlined_call_operand.vmem [shape: bf16[32,128], index: 1, kind: input, shape index: {}]
  %s2 = inlined_call_operand.vmem [shape: f32[1,128], index: 2, kind: input, shape index: {}]
  %s3 = inlined_call_operand.vmem [shape: f32[1,32], index: 3, kind: input, shape index: {}]
  %s4 = inlined_call_operand.vmem [shape: f32[1,32], index: 4, kind: input, shape index: {}]
  %s5 = inlined_call_operand.vmem [shape: bf16[48,128], index: 5, kind: output, shape index: {}]
  %s6 = sld [smem:[#allocation0]]
  $region38: #{_lambda_.11} parent=0
    _
  %s8 = ssub.s32 1, %s6
  %s9 = scalar_select 0, %s8, %s6
  // Predicated region
  $region2: #{_lambda_.11} parent=0 // pred_check
    _
  $region3: #{_lambda_.11} parent=0 // pred_check_branch
    %11 = sbr.rel (0) target = $region5
  $region4: #{_lambda_.11} parent=0 // pred_region
    _
  $region5: #{_lambda_.11} parent=0 // pred_fallthru
    _
  // Predicated region
  $region6: #{_lambda_.11} parent=0 // pred_check
    _
  $region7: #{_lambda_.11} parent=0 // pred_check_branch
    %13 = sbr.rel (0) target = $region9
  $region8: #{_lambda_.11} parent=0 // pred_region
    _
  $region9: #{_lambda_.11} parent=0 // pred_fallthru
    _
  // Predicated region
  $region10: #{_lambda_.11} parent=0 // pred_check
    _
  $region11: #{_lambda_.11} parent=0 // pred_check_branch
    %15 = sbr.rel (0) target = $region13
  $region12: #{_lambda_.11} parent=0 // pred_region
    _
  $region13: #{_lambda_.11} parent=0 // pred_fallthru
    _
  // Predicated region
  $region14: #{_lambda_.11} parent=0 // pred_check
    _
  $region15: #{_lambda_.11} parent=0 // pred_check_branch
    %17 = sbr.rel (0) target = $region17
  $region16: #{_lambda_.11} parent=0 // pred_region
    _
  $region17: #{_lambda_.11} parent=0 // pred_fallthru
    _
  // Predicated region
  $region18: #{_lambda_.11} parent=0 // pred_check
    _
  $region19: #{_lambda_.11} parent=0 // pred_check_branch
    %19 = sbr.rel (0) target = $region21
  $region20: #{_lambda_.11} parent=0 // pred_region
    _
  $region21: #{_lambda_.11} parent=0 // pred_fallthru
    _
  %p21 = scmp.eq.s32.totalorder 0, 0
  // Predicated region
  $region22: #{_lambda_.11} parent=0 // pred_check
    %p22 = pneg %p21
  $region23: #{_lambda_.11} parent=0 // pred_check_branch
    %24 = sbr.rel (%p22) target = $region25
  $region24: #{_lambda_.11} parent=0 // pred_region
    %25 = vst [vmem:[#allocation2] sm:$0xff] 0.0
    %26 = vst [vmem:[#allocation2 + $0x8] sm:$0xff] 0.0
    %27 = vst [vmem:[#allocation2 + $0x10] sm:$0xff] 0.0
    %28 = vst [vmem:[#allocation2 + $0x18] sm:$0xff] 0.0
    %29 = vst [vmem:[#allocation2 + $0x20] sm:$0xff] 0.0
    %30 = vst [vmem:[#allocation2 + $0x28] sm:$0xff] 0.0
  $region25: #{_lambda_.11} parent=0 // pred_fallthru
    _
  %v31 = vld [vmem:[%s0] sm:$0xf]
  %v32 = vld [vmem:[%s0 + $0x4] sm:$0xf]
  %v33 = vld [vmem:[%s0 + $0x8] sm:$0xf]
  %v34 = vld [vmem:[%s0 + $0xc] sm:$0xf]
  %v35 = vld [vmem:[%s0 + $0x10] sm:$0xf]
  %v36 = vld [vmem:[%s0 + $0x14] sm:$0xf]
  %v37 = vunpack.c.l.bf16 %v31
  %v38 = vunpack.c.l.bf16 %v32
  %v39 = vunpack.c.l.bf16 %v33
  %v40 = vunpack.c.l.bf16 %v34
  %v41 = vunpack.c.l.bf16 %v35
  %v42 = vunpack.c.l.bf16 %v36
  %vm43 = vcmask 261120
  %v44 = vsel %vm43, %v37, 0.0
  %45 = vadd.xlane.f32.xlu0 %v44
  %v46 = vpop.xlane.xlu0 %45
  %v47 = vsel %vm43, %v38, 0.0
  %48 = vadd.xlane.f32.xlu0 %v47
  %v49 = vpop.xlane.xlu0 %48
  %v50 = vsel %vm43, %v39, 0.0
  %51 = vadd.xlane.f32.xlu0 %v50
  %v52 = vpop.xlane.xlu0 %51
  %v53 = vsel %vm43, %v40, 0.0
  %54 = vadd.xlane.f32.xlu0 %v53
  %v55 = vpop.xlane.xlu0 %54
  %v56 = vsel %vm43, %v41, 0.0
  %57 = vadd.xlane.f32.xlu0 %v56
  %v58 = vpop.xlane.xlu0 %57
  %v59 = vsel %vm43, %v42, 0.0
  %60 = vadd.xlane.f32.xlu0 %v59
  %v61 = vpop.xlane.xlu0 %60
  %v62 = vrcp.pop 32.0
  %v63 = vmul.f32 32.0, %v62
  %v64 = vsub.f32 1.0, %v63
  %v65 = vmul.f32 %v62, %v64
  %v66 = vadd.f32 %v62, %v65
  %vm67 = vweird.f32 %v62
  %v68 = vsel %vm67, %v62, %v66
  %v69 = vmul.f32 %v46, %v68
  %v70 = vmul.f32 %v49, %v68
  %v71 = vmul.f32 %v52, %v68
  %v72 = vmul.f32 %v55, %v68
  %v73 = vmul.f32 %v58, %v68
  %v74 = vmul.f32 %v61, %v68
  %v75 = vsub.f32 %v37, %v69
  %v76 = vsub.f32 %v38, %v70
  %v77 = vsub.f32 %v39, %v71
  %v78 = vsub.f32 %v40, %v72
  %v79 = vsub.f32 %v41, %v73
  %v80 = vsub.f32 %v42, %v74
  %v81 = vmul.f32 %v75, %v75
  %v82 = vmul.f32 %v76, %v76
  %v83 = vmul.f32 %v77, %v77
  %v84 = vmul.f32 %v78, %v78
  %v85 = vmul.f32 %v79, %v79
  %v86 = vmul.f32 %v80, %v80
  %v87 = vsel %vm43, %v81, 0.0
  %88 = vadd.xlane.f32.xlu0 %v87
  %v89 = vpop.xlane.xlu0 %88
  %v90 = vsel %vm43, %v82, 0.0
  %91 = vadd.xlane.f32.xlu0 %v90
  %v92 = vpop.xlane.xlu0 %91
  %v93 = vsel %vm43, %v83, 0.0
  %94 = vadd.xlane.f32.xlu0 %v93
  %v95 = vpop.xlane.xlu0 %94
  %v96 = vsel %vm43, %v84, 0.0
  %97 = vadd.xlane.f32.xlu0 %v96
  %v98 = vpop.xlane.xlu0 %97
  %v99 = vsel %vm43, %v85, 0.0
  %100 = vadd.xlane.f32.xlu0 %v99
  %v101 = vpop.xlane.xlu0 %100
  %v102 = vsel %vm43, %v86, 0.0
  %103 = vadd.xlane.f32.xlu0 %v102
  %v104 = vpop.xlane.xlu0 %103
  %v105 = vmul.f32 %v89, %v68
  %v106 = vmul.f32 %v92, %v68
  %v107 = vmul.f32 %v95, %v68
  %v108 = vmul.f32 %v98, %v68
  %v109 = vmul.f32 %v101, %v68
  %v110 = vmul.f32 %v104, %v68
  %v111 = vadd.f32 %v105, 1e-06
  %v112 = vadd.f32 %v106, 1e-06
  %v113 = vadd.f32 %v107, 1e-06
  %v114 = vadd.f32 %v108, 1e-06
  %v115 = vadd.f32 %v109, 1e-06
  %v116 = vadd.f32 %v110, 1e-06
  %v117 = vrsqrt.pop %v111
  %v118 = vmul.f32 %v117, %v111
  %v119 = vmul.f32 %v118, %v117
  %v120 = vmul.f32 0.5, %v119
  %v121 = vsub.f32 1.5, %v120
  %v122 = vmul.f32 %v117, %v121
  %vm123 = vweird.f32 %v111
  %vm124 = vweird.f32 %v117
  %vm125 = vmor %vm123, %vm124
  %v126 = vsel %vm125, %v117, %v122
  %v127 = vrsqrt.pop %v112
  %v128 = vmul.f32 %v127, %v112
  %v129 = vmul.f32 %v128, %v127
  %v130 = vmul.f32 0.5, %v129
  %v131 = vsub.f32 1.5, %v130
  %v132 = vmul.f32 %v127, %v131
  %vm133 = vweird.f32 %v112
  %vm134 = vweird.f32 %v127
  %vm135 = vmor %vm133, %vm134
  %v136 = vsel %vm135, %v127, %v132
  %v137 = vrsqrt.pop %v113
  %v138 = vmul.f32 %v137, %v113
  %v139 = vmul.f32 %v138, %v137
  %v140 = vmul.f32 0.5, %v139
  %v141 = vsub.f32 1.5, %v140
  %v142 = vmul.f32 %v137, %v141
  %vm143 = vweird.f32 %v113
  %vm144 = vweird.f32 %v137
  %vm145 = vmor %vm143, %vm144
  %v146 = vsel %vm145, %v137, %v142
  %v147 = vrsqrt.pop %v114
  %v148 = vmul.f32 %v147, %v114
  %v149 = vmul.f32 %v148, %v147
  %v150 = vmul.f32 0.5, %v149
  %v151 = vsub.f32 1.5, %v150
  %v152 = vmul.f32 %v147, %v151
  %vm153 = vweird.f32 %v114
  %vm154 = vweird.f32 %v147
  %vm155 = vmor %vm153, %vm154
  %v156 = vsel %vm155, %v147, %v152
  %v157 = vrsqrt.pop %v115
  %v158 = vmul.f32 %v157, %v115
  %v159 = vmul.f32 %v158, %v157
  %v160 = vmul.f32 0.5, %v159
  %v161 = vsub.f32 1.5, %v160
  %v162 = vmul.f32 %v157, %v161
  %vm163 = vweird.f32 %v115
  %vm164 = vweird.f32 %v157
  %vm165 = vmor %vm163, %vm164
  %v166 = vsel %vm165, %v157, %v162
  %v167 = vrsqrt.pop %v116
  %v168 = vmul.f32 %v167, %v116
  %v169 = vmul.f32 %v168, %v167
  %v170 = vmul.f32 0.5, %v169
  %v171 = vsub.f32 1.5, %v170
  %v172 = vmul.f32 %v167, %v171
  %vm173 = vweird.f32 %v116
  %vm174 = vweird.f32 %v167
  %vm175 = vmor %vm173, %vm174
  %v176 = vsel %vm175, %v167, %v172
  %v177 = vmul.f32 %v75, %v126
  %v178 = vmul.f32 %v76, %v136
  %v179 = vmul.f32 %v77, %v146
  %v180 = vmul.f32 %v78, %v156
  %v181 = vmul.f32 %v79, %v166
  %v182 = vmul.f32 %v80, %v176
  %v183 = vld [vmem:[%s3] sm:$0x1]
  %v185 = vperm.slane %v183, 0
  %v187 = vmul.f32 %v177, %v185
  %v188 = vmul.f32 %v178, %v185
  %v189 = vmul.f32 %v179, %v185
  %v190 = vmul.f32 %v180, %v185
  %v191 = vmul.f32 %v181, %v185
  %v192 = vmul.f32 %v182, %v185
  %v193 = vld [vmem:[%s4] sm:$0x1]
  %v195 = vperm.slane %v193, 0
  %v197 = vadd.f32 %v187, %v195
  %v198 = vadd.f32 %v188, %v195
  %v199 = vadd.f32 %v189, %v195
  %v200 = vadd.f32 %v190, %v195
  %v201 = vadd.f32 %v191, %v195
  %v202 = vadd.f32 %v192, %v195
  %v203 = vpack.c.bf16 %v198, %v197
  %v204 = vpack.c.bf16 %v200, %v199
  %v205 = vpack.c.bf16 %v202, %v201
  %v206 = vld [vmem:[#allocation2] sm:$0xff]
  %v207 = vld [vmem:[#allocation2 + $0x8] sm:$0xff]
  %v208 = vld [vmem:[#allocation2 + $0x10] sm:$0xff]
  %v209 = vld [vmem:[#allocation2 + $0x18] sm:$0xff]
  %v210 = vld [vmem:[#allocation2 + $0x20] sm:$0xff]
  %v211 = vld [vmem:[#allocation2 + $0x28] sm:$0xff]
  %v212 = vld [vmem:[%s1] sm:$0xf]
  %v213 = vld [vmem:[%s1 + $0x4] sm:$0xf]
  %v214 = vld [vmem:[%s1 + $0x8] sm:$0xf]
  %v215 = vld [vmem:[%s1 + $0xc] sm:$0xf]
  %v220 = vunpack.c.l.b16 %v212
  %v221 = vunpack.c.l.b16 %v213
  %v222 = vunpack.c.l.b16 %v214
  %v223 = vunpack.c.l.b16 %v215
  %v224 = vpack.c.b16 %v221, %v220
  %v225 = vpack.c.b16 %v223, %v222
  %v229 = vsel %vm43, %v203, 0
  %v232 = vsel %vm43, %v204, 0
  %v235 = vsel %vm43, %v205, 0
  %237 = vmatpush.bf16.msra.mxu0 0
  %238 = vmatpush.bf16.msra.mxu0 0
  %239 = vmatpush.bf16.msra.mxu0 0
  %240 = vmatpush.bf16.msra.mxu0 0
  %241 = vmatpush.bf16.msra.mxu0 0
  %242 = vmatpush.bf16.msra.mxu0 0
  %243 = vmatpush.bf16.msra.mxu0 %v225
  %244 = vmatpush.bf16.msra.mxu0 %v224
  %245 = vmatmul.bf16.gmra.mxu0 %v229
  %v246 = vpop.f32.mrf.mxu0
  %v247 = vadd.f32 0.0, %v246
  %v248 = vpop.f32.mrf.mxu0
  %v249 = vadd.f32 0.0, %v248
  %250 = vmatmul.bf16.gmra.mxu0 %v232
  %v251 = vpop.f32.mrf.mxu0
  %v252 = vadd.f32 0.0, %v251
  %v253 = vpop.f32.mrf.mxu0
  %v254 = vadd.f32 0.0, %v253
  %255 = vmatmul.bf16.gmra.mxu0 %v235
  %v256 = vpop.f32.mrf.mxu0
  %v257 = vadd.f32 0.0, %v256
  %v258 = vpop.f32.mrf.mxu0
  %v259 = vadd.f32 0.0, %v258
  %260 = vdwg.mxu0
  %v261 = vadd.f32 %v206, %v247
  %v262 = vadd.f32 %v207, %v249
  %v263 = vadd.f32 %v208, %v252
  %v264 = vadd.f32 %v209, %v254
  %v265 = vadd.f32 %v210, %v257
  %v266 = vadd.f32 %v211, %v259
  %267 = vst [vmem:[#allocation2] sm:$0xff] %v261
  %268 = vst [vmem:[#allocation2 + $0x8] sm:$0xff] %v262
  %269 = vst [vmem:[#allocation2 + $0x10] sm:$0xff] %v263
  %270 = vst [vmem:[#allocation2 + $0x18] sm:$0xff] %v264
  %271 = vst [vmem:[#allocation2 + $0x20] sm:$0xff] %v265
  %272 = vst [vmem:[#allocation2 + $0x28] sm:$0xff] %v266
  // Predicated region
  $region26: #{_lambda_.11} parent=0 // pred_check
    %p273 = pneg %p21
  $region27: #{_lambda_.11} parent=0 // pred_check_branch
    %275 = sbr.rel (%p273) target = $region29
  $region28: #{_lambda_.11} parent=0 // pred_region
    %v276 = vld [vmem:[#allocation2] sm:$0xff]
    %v277 = vld [vmem:[#allocation2 + $0x8] sm:$0xff]
    %v278 = vld [vmem:[#allocation2 + $0x10] sm:$0xff]
    %v279 = vld [vmem:[#allocation2 + $0x18] sm:$0xff]
    %v280 = vld [vmem:[#allocation2 + $0x20] sm:$0xff]
    %v281 = vld [vmem:[#allocation2 + $0x28] sm:$0xff]
    %v282 = vld [vmem:[%s2] sm:$0x1]
    %v284 = vperm.slane %v282, 0
    %v286 = vadd.f32 %v276, %v284
    %v287 = vadd.f32 %v277, %v284
    %v288 = vadd.f32 %v278, %v284
    %v289 = vadd.f32 %v279, %v284
    %v290 = vadd.f32 %v280, %v284
    %v291 = vadd.f32 %v281, %v284
    %v292 = vpack.c.bf16 %v286, %v286
    %v293 = vpack.c.bf16 %v287, %v287
    %v294 = vpack.c.bf16 %v288, %v288
    %v295 = vpack.c.bf16 %v289, %v289
    %v296 = vpack.c.bf16 %v290, %v290
    %v297 = vpack.c.bf16 %v291, %v291
    %298 = vst [vmem:[%s5] sm:$0xf] %v292
    %299 = vst [vmem:[%s5 + $0x4] sm:$0xf] %v293
    %300 = vst [vmem:[%s5 + $0x8] sm:$0xf] %v294
    %301 = vst [vmem:[%s5 + $0xc] sm:$0xf] %v295
    %302 = vst [vmem:[%s5 + $0x10] sm:$0xf] %v296
    %303 = vst [vmem:[%s5 + $0x14] sm:$0xf] %v297
  $region29: #{_lambda_.11} parent=0 // pred_fallthru
    _
  // Predicated region
  $region30: #{_lambda_.11} parent=0 // pred_check
    _
  $region31: #{_lambda_.11} parent=0 // pred_check_branch
    %305 = sbr.rel (0) target = $region33
  $region32: #{_lambda_.11} parent=0 // pred_region
    _
  $region33: #{_lambda_.11} parent=0 // pred_fallthru
    _
  // Predicated region
  $region34: #{_lambda_.11} parent=0 // pred_check
    _
  $region35: #{_lambda_.11} parent=0 // pred_check_branch
    %307 = sbr.rel (0) target = $region37
  $region36: #{_lambda_.11} parent=0 // pred_region
    _
  $region37: #{_lambda_.11} parent=0 // pred_fallthru
    _

// kernel: _lambda_.12
$region0: #{_lambda_.12}
  #allocation0 [shape = 'u32[]', space=smem, size = 0x4, offset = 0x4, fixed_abs, tag = 'smem constant byte address 0x4 - core index']
  #allocation1 [shape = 'u32[72,128]{1,0:T(1,128)}', space=vmem, size = 0x9000, scoped, tag = 'internal scratch']
  %s0 = inlined_call_operand.vmem [shape: bf16[2,17,96], index: 0, kind: input, shape index: {}]
  %s1 = inlined_call_operand.vmem [shape: bf16[2,17,32], index: 1, kind: input, shape index: {}]
  %s2 = inlined_call_operand.vmem [shape: bf16[32,32], index: 2, kind: input, shape index: {}]
  %s3 = inlined_call_operand.vmem [shape: f32[1,32], index: 3, kind: input, shape index: {}]
  %s4 = inlined_call_operand.vmem [shape: bf16[2,17,32], index: 4, kind: output, shape index: {}]
  %s5 = sld [smem:[#allocation0]]
  $region49: #{_lambda_.12} parent=0
    _
  %s7 = ssub.s32 1, %s5
  %s8 = scalar_select 0, %s7, %s5
  loop: start=0, step=1, limit=4
  $region2: #{_lambda_.12} parent=0 // loop_pre_header
    _
  $region3: #{_lambda_.12} parent=0 // loop_header
    %s10 = sphi 0, %s14
    %p11 = scmp.ge.s32.totalorder %s10, 4
    %s20 = sphi 0, %s22
    %s23 = sphi 0, %s20
    %s24 = sphi 0, %s23
    %s40 = sphi 0, %s24
    %s46 = sphi 0, %s48
    %s49 = sphi 0, %s46
    %s50 = sphi 0, %s49
    %s66 = sphi 0, %s50
    %s70 = sphi 0, %s70
    %s72 = sphi 0, %s70
    %s73 = sphi 0, %s72
    %s87 = sphi 0, %s73
    %s91 = sphi 0, %s91
    %s93 = sphi 0, %s91
    %s94 = sphi 0, %s93
    %s108 = sphi 0, %s94
    %s114 = sphi 0, %s116
    %s117 = sphi 0, %s114
    %s118 = sphi 0, %s117
    %s134 = sphi 0, %s118
  $region4: #{_lambda_.12} parent=0 // loop_header_branch
    %13 = sbr.rel (%p11) target = $region8
  $region5: #{_lambda_.12} parent=0 // loop_body
    %s15 = ssub.s32 %s10, 1
    %s16 = ssub.s32 %s10, 2
    %s17 = sadd.s32 %s10, 1
    %s18 = ssub.s32 %s10, %s17
    %p19 = scmp.eq.s32.totalorder %s18, 0
    %s21 = sadd.s32 %s20, 1
    %s22 = scalar_select %p19, %s20, %s21
    %p25 = pneg %p19
    %p26 = scmp.eq.s32.totalorder %s10, 1
    %p27 = por %p25, %p26
    %p28 = scmp.ne.s32.totalorder %s20, %s23
    %p29 = scmp.eq.s32.totalorder %s10, 0
    %p30 = por %p28, %p29
    %p31 = scmp.ne.s32.totalorder %s20, %s23
    %p32 = scmp.eq.s32.totalorder %s15, 1
    %p33 = por %p31, %p32
    %p34 = scmp.ne.s32.totalorder %s23, %s24
    %p35 = scmp.eq.s32.totalorder %s15, 0
    %p36 = por %p34, %p35
    %p37 = scmp.ne.s32.totalorder %s23, %s24
    %p38 = scmp.eq.s32.totalorder %s16, 1
    %p39 = por %p37, %p38
    %p41 = scmp.ne.s32.totalorder %s24, %s40
    %p42 = scmp.eq.s32.totalorder %s16, 0
    %p43 = por %p41, %p42
    %s44 = ssub.s32 %s10, %s17
    %p45 = scmp.eq.s32.totalorder %s44, 0
    %s47 = sadd.s32 %s46, 1
    %s48 = scalar_select %p45, %s46, %s47
    %p51 = pneg %p45
    %p52 = scmp.eq.s32.totalorder %s10, 1
    %p53 = por %p51, %p52
    %p54 = scmp.ne.s32.totalorder %s46, %s49
    %p55 = scmp.eq.s32.totalorder %s10, 0
    %p56 = por %p54, %p55
    %p57 = scmp.ne.s32.totalorder %s46, %s49
    %p58 = scmp.eq.s32.totalorder %s15, 1
    %p59 = por %p57, %p58
    %p60 = scmp.ne.s32.totalorder %s49, %s50
    %p61 = scmp.eq.s32.totalorder %s15, 0
    %p62 = por %p60, %p61
    %p63 = scmp.ne.s32.totalorder %s49, %s50
    %p64 = scmp.eq.s32.totalorder %s16, 1
    %p65 = por %p63, %p64
    %p67 = scmp.ne.s32.totalorder %s50, %s66
    %p68 = scmp.eq.s32.totalorder %s16, 0
    %p69 = por %p67, %p68
    %s71 = sadd.s32 %s70, 1
    %p74 = scmp.eq.s32.totalorder %s10, 1
    %p75 = scmp.ne.s32.totalorder %s70, %s72
    %p76 = scmp.eq.s32.totalorder %s10, 0
    %p77 = por %p75, %p76
    %p78 = scmp.ne.s32.totalorder %s70, %s72
    %p79 = scmp.eq.s32.totalorder %s15, 1
    %p80 = por %p78, %p79
    %p81 = scmp.ne.s32.totalorder %s72, %s73
    %p82 = scmp.eq.s32.totalorder %s15, 0
    %p83 = por %p81, %p82
    %p84 = scmp.ne.s32.totalorder %s72, %s73
    %p85 = scmp.eq.s32.totalorder %s16, 1
    %p86 = por %p84, %p85
    %p88 = scmp.ne.s32.totalorder %s73, %s87
    %p89 = scmp.eq.s32.totalorder %s16, 0
    %p90 = por %p88, %p89
    %s92 = sadd.s32 %s91, 1
    %p95 = scmp.eq.s32.totalorder %s10, 1
    %p96 = scmp.ne.s32.totalorder %s91, %s93
    %p97 = scmp.eq.s32.totalorder %s10, 0
    %p98 = por %p96, %p97
    %p99 = scmp.ne.s32.totalorder %s91, %s93
    %p100 = scmp.eq.s32.totalorder %s15, 1
    %p101 = por %p99, %p100
    %p102 = scmp.ne.s32.totalorder %s93, %s94
    %p103 = scmp.eq.s32.totalorder %s15, 0
    %p104 = por %p102, %p103
    %p105 = scmp.ne.s32.totalorder %s93, %s94
    %p106 = scmp.eq.s32.totalorder %s16, 1
    %p107 = por %p105, %p106
    %p109 = scmp.ne.s32.totalorder %s94, %s108
    %p110 = scmp.eq.s32.totalorder %s16, 0
    %p111 = por %p109, %p110
    %s112 = ssub.s32 %s10, %s17
    %p113 = scmp.eq.s32.totalorder %s112, 0
    %s115 = sadd.s32 %s114, 1
    %s116 = scalar_select %p113, %s114, %s115
    %p119 = pneg %p113
    %p120 = scmp.eq.s32.totalorder %s10, 1
    %p121 = por %p119, %p120
    %p122 = scmp.ne.s32.totalorder %s114, %s117
    %p123 = scmp.eq.s32.totalorder %s10, 0
    %p124 = por %p122, %p123
    %p125 = scmp.ne.s32.totalorder %s114, %s117
    %p126 = scmp.eq.s32.totalorder %s15, 1
    %p127 = por %p125, %p126
    %p128 = scmp.ne.s32.totalorder %s117, %s118
    %p129 = scmp.eq.s32.totalorder %s15, 0
    %p130 = por %p128, %p129
    %p131 = scmp.ne.s32.totalorder %s117, %s118
    %p132 = scmp.eq.s32.totalorder %s16, 1
    %p133 = por %p131, %p132
    %p135 = scmp.ne.s32.totalorder %s118, %s134
    %p136 = scmp.eq.s32.totalorder %s16, 0
    %p137 = por %p135, %p136
    %p138 = scmp.le.s32.totalorder 1, %s10
    %p139 = scmp.lt.s32.totalorder %s10, 3
    %p140 = pnand %p138, %p139
    %p141 = pneg %p140
    // Predicated region
    $region9: #{_lambda_.12} parent=5 // pred_check
      _
    $region10: #{_lambda_.12} parent=5 // pred_check_branch
      %143 = sbr.rel (%p140) target = $region12
    $region11: #{_lambda_.12} parent=5 // pred_region
      %s144 = ssub.s32 %s10, 1
      // Predicated region
      $region13: #{_lambda_.12} parent=11 // pred_check
        %p145 = pneg %p83
      $region14: #{_lambda_.12} parent=11 // pred_check_branch
        %147 = sbr.rel (%p145) target = $region16
      $region15: #{_lambda_.12} parent=11 // pred_region
        _
      $region16: #{_lambda_.12} parent=11 // pred_fallthru
        _
      // Predicated region
      $region17: #{_lambda_.12} parent=11 // pred_check
        %p148 = pneg %p104
      $region18: #{_lambda_.12} parent=11 // pred_check_branch
        %150 = sbr.rel (%p148) target = $region20
      $region19: #{_lambda_.12} parent=11 // pred_region
        _
      $region20: #{_lambda_.12} parent=11 // pred_fallthru
        _
    $region12: #{_lambda_.12} parent=5 // pred_fallthru
      _
    %p151 = scmp.lt.s32.totalorder %s10, 2
    // Predicated region
    $region21: #{_lambda_.12} parent=5 // pred_check
      %p152 = pneg %p151
    $region22: #{_lambda_.12} parent=5 // pred_check_branch
      %154 = sbr.rel (%p152) target = $region24
    $region23: #{_lambda_.12} parent=5 // pred_region
      // Predicated region
      $region25: #{_lambda_.12} parent=23 // pred_check
        %p155 = pneg %p30
      $region26: #{_lambda_.12} parent=23 // pred_check_branch
        %157 = sbr.rel (%p155) target = $region28
      $region27: #{_lambda_.12} parent=23 // pred_region
        %p158 = scmp.lt.s32.totalorder %s10, 1
        %s159 = scalar_select %p158, %s10, 1
        %s160 = smul.addr %s159, 3
        %s161 = smul.addr %s160, 4
        %s162 = scalar_lea.vmem %s0, %s161
      $region28: #{_lambda_.12} parent=23 // pred_fallthru
        _
      // Predicated region
      $region29: #{_lambda_.12} parent=23 // pred_check
        %p163 = pneg %p56
      $region30: #{_lambda_.12} parent=23 // pred_check_branch
        %165 = sbr.rel (%p163) target = $region32
      $region31: #{_lambda_.12} parent=23 // pred_region
        %p166 = scmp.lt.s32.totalorder %s10, 1
        %s167 = scalar_select %p166, %s10, 1
        %s168 = smul.addr %s167, 3
        %s169 = smul.addr %s168, 4
        %s170 = scalar_lea.vmem %s1, %s169
      $region32: #{_lambda_.12} parent=23 // pred_fallthru
        _
    $region24: #{_lambda_.12} parent=5 // pred_fallthru
      _
    %p171 = scmp.le.s32.totalorder 1, %s10
    %p172 = scmp.lt.s32.totalorder %s10, 3
    %p173 = pnand %p171, %p172
    %p174 = pneg %p173
    // Predicated region
    $region33: #{_lambda_.12} parent=5 // pred_check
      _
    $region34: #{_lambda_.12} parent=5 // pred_check_branch
      %176 = sbr.rel (%p173) target = $region36
    $region35: #{_lambda_.12} parent=5 // pred_region
      %s177 = ssub.s32 %s10, 1
      %p178 = scmp.lt.s32.totalorder %s15, 1
      %s179 = scalar_select %p178, %s15, 1
      %s180 = smul.addr %s179, 3
      %s181 = smul.addr %s180, 4
      %s182 = scalar_lea.vmem %s0, %s181
      %p183 = pneg %p36
      %p184 = pneg %p33
      %p185 = scmp.lt.s32.totalorder %s15, 1
      %s186 = scalar_select %p185, %s15, 1
      %s187 = smul.addr %s186, 3
      %s188 = smul.addr %s187, 4
      %s189 = scalar_lea.vmem %s1, %s188
      %p190 = pneg %p62
      %p191 = pneg %p59
      %p192 = pneg %p83
      %p193 = pneg %p80
      %p194 = pneg %p104
      %p195 = pneg %p101
      %p196 = pneg %p130
      %p197 = pneg %p127
      %p198 = scmp.lt.s32.totalorder %s15, 1
      %s199 = scalar_select %p198, %s15, 1
      %s200 = smul.addr %s199, 3
      %s201 = smul.addr %s200, 4
      %s202 = scalar_lea.vmem %s4, %s201
      %p203 = scmp.lt.s32.totalorder %s15, 1
      %s204 = scalar_select %p203, %s15, 1
      %s205 = smul.addr %s204, 3
      %s206 = smul.addr %s205, 4
      %s207 = scalar_lea.vmem %s0, %s206
      %p208 = scmp.lt.s32.totalorder %s15, 1
      %s209 = scalar_select %p208, %s15, 1
      %s210 = smul.addr %s209, 3
      %s211 = smul.addr %s210, 4
      %s212 = scalar_lea.vmem %s1, %s211
      %p213 = scmp.lt.s32.totalorder %s15, 1
      %s214 = scalar_select %p213, %s15, 1
      %s215 = smul.addr %s214, 3
      %s216 = smul.addr %s215, 4
      %s217 = scalar_lea.vmem %s4, %s216
      %v219 = vld [vmem:[%s207] sm:$0xf]
      %v220 = vld [vmem:[%s207 + $0x4] sm:$0xf]
      %v221 = vld [vmem:[%s207 + $0x8] sm:$0x1]
      %v225 = vunpack.c.l.b16 %v219
      %v226 = vunpack.c.l.b16 %v220
      %v227 = vunpack.c.l.b16 %v221
      %v228 = vpack.c.b16 %v226, %v225
      %v229 = vpack.c.b16 %v227, %v227
      %230 = vrot.lane.b32.xlu0 %v228, 96
      %v231 = vpop.permute.xlu0 %230
      %232 = vrot.lane.b32.xlu0 %v229, 96
      %v233 = vpop.permute.xlu0 %232
      %vm234 = vcmask 64512
      %v236 = vsel %vm234, %v228, 0
      %v239 = vsel %vm234, %v229, 0
      %v242 = vsel %vm234, %v231, 0
      %v245 = vsel %vm234, %v233, 0
      %247 = vmatpush.bf16.xpose.msra.mxu0 0
      %248 = vmatpush.bf16.xpose.msra.mxu0 0
      %249 = vmatpush.bf16.xpose.msra.mxu0 0
      %250 = vmatpush.bf16.xpose.msra.mxu0 0
      %251 = vmatpush.bf16.xpose.msra.mxu0 0
      %252 = vmatpush.bf16.xpose.msra.mxu0 0
      %253 = vmatpush.bf16.xpose.msra.mxu0 %v245
      %254 = vmatpush.bf16.xpose.msra.mxu0 %v242
      %255 = vmatmul.bf16.gmra.mxu0 %v236
      %v256 = vpop.f32.mrf.mxu0
      %v257 = vadd.f32 0.0, %v256
      %v258 = vpop.f32.mrf.mxu0
      %v259 = vadd.f32 0.0, %v258
      %260 = vmatmul.bf16.gmra.mxu0 %v239
      %v261 = vpop.f32.mrf.mxu0
      %v262 = vadd.f32 0.0, %v261
      %v263 = vpop.f32.mrf.mxu0
      %264 = vdwg.mxu0
      %v265 = vmul.f32 %v257, 0.35355338
      %v266 = vmul.f32 %v259, 0.35355338
      %v267 = vmul.f32 %v262, 0.35355338
      %vm268 = vcmask 138240
      %v269 = vsel %vm268, %v265, -inf
      %270 = vmax.xlane.f32.xlu0 %v269
      %v271 = vpop.xlane.xlu0 %270
      %v272 = vsel %vm268, %v266, -inf
      %273 = vmax.xlane.f32.xlu0 %v272
      %v274 = vpop.xlane.xlu0 %273
      %vm275 = vcmask 131072
      %v276 = vsel %vm275, %v267, -inf
      %277 = vmax.xlane.f32.xlu0 %v276
      %v278 = vpop.xlane.xlu0 %277
      %v279 = vsub.f32 %v265, %v271
      %v280 = vsub.f32 %v266, %v274
      %v281 = vsub.f32 %v267, %v278
      %v282 = vmul.f32 %v279, 1.442695
      %v283 = vpow.pop %v282
      %v284 = vmul.f32 %v280, 1.442695
      %v285 = vpow.pop %v284
      %v286 = vmul.f32 %v281, 1.442695
      %v287 = vpow.pop %v286
      %v288 = vsel %vm268, %v283, 0.0
      %289 = vadd.xlane.f32.xlu0 %v288
      %v290 = vpop.xlane.xlu0 %289
      %v291 = vsel %vm268, %v285, 0.0
      %292 = vadd.xlane.f32.xlu0 %v291
      %v293 = vpop.xlane.xlu0 %292
      %v294 = vsel %vm275, %v287, 0.0
      %295 = vadd.xlane.f32.xlu0 %v294
      %v296 = vpop.xlane.xlu0 %295
      %v297 = vpack.c.bf16 %v285, %v283
      %v298 = vpack.c.bf16 %v287, %v287
      %299 = vrot.lane.b32.xlu0 %v228, 64
      %v300 = vpop.permute.xlu0 %299
      %301 = vrot.lane.b32.xlu0 %v229, 64
      %v302 = vpop.permute.xlu0 %301
      %v305 = vsel %vm268, %v297, 0
      %v308 = vsel %vm268, %v298, 0
      %vm310 = vcmask 1040384
      %v311 = vsel 0, 4294967295, 65535
      %v312 = vsel %vm310, %v311, 0
      %v314 = vand.u32 %v302, %v312
      %316 = vmatpush.bf16.msra.mxu0 0
      %317 = vmatpush.bf16.msra.mxu0 0
      %318 = vmatpush.bf16.msra.mxu0 0
      %319 = vmatpush.bf16.msra.mxu0 0
      %320 = vmatpush.bf16.msra.mxu0 0
      %321 = vmatpush.bf16.msra.mxu0 0
      %322 = vmatpush.bf16.msra.mxu0 %v314
      %323 = vmatpush.bf16.msra.mxu0 %v300
      %324 = vmatmul.bf16.gmra.mxu0 %v305
      %v325 = vpop.f32.mrf.mxu0
      %v326 = vadd.f32 0.0, %v325
      %v327 = vpop.f32.mrf.mxu0
      %v328 = vadd.f32 0.0, %v327
      %329 = vmatmul.bf16.gmra.mxu0 %v308
      %v330 = vpop.f32.mrf.mxu0
      %v331 = vadd.f32 0.0, %v330
      %v332 = vpop.f32.mrf.mxu0
      %333 = vdwg.mxu0
      %v334 = vrcp.pop %v290
      %v335 = vrcp.pop %v293
      %v336 = vrcp.pop %v296
      %v337 = vmul.f32 %v326, %v334
      %v338 = vmul.f32 %v328, %v335
      %v339 = vmul.f32 %v331, %v336
      %340 = vrot.lane.b32.xlu0 %v228, 120
      %v341 = vpop.permute.xlu0 %340
      %342 = vrot.lane.b32.xlu0 %v229, 120
      %v343 = vpop.permute.xlu0 %342
      %344 = vrot.lane.b32.xlu0 %v228, 88
      %v345 = vpop.permute.xlu0 %344
      %346 = vrot.lane.b32.xlu0 %v229, 88
      %v347 = vpop.permute.xlu0 %346
      %v349 = vsel %vm234, %v341, 0
      %v352 = vsel %vm234, %v343, 0
      %v355 = vsel %vm234, %v345, 0
      %v358 = vsel %vm234, %v347, 0
      %360 = vmatpush.bf16.xpose.msra.mxu0 0
      %361 = vmatpush.bf16.xpose.msra.mxu0 0
      %362 = vmatpush.bf16.xpose.msra.mxu0 0
      %363 = vmatpush.bf16.xpose.msra.mxu0 0
      %364 = vmatpush.bf16.xpose.msra.mxu0 0
      %365 = vmatpush.bf16.xpose.msra.mxu0 0
      %366 = vmatpush.bf16.xpose.msra.mxu0 %v358
      %367 = vmatpush.bf16.xpose.msra.mxu0 %v355
      %368 = vmatmul.bf16.gmra.mxu0 %v349
      %v369 = vpop.f32.mrf.mxu0
      %v370 = vadd.f32 0.0, %v369
      %v371 = vpop.f32.mrf.mxu0
      %v372 = vadd.f32 0.0, %v371
      %373 = vmatmul.bf16.gmra.mxu0 %v352
      %v374 = vpop.f32.mrf.mxu0
      %v375 = vadd.f32 0.0, %v374
      %v376 = vpop.f32.mrf.mxu0
      %377 = vdwg.mxu0
      %v378 = vmul.f32 %v370, 0.35355338
      %v379 = vmul.f32 %v372, 0.35355338
      %v380 = vmul.f32 %v375, 0.35355338
      %v381 = vsel %vm268, %v378, -inf
      %382 = vmax.xlane.f32.xlu0 %v381
      %v383 = vpop.xlane.xlu0 %382
      %v384 = vsel %vm268, %v379, -inf
      %385 = vmax.xlane.f32.xlu0 %v384
      %v386 = vpop.xlane.xlu0 %385
      %v387 = vsel %vm275, %v380, -inf
      %388 = vmax.xlane.f32.xlu0 %v387
      %v389 = vpop.xlane.xlu0 %388
      %v390 = vsub.f32 %v378, %v383
      %v391 = vsub.f32 %v379, %v386
      %v392 = vsub.f32 %v380, %v389
      %v393 = vmul.f32 %v390, 1.442695
      %v394 = vpow.pop %v393
      %v395 = vmul.f32 %v391, 1.442695
      %v396 = vpow.pop %v395
      %v397 = vmul.f32 %v392, 1.442695
      %v398 = vpow.pop %v397
      %v399 = vsel %vm268, %v394, 0.0
      %400 = vadd.xlane.f32.xlu0 %v399
      %v401 = vpop.xlane.xlu0 %400
      %v402 = vsel %vm268, %v396, 0.0
      %403 = vadd.xlane.f32.xlu0 %v402
      %v404 = vpop.xlane.xlu0 %403
      %v405 = vsel %vm275, %v398, 0.0
      %406 = vadd.xlane.f32.xlu0 %v405
      %v407 = vpop.xlane.xlu0 %406
      %v408 = vpack.c.bf16 %v396, %v394
      %v409 = vpack.c.bf16 %v398, %v398
      %410 = vrot.lane.b32.xlu0 %v228, 56
      %v411 = vpop.permute.xlu0 %410
      %412 = vrot.lane.b32.xlu0 %v229, 56
      %v413 = vpop.permute.xlu0 %412
      %v416 = vsel %vm268, %v408, 0
      %v419 = vsel %vm268, %v409, 0
      %v422 = vand.u32 %v413, %v312
      %424 = vmatpush.bf16.msra.mxu0 0
      %425 = vmatpush.bf16.msra.mxu0 0
      %426 = vmatpush.bf16.msra.mxu0 0
      %427 = vmatpush.bf16.msra.mxu0 0
      %428 = vmatpush.bf16.msra.mxu0 0
      %429 = vmatpush.bf16.msra.mxu0 0
      %430 = vmatpush.bf16.msra.mxu0 %v422
      %431 = vmatpush.bf16.msra.mxu0 %v411
      %432 = vmatmul.bf16.gmra.mxu0 %v416
      %v433 = vpop.f32.mrf.mxu0
      %v434 = vadd.f32 0.0, %v433
      %v435 = vpop.f32.mrf.mxu0
      %v436 = vadd.f32 0.0, %v435
      %437 = vmatmul.bf16.gmra.mxu0 %v419
      %v438 = vpop.f32.mrf.mxu0
      %v439 = vadd.f32 0.0, %v438
      %v440 = vpop.f32.mrf.mxu0
      %441 = vdwg.mxu0
      %v442 = vrcp.pop %v401
      %v443 = vrcp.pop %v404
      %v444 = vrcp.pop %v407
      %v445 = vmul.f32 %v434, %v442
      %v446 = vmul.f32 %v436, %v443
      %v447 = vmul.f32 %v439, %v444
      %448 = vrot.lane.b32.xlu0 %v228, 112
      %v449 = vpop.permute.xlu0 %448
      %450 = vrot.lane.b32.xlu0 %v229, 112
      %v451 = vpop.permute.xlu0 %450
      %452 = vrot.lane.b32.xlu0 %v228, 80
      %v453 = vpop.permute.xlu0 %452
      %454 = vrot.lane.b32.xlu0 %v229, 80
      %v455 = vpop.permute.xlu0 %454
      %v457 = vsel %vm234, %v449, 0
      %v460 = vsel %vm234, %v451, 0
      %v463 = vsel %vm234, %v453, 0
      %v466 = vsel %vm234, %v455, 0
      %468 = vmatpush.bf16.xpose.msra.mxu0 0
      %469 = vmatpush.bf16.xpose.msra.mxu0 0
      %470 = vmatpush.bf16.xpose.msra.mxu0 0
      %471 = vmatpush.bf16.xpose.msra.mxu0 0
      %472 = vmatpush.bf16.xpose.msra.mxu0 0
      %473 = vmatpush.bf16.xpose.msra.mxu0 0
      %474 = vmatpush.bf16.xpose.msra.mxu0 %v466
      %475 = vmatpush.bf16.xpose.msra.mxu0 %v463
      %476 = vmatmul.bf16.gmra.mxu0 %v457
      %v477 = vpop.f32.mrf.mxu0
      %v478 = vadd.f32 0.0, %v477
      %v479 = vpop.f32.mrf.mxu0
      %v480 = vadd.f32 0.0, %v479
      %481 = vmatmul.bf16.gmra.mxu0 %v460
      %v482 = vpop.f32.mrf.mxu0
      %v483 = vadd.f32 0.0, %v482
      %v484 = vpop.f32.mrf.mxu0
      %485 = vdwg.mxu0
      %v486 = vmul.f32 %v478, 0.35355338
      %v487 = vmul.f32 %v480, 0.35355338
      %v488 = vmul.f32 %v483, 0.35355338
      %v489 = vsel %vm268, %v486, -inf
      %490 = vmax.xlane.f32.xlu0 %v489
      %v491 = vpop.xlane.xlu0 %490
      %v492 = vsel %vm268, %v487, -inf
      %493 = vmax.xlane.f32.xlu0 %v492
      %v494 = vpop.xlane.xlu0 %493
      %v495 = vsel %vm275, %v488, -inf
      %496 = vmax.xlane.f32.xlu0 %v495
      %v497 = vpop.xlane.xlu0 %496
      %v498 = vsub.f32 %v486, %v491
      %v499 = vsub.f32 %v487, %v494
      %v500 = vsub.f32 %v488, %v497
      %v501 = vmul.f32 %v498, 1.442695
      %v502 = vpow.pop %v501
      %v503 = vmul.f32 %v499, 1.442695
      %v504 = vpow.pop %v503
      %v505 = vmul.f32 %v500, 1.442695
      %v506 = vpow.pop %v505
      %v507 = vsel %vm268, %v502, 0.0
      %508 = vadd.xlane.f32.xlu0 %v507
      %v509 = vpop.xlane.xlu0 %508
      %v510 = vsel %vm268, %v504, 0.0
      %511 = vadd.xlane.f32.xlu0 %v510
      %v512 = vpop.xlane.xlu0 %511
      %v513 = vsel %vm275, %v506, 0.0
      %514 = vadd.xlane.f32.xlu0 %v513
      %v515 = vpop.xlane.xlu0 %514
      %v516 = vpack.c.bf16 %v504, %v502
      %v517 = vpack.c.bf16 %v506, %v506
      %518 = vrot.lane.b32.xlu0 %v228, 48
      %v519 = vpop.permute.xlu0 %518
      %520 = vrot.lane.b32.xlu0 %v229, 48
      %v521 = vpop.permute.xlu0 %520
      %v524 = vsel %vm268, %v516, 0
      %v527 = vsel %vm268, %v517, 0
      %v530 = vand.u32 %v521, %v312
      %532 = vmatpush.bf16.msra.mxu0 0
      %533 = vmatpush.bf16.msra.mxu0 0
      %534 = vmatpush.bf16.msra.mxu0 0
      %535 = vmatpush.bf16.msra.mxu0 0
      %536 = vmatpush.bf16.msra.mxu0 0
      %537 = vmatpush.bf16.msra.mxu0 0
      %538 = vmatpush.bf16.msra.mxu0 %v530
      %539 = vmatpush.bf16.msra.mxu0 %v519
      %540 = vmatmul.bf16.gmra.mxu0 %v524
      %v541 = vpop.f32.mrf.mxu0
      %v542 = vadd.f32 0.0, %v541
      %v543 = vpop.f32.mrf.mxu0
      %v544 = vadd.f32 0.0, %v543
      %545 = vmatmul.bf16.gmra.mxu0 %v527
      %v546 = vpop.f32.mrf.mxu0
      %v547 = vadd.f32 0.0, %v546
      %v548 = vpop.f32.mrf.mxu0
      %549 = vdwg.mxu0
      %v550 = vrcp.pop %v509
      %v551 = vrcp.pop %v512
      %v552 = vrcp.pop %v515
      %v553 = vmul.f32 %v542, %v550
      %v554 = vmul.f32 %v544, %v551
      %v555 = vmul.f32 %v547, %v552
      %556 = vrot.lane.b32.xlu0 %v228, 104
      %v557 = vpop.permute.xlu0 %556
      %558 = vrot.lane.b32.xlu0 %v229, 104
      %v559 = vpop.permute.xlu0 %558
      %560 = vrot.lane.b32.xlu0 %v228, 72
      %v561 = vpop.permute.xlu0 %560
      %562 = vrot.lane.b32.xlu0 %v229, 72
      %v563 = vpop.permute.xlu0 %562
      %v565 = vsel %vm234, %v557, 0
      %v568 = vsel %vm234, %v559, 0
      %v571 = vsel %vm234, %v561, 0
      %v574 = vsel %vm234, %v563, 0
      %576 = vmatpush.bf16.xpose.msra.mxu0 0
      %577 = vmatpush.bf16.xpose.msra.mxu0 0
      %578 = vmatpush.bf16.xpose.msra.mxu0 0
      %579 = vmatpush.bf16.xpose.msra.mxu0 0
      %580 = vmatpush.bf16.xpose.msra.mxu0 0
      %581 = vmatpush.bf16.xpose.msra.mxu0 0
      %582 = vmatpush.bf16.xpose.msra.mxu0 %v574
      %583 = vmatpush.bf16.xpose.msra.mxu0 %v571
      %584 = vmatmul.bf16.gmra.mxu0 %v565
      %v585 = vpop.f32.mrf.mxu0
      %v586 = vadd.f32 0.0, %v585
      %v587 = vpop.f32.mrf.mxu0
      %v588 = vadd.f32 0.0, %v587
      %589 = vmatmul.bf16.gmra.mxu0 %v568
      %v590 = vpop.f32.mrf.mxu0
      %v591 = vadd.f32 0.0, %v590
      %v592 = vpop.f32.mrf.mxu0
      %593 = vdwg.mxu0
      %v594 = vmul.f32 %v586, 0.35355338
      %v595 = vmul.f32 %v588, 0.35355338
      %v596 = vmul.f32 %v591, 0.35355338
      %v597 = vsel %vm268, %v594, -inf
      %598 = vmax.xlane.f32.xlu0 %v597
      %v599 = vpop.xlane.xlu0 %598
      %v600 = vsel %vm268, %v595, -inf
      %601 = vmax.xlane.f32.xlu0 %v600
      %v602 = vpop.xlane.xlu0 %601
      %v603 = vsel %vm275, %v596, -inf
      %604 = vmax.xlane.f32.xlu0 %v603
      %v605 = vpop.xlane.xlu0 %604
      %v606 = vsub.f32 %v594, %v599
      %v607 = vsub.f32 %v595, %v602
      %v608 = vsub.f32 %v596, %v605
      %v609 = vmul.f32 %v606, 1.442695
      %v610 = vpow.pop %v609
      %v611 = vmul.f32 %v607, 1.442695
      %v612 = vpow.pop %v611
      %v613 = vmul.f32 %v608, 1.442695
      %v614 = vpow.pop %v613
      %v615 = vsel %vm268, %v610, 0.0
      %616 = vadd.xlane.f32.xlu0 %v615
      %v617 = vpop.xlane.xlu0 %616
      %v618 = vsel %vm268, %v612, 0.0
      %619 = vadd.xlane.f32.xlu0 %v618
      %v620 = vpop.xlane.xlu0 %619
      %v621 = vsel %vm275, %v614, 0.0
      %622 = vadd.xlane.f32.xlu0 %v621
      %v623 = vpop.xlane.xlu0 %622
      %v624 = vpack.c.bf16 %v612, %v610
      %v625 = vpack.c.bf16 %v614, %v614
      %626 = vrot.lane.b32.xlu0 %v228, 40
      %v627 = vpop.permute.xlu0 %626
      %628 = vrot.lane.b32.xlu0 %v229, 40
      %v629 = vpop.permute.xlu0 %628
      %v632 = vsel %vm268, %v624, 0
      %v635 = vsel %vm268, %v625, 0
      %v638 = vand.u32 %v629, %v312
      %640 = vmatpush.bf16.msra.mxu0 0
      %641 = vmatpush.bf16.msra.mxu0 0
      %642 = vmatpush.bf16.msra.mxu0 0
      %643 = vmatpush.bf16.msra.mxu0 0
      %644 = vmatpush.bf16.msra.mxu0 0
      %645 = vmatpush.bf16.msra.mxu0 0
      %646 = vmatpush.bf16.msra.mxu0 %v638
      %647 = vmatpush.bf16.msra.mxu0 %v627
      %648 = vmatmul.bf16.gmra.mxu0 %v632
      %v649 = vpop.f32.mrf.mxu0
      %v650 = vadd.f32 0.0, %v649
      %v651 = vpop.f32.mrf.mxu0
      %v652 = vadd.f32 0.0, %v651
      %653 = vmatmul.bf16.gmra.mxu0 %v635
      %v654 = vpop.f32.mrf.mxu0
      %v655 = vadd.f32 0.0, %v654
      %v656 = vpop.f32.mrf.mxu0
      %657 = vdwg.mxu0
      %v658 = vrcp.pop %v617
      %v659 = vrcp.pop %v620
      %v660 = vrcp.pop %v623
      %v661 = vmul.f32 %v650, %v658
      %v662 = vmul.f32 %v652, %v659
      %v663 = vmul.f32 %v655, %v660
      %667 = vrot.lane.b32.xlu0 %v445, 8
      %v668 = vpop.permute.xlu0 %667
      %669 = vrot.lane.b32.xlu0 %v446, 8
      %v670 = vpop.permute.xlu0 %669
      %671 = vrot.lane.b32.xlu0 %v447, 8
      %v672 = vpop.permute.xlu0 %671
      %679 = vrot.lane.b32.xlu0 %v553, 16
      %v680 = vpop.permute.xlu0 %679
      %681 = vrot.lane.b32.xlu0 %v554, 16
      %v682 = vpop.permute.xlu0 %681
      %683 = vrot.lane.b32.xlu0 %v555, 16
      %v684 = vpop.permute.xlu0 %683
      %691 = vrot.lane.b32.xlu0 %v661, 24
      %v692 = vpop.permute.xlu0 %691
      %693 = vrot.lane.b32.xlu0 %v662, 24
      %v694 = vpop.permute.xlu0 %693
      %695 = vrot.lane.b32.xlu0 %v663, 24
      %v696 = vpop.permute.xlu0 %695
      %v700 = vsel %vm234, %v337, %v668
      %v701 = vsel %vm234, %v338, %v670
      %v702 = vsel %vm234, %v339, %v672
      %vm703 = vcmask 130048
      %v704 = vsel %vm703, %v700, %v680
      %v705 = vsel %vm703, %v701, %v682
      %v706 = vsel %vm703, %v702, %v684
      %vm707 = vcmask 195584
      %v708 = vsel %vm707, %v704, %v692
      %v709 = vsel %vm707, %v705, %v694
      %v710 = vsel %vm707, %v706, %v696
      %v711 = vpack.c.bf16 %v709, %v708
      %v712 = vpack.c.bf16 %v710, %v710
      %v713 = vld [vmem:[%s2] sm:$0xf]
      %v714 = vld [vmem:[%s2 + $0x4] sm:$0xf]
      %v715 = vld [vmem:[%s2 + $0x8] sm:$0xf]
      %v716 = vld [vmem:[%s2 + $0xc] sm:$0xf]
      %v717 = vld [vmem:[%s3] sm:$0x1]
      %v719 = vperm.slane %v717, 0
      %v725 = vunpack.c.l.b16 %v713
      %v726 = vunpack.c.l.b16 %v714
      %v727 = vunpack.c.l.b16 %v715
      %v728 = vunpack.c.l.b16 %v716
      %v729 = vpack.c.b16 %v726, %v725
      %v730 = vpack.c.b16 %v728, %v727
      %vm733 = vcmask 261120
      %v735 = vsel %vm733, %v711, 0
      %v738 = vsel %vm733, %v712, 0
      %740 = vmatpush.bf16.msra.mxu0 0
      %741 = vmatpush.bf16.msra.mxu0 0
      %742 = vmatpush.bf16.msra.mxu0 0
      %743 = vmatpush.bf16.msra.mxu0 0
      %744 = vmatpush.bf16.msra.mxu0 0
      %745 = vmatpush.bf16.msra.mxu0 0
      %746 = vmatpush.bf16.msra.mxu0 %v730
      %747 = vmatpush.bf16.msra.mxu0 %v729
      %748 = vmatmul.bf16.gmra.mxu0 %v735
      %v749 = vpop.f32.mrf.mxu0
      %v750 = vadd.f32 %v719, %v749
      %v751 = vpop.f32.mrf.mxu0
      %v752 = vadd.f32 %v719, %v751
      %753 = vmatmul.bf16.gmra.mxu0 %v738
      %v754 = vpop.f32.mrf.mxu0
      %v755 = vadd.f32 %v719, %v754
      %v756 = vpop.f32.mrf.mxu0
      %757 = vdwg.mxu0
      %v758 = vld [vmem:[%s212] sm:$0xf]
      %v759 = vld [vmem:[%s212 + $0x4] sm:$0xf]
      %v760 = vld [vmem:[%s212 + $0x8] sm:$0x1]
      %v761 = vunpack.c.l.bf16 %v758
      %v762 = vunpack.c.l.bf16 %v759
      %v763 = vunpack.c.l.bf16 %v760
      %v764 = vadd.f32 %v750, %v761
      %v765 = vadd.f32 %v752, %v762
      %v766 = vadd.f32 %v755, %v763
      %v767 = vpack.c.bf16 %v764, %v764
      %v768 = vpack.c.bf16 %v765, %v765
      %v769 = vpack.c.bf16 %v766, %v766
      %vm770 = vcmask 257024
      %771 = vst.msk [vmem:[%s217] sm:$0xf] %vm770, %v767
      %772 = vst.msk [vmem:[%s217 + $0x4] sm:$0xf] %vm770, %v768
      %vm773 = vcmask 253952
      %vm774 = vsmask.f32 256
      %vm775 = vmand %vm773, %vm774
      %v776 = vld [vmem:[%s217 + $0x8] sm:$0x1]
      %v777 = vsel %vm775, %v769, %v776
      %778 = vst [vmem:[%s217 + $0x8] sm:$0x1] %v777
      %p779 = scmp.lt.s32.totalorder %s15, 1
      %s780 = scalar_select %p779, %s15, 1
      %s781 = smul.addr %s780, 3
      %s782 = smul.addr %s781, 4
      %s783 = scalar_lea.vmem %s4, %s782
      // Predicated region
      $region37: #{_lambda_.12} parent=35 // pred_check
        %p784 = pneg %p127
      $region38: #{_lambda_.12} parent=35 // pred_check_branch
        %786 = sbr.rel (%p784) target = $region40
      $region39: #{_lambda_.12} parent=35 // pred_region
        _
      $region40: #{_lambda_.12} parent=35 // pred_fallthru
        _
    $region36: #{_lambda_.12} parent=5 // pred_fallthru
      _
    %p787 = scmp.le.s32.totalorder 2, %s10
    // Predicated region
    $region41: #{_lambda_.12} parent=5 // pred_check
      %p788 = pneg %p787
    $region42: #{_lambda_.12} parent=5 // pred_check_branch
      %790 = sbr.rel (%p788) target = $region44
    $region43: #{_lambda_.12} parent=5 // pred_region
      %s791 = ssub.s32 %s10, 2
      // Predicated region
      $region45: #{_lambda_.12} parent=43 // pred_check
        %p792 = pneg %p133
      $region46: #{_lambda_.12} parent=43 // pred_check_branch
        %794 = sbr.rel (%p792) target = $region48
      $region47: #{_lambda_.12} parent=43 // pred_region
        %p795 = scmp.lt.s32.totalorder %s16, 1
        %s796 = scalar_select %p795, %s16, 1
        %s797 = smul.addr %s796, 3
        %s798 = smul.addr %s797, 4
        %s799 = scalar_lea.vmem %s4, %s798
      $region48: #{_lambda_.12} parent=43 // pred_fallthru
        _
    $region44: #{_lambda_.12} parent=5 // pred_fallthru
      _
  $region6: #{_lambda_.12} parent=0 // loop_footer
    %s14 = sadd.s32 1, %s10
  $region7: #{_lambda_.12} parent=0 // loop_footer_branch
    %9 = sbr.rel target = $region3
  $region8: #{_lambda_.12} parent=0 // loop_exit
    _

// kernel: _lambda_.13
$region0: #{_lambda_.13}
  #allocation0 [shape = 'u32[]', space=smem, size = 0x4, offset = 0x4, fixed_abs, tag = 'smem constant byte address 0x4 - core index']
  #allocation1 [shape = 'u32[72,128]{1,0:T(1,128)}', space=vmem, size = 0x9000, scoped, tag = 'internal scratch']
  #allocation2 [shape = 'f32[48,128]{1,0:T(8,128)}', space=vmem, size = 0x6000, scoped, tag = 'scratch operand']
  %s0 = inlined_call_operand.vmem [shape: bf16[48,32], index: 0, kind: input, shape index: {}]
  %s1 = inlined_call_operand.vmem [shape: bf16[32,128], index: 1, kind: input, shape index: {}]
  %s2 = inlined_call_operand.vmem [shape: f32[1,128], index: 2, kind: input, shape index: {}]
  %s3 = inlined_call_operand.vmem [shape: f32[1,32], index: 3, kind: input, shape index: {}]
  %s4 = inlined_call_operand.vmem [shape: f32[1,32], index: 4, kind: input, shape index: {}]
  %s5 = inlined_call_operand.vmem [shape: bf16[48,128], index: 5, kind: output, shape index: {}]
  %s6 = sld [smem:[#allocation0]]
  $region38: #{_lambda_.13} parent=0
    _
  %s8 = ssub.s32 1, %s6
  %s9 = scalar_select 0, %s8, %s6
  // Predicated region
  $region2: #{_lambda_.13} parent=0 // pred_check
    _
  $region3: #{_lambda_.13} parent=0 // pred_check_branch
    %11 = sbr.rel (0) target = $region5
  $region4: #{_lambda_.13} parent=0 // pred_region
    _
  $region5: #{_lambda_.13} parent=0 // pred_fallthru
    _
  // Predicated region
  $region6: #{_lambda_.13} parent=0 // pred_check
    _
  $region7: #{_lambda_.13} parent=0 // pred_check_branch
    %13 = sbr.rel (0) target = $region9
  $region8: #{_lambda_.13} parent=0 // pred_region
    _
  $region9: #{_lambda_.13} parent=0 // pred_fallthru
    _
  // Predicated region
  $region10: #{_lambda_.13} parent=0 // pred_check
    _
  $region11: #{_lambda_.13} parent=0 // pred_check_branch
    %15 = sbr.rel (0) target = $region13
  $region12: #{_lambda_.13} parent=0 // pred_region
    _
  $region13: #{_lambda_.13} parent=0 // pred_fallthru
    _
  // Predicated region
  $region14: #{_lambda_.13} parent=0 // pred_check
    _
  $region15: #{_lambda_.13} parent=0 // pred_check_branch
    %17 = sbr.rel (0) target = $region17
  $region16: #{_lambda_.13} parent=0 // pred_region
    _
  $region17: #{_lambda_.13} parent=0 // pred_fallthru
    _
  // Predicated region
  $region18: #{_lambda_.13} parent=0 // pred_check
    _
  $region19: #{_lambda_.13} parent=0 // pred_check_branch
    %19 = sbr.rel (0) target = $region21
  $region20: #{_lambda_.13} parent=0 // pred_region
    _
  $region21: #{_lambda_.13} parent=0 // pred_fallthru
    _
  %p21 = scmp.eq.s32.totalorder 0, 0
  // Predicated region
  $region22: #{_lambda_.13} parent=0 // pred_check
    %p22 = pneg %p21
  $region23: #{_lambda_.13} parent=0 // pred_check_branch
    %24 = sbr.rel (%p22) target = $region25
  $region24: #{_lambda_.13} parent=0 // pred_region
    %25 = vst [vmem:[#allocation2] sm:$0xff] 0.0
    %26 = vst [vmem:[#allocation2 + $0x8] sm:$0xff] 0.0
    %27 = vst [vmem:[#allocation2 + $0x10] sm:$0xff] 0.0
    %28 = vst [vmem:[#allocation2 + $0x18] sm:$0xff] 0.0
    %29 = vst [vmem:[#allocation2 + $0x20] sm:$0xff] 0.0
    %30 = vst [vmem:[#allocation2 + $0x28] sm:$0xff] 0.0
  $region25: #{_lambda_.13} parent=0 // pred_fallthru
    _
  %v31 = vld [vmem:[%s0] sm:$0xf]
  %v32 = vld [vmem:[%s0 + $0x4] sm:$0xf]
  %v33 = vld [vmem:[%s0 + $0x8] sm:$0xf]
  %v34 = vld [vmem:[%s0 + $0xc] sm:$0xf]
  %v35 = vld [vmem:[%s0 + $0x10] sm:$0xf]
  %v36 = vld [vmem:[%s0 + $0x14] sm:$0xf]
  %v37 = vunpack.c.l.bf16 %v31
  %v38 = vunpack.c.l.bf16 %v32
  %v39 = vunpack.c.l.bf16 %v33
  %v40 = vunpack.c.l.bf16 %v34
  %v41 = vunpack.c.l.bf16 %v35
  %v42 = vunpack.c.l.bf16 %v36
  %vm43 = vcmask 261120
  %v44 = vsel %vm43, %v37, 0.0
  %45 = vadd.xlane.f32.xlu0 %v44
  %v46 = vpop.xlane.xlu0 %45
  %v47 = vsel %vm43, %v38, 0.0
  %48 = vadd.xlane.f32.xlu0 %v47
  %v49 = vpop.xlane.xlu0 %48
  %v50 = vsel %vm43, %v39, 0.0
  %51 = vadd.xlane.f32.xlu0 %v50
  %v52 = vpop.xlane.xlu0 %51
  %v53 = vsel %vm43, %v40, 0.0
  %54 = vadd.xlane.f32.xlu0 %v53
  %v55 = vpop.xlane.xlu0 %54
  %v56 = vsel %vm43, %v41, 0.0
  %57 = vadd.xlane.f32.xlu0 %v56
  %v58 = vpop.xlane.xlu0 %57
  %v59 = vsel %vm43, %v42, 0.0
  %60 = vadd.xlane.f32.xlu0 %v59
  %v61 = vpop.xlane.xlu0 %60
  %v62 = vrcp.pop 32.0
  %v63 = vmul.f32 32.0, %v62
  %v64 = vsub.f32 1.0, %v63
  %v65 = vmul.f32 %v62, %v64
  %v66 = vadd.f32 %v62, %v65
  %vm67 = vweird.f32 %v62
  %v68 = vsel %vm67, %v62, %v66
  %v69 = vmul.f32 %v46, %v68
  %v70 = vmul.f32 %v49, %v68
  %v71 = vmul.f32 %v52, %v68
  %v72 = vmul.f32 %v55, %v68
  %v73 = vmul.f32 %v58, %v68
  %v74 = vmul.f32 %v61, %v68
  %v75 = vsub.f32 %v37, %v69
  %v76 = vsub.f32 %v38, %v70
  %v77 = vsub.f32 %v39, %v71
  %v78 = vsub.f32 %v40, %v72
  %v79 = vsub.f32 %v41, %v73
  %v80 = vsub.f32 %v42, %v74
  %v81 = vmul.f32 %v75, %v75
  %v82 = vmul.f32 %v76, %v76
  %v83 = vmul.f32 %v77, %v77
  %v84 = vmul.f32 %v78, %v78
  %v85 = vmul.f32 %v79, %v79
  %v86 = vmul.f32 %v80, %v80
  %v87 = vsel %vm43, %v81, 0.0
  %88 = vadd.xlane.f32.xlu0 %v87
  %v89 = vpop.xlane.xlu0 %88
  %v90 = vsel %vm43, %v82, 0.0
  %91 = vadd.xlane.f32.xlu0 %v90
  %v92 = vpop.xlane.xlu0 %91
  %v93 = vsel %vm43, %v83, 0.0
  %94 = vadd.xlane.f32.xlu0 %v93
  %v95 = vpop.xlane.xlu0 %94
  %v96 = vsel %vm43, %v84, 0.0
  %97 = vadd.xlane.f32.xlu0 %v96
  %v98 = vpop.xlane.xlu0 %97
  %v99 = vsel %vm43, %v85, 0.0
  %100 = vadd.xlane.f32.xlu0 %v99
  %v101 = vpop.xlane.xlu0 %100
  %v102 = vsel %vm43, %v86, 0.0
  %103 = vadd.xlane.f32.xlu0 %v102
  %v104 = vpop.xlane.xlu0 %103
  %v105 = vmul.f32 %v89, %v68
  %v106 = vmul.f32 %v92, %v68
  %v107 = vmul.f32 %v95, %v68
  %v108 = vmul.f32 %v98, %v68
  %v109 = vmul.f32 %v101, %v68
  %v110 = vmul.f32 %v104, %v68
  %v111 = vadd.f32 %v105, 1e-06
  %v112 = vadd.f32 %v106, 1e-06
  %v113 = vadd.f32 %v107, 1e-06
  %v114 = vadd.f32 %v108, 1e-06
  %v115 = vadd.f32 %v109, 1e-06
  %v116 = vadd.f32 %v110, 1e-06
  %v117 = vrsqrt.pop %v111
  %v118 = vmul.f32 %v117, %v111
  %v119 = vmul.f32 %v118, %v117
  %v120 = vmul.f32 0.5, %v119
  %v121 = vsub.f32 1.5, %v120
  %v122 = vmul.f32 %v117, %v121
  %vm123 = vweird.f32 %v111
  %vm124 = vweird.f32 %v117
  %vm125 = vmor %vm123, %vm124
  %v126 = vsel %vm125, %v117, %v122
  %v127 = vrsqrt.pop %v112
  %v128 = vmul.f32 %v127, %v112
  %v129 = vmul.f32 %v128, %v127
  %v130 = vmul.f32 0.5, %v129
  %v131 = vsub.f32 1.5, %v130
  %v132 = vmul.f32 %v127, %v131
  %vm133 = vweird.f32 %v112
  %vm134 = vweird.f32 %v127
  %vm135 = vmor %vm133, %vm134
  %v136 = vsel %vm135, %v127, %v132
  %v137 = vrsqrt.pop %v113
  %v138 = vmul.f32 %v137, %v113
  %v139 = vmul.f32 %v138, %v137
  %v140 = vmul.f32 0.5, %v139
  %v141 = vsub.f32 1.5, %v140
  %v142 = vmul.f32 %v137, %v141
  %vm143 = vweird.f32 %v113
  %vm144 = vweird.f32 %v137
  %vm145 = vmor %vm143, %vm144
  %v146 = vsel %vm145, %v137, %v142
  %v147 = vrsqrt.pop %v114
  %v148 = vmul.f32 %v147, %v114
  %v149 = vmul.f32 %v148, %v147
  %v150 = vmul.f32 0.5, %v149
  %v151 = vsub.f32 1.5, %v150
  %v152 = vmul.f32 %v147, %v151
  %vm153 = vweird.f32 %v114
  %vm154 = vweird.f32 %v147
  %vm155 = vmor %vm153, %vm154
  %v156 = vsel %vm155, %v147, %v152
  %v157 = vrsqrt.pop %v115
  %v158 = vmul.f32 %v157, %v115
  %v159 = vmul.f32 %v158, %v157
  %v160 = vmul.f32 0.5, %v159
  %v161 = vsub.f32 1.5, %v160
  %v162 = vmul.f32 %v157, %v161
  %vm163 = vweird.f32 %v115
  %vm164 = vweird.f32 %v157
  %vm165 = vmor %vm163, %vm164
  %v166 = vsel %vm165, %v157, %v162
  %v167 = vrsqrt.pop %v116
  %v168 = vmul.f32 %v167, %v116
  %v169 = vmul.f32 %v168, %v167
  %v170 = vmul.f32 0.5, %v169
  %v171 = vsub.f32 1.5, %v170
  %v172 = vmul.f32 %v167, %v171
  %vm173 = vweird.f32 %v116
  %vm174 = vweird.f32 %v167
  %vm175 = vmor %vm173, %vm174
  %v176 = vsel %vm175, %v167, %v172
  %v177 = vmul.f32 %v75, %v126
  %v178 = vmul.f32 %v76, %v136
  %v179 = vmul.f32 %v77, %v146
  %v180 = vmul.f32 %v78, %v156
  %v181 = vmul.f32 %v79, %v166
  %v182 = vmul.f32 %v80, %v176
  %v183 = vld [vmem:[%s3] sm:$0x1]
  %v185 = vperm.slane %v183, 0
  %v187 = vmul.f32 %v177, %v185
  %v188 = vmul.f32 %v178, %v185
  %v189 = vmul.f32 %v179, %v185
  %v190 = vmul.f32 %v180, %v185
  %v191 = vmul.f32 %v181, %v185
  %v192 = vmul.f32 %v182, %v185
  %v193 = vld [vmem:[%s4] sm:$0x1]
  %v195 = vperm.slane %v193, 0
  %v197 = vadd.f32 %v187, %v195
  %v198 = vadd.f32 %v188, %v195
  %v199 = vadd.f32 %v189, %v195
  %v200 = vadd.f32 %v190, %v195
  %v201 = vadd.f32 %v191, %v195
  %v202 = vadd.f32 %v192, %v195
  %v203 = vpack.c.bf16 %v198, %v197
  %v204 = vpack.c.bf16 %v200, %v199
  %v205 = vpack.c.bf16 %v202, %v201
  %v206 = vld [vmem:[#allocation2] sm:$0xff]
  %v207 = vld [vmem:[#allocation2 + $0x8] sm:$0xff]
  %v208 = vld [vmem:[#allocation2 + $0x10] sm:$0xff]
  %v209 = vld [vmem:[#allocation2 + $0x18] sm:$0xff]
  %v210 = vld [vmem:[#allocation2 + $0x20] sm:$0xff]
  %v211 = vld [vmem:[#allocation2 + $0x28] sm:$0xff]
  %v212 = vld [vmem:[%s1] sm:$0xf]
  %v213 = vld [vmem:[%s1 + $0x4] sm:$0xf]
  %v214 = vld [vmem:[%s1 + $0x8] sm:$0xf]
  %v215 = vld [vmem:[%s1 + $0xc] sm:$0xf]
  %v220 = vunpack.c.l.b16 %v212
  %v221 = vunpack.c.l.b16 %v213
  %v222 = vunpack.c.l.b16 %v214
  %v223 = vunpack.c.l.b16 %v215
  %v224 = vpack.c.b16 %v221, %v220
  %v225 = vpack.c.b16 %v223, %v222
  %v229 = vsel %vm43, %v203, 0
  %v232 = vsel %vm43, %v204, 0
  %v235 = vsel %vm43, %v205, 0
  %237 = vmatpush.bf16.msra.mxu0 0
  %238 = vmatpush.bf16.msra.mxu0 0
  %239 = vmatpush.bf16.msra.mxu0 0
  %240 = vmatpush.bf16.msra.mxu0 0
  %241 = vmatpush.bf16.msra.mxu0 0
  %242 = vmatpush.bf16.msra.mxu0 0
  %243 = vmatpush.bf16.msra.mxu0 %v225
  %244 = vmatpush.bf16.msra.mxu0 %v224
  %245 = vmatmul.bf16.gmra.mxu0 %v229
  %v246 = vpop.f32.mrf.mxu0
  %v247 = vadd.f32 0.0, %v246
  %v248 = vpop.f32.mrf.mxu0
  %v249 = vadd.f32 0.0, %v248
  %250 = vmatmul.bf16.gmra.mxu0 %v232
  %v251 = vpop.f32.mrf.mxu0
  %v252 = vadd.f32 0.0, %v251
  %v253 = vpop.f32.mrf.mxu0
  %v254 = vadd.f32 0.0, %v253
  %255 = vmatmul.bf16.gmra.mxu0 %v235
  %v256 = vpop.f32.mrf.mxu0
  %v257 = vadd.f32 0.0, %v256
  %v258 = vpop.f32.mrf.mxu0
  %v259 = vadd.f32 0.0, %v258
  %260 = vdwg.mxu0
  %v261 = vadd.f32 %v206, %v247
  %v262 = vadd.f32 %v207, %v249
  %v263 = vadd.f32 %v208, %v252
  %v264 = vadd.f32 %v209, %v254
  %v265 = vadd.f32 %v210, %v257
  %v266 = vadd.f32 %v211, %v259
  %267 = vst [vmem:[#allocation2] sm:$0xff] %v261
  %268 = vst [vmem:[#allocation2 + $0x8] sm:$0xff] %v262
  %269 = vst [vmem:[#allocation2 + $0x10] sm:$0xff] %v263
  %270 = vst [vmem:[#allocation2 + $0x18] sm:$0xff] %v264
  %271 = vst [vmem:[#allocation2 + $0x20] sm:$0xff] %v265
  %272 = vst [vmem:[#allocation2 + $0x28] sm:$0xff] %v266
  // Predicated region
  $region26: #{_lambda_.13} parent=0 // pred_check
    %p273 = pneg %p21
  $region27: #{_lambda_.13} parent=0 // pred_check_branch
    %275 = sbr.rel (%p273) target = $region29
  $region28: #{_lambda_.13} parent=0 // pred_region
    %v276 = vld [vmem:[#allocation2] sm:$0xff]
    %v277 = vld [vmem:[#allocation2 + $0x8] sm:$0xff]
    %v278 = vld [vmem:[#allocation2 + $0x10] sm:$0xff]
    %v279 = vld [vmem:[#allocation2 + $0x18] sm:$0xff]
    %v280 = vld [vmem:[#allocation2 + $0x20] sm:$0xff]
    %v281 = vld [vmem:[#allocation2 + $0x28] sm:$0xff]
    %v282 = vld [vmem:[%s2] sm:$0x1]
    %v284 = vperm.slane %v282, 0
    %v286 = vadd.f32 %v276, %v284
    %v287 = vadd.f32 %v277, %v284
    %v288 = vadd.f32 %v278, %v284
    %v289 = vadd.f32 %v279, %v284
    %v290 = vadd.f32 %v280, %v284
    %v291 = vadd.f32 %v281, %v284
    %v292 = vmul.f32 %v286, 0.5
    %v293 = vmul.f32 %v287, 0.5
    %v294 = vmul.f32 %v288, 0.5
    %v295 = vmul.f32 %v289, 0.5
    %v296 = vmul.f32 %v290, 0.5
    %v297 = vmul.f32 %v291, 0.5
    %v298 = vmul.f32 %v286, 0.70710677
    %v299 = vmul.f32 %v287, 0.70710677
    %v300 = vmul.f32 %v288, 0.70710677
    %v301 = vmul.f32 %v289, 0.70710677
    %v302 = vmul.f32 %v290, 0.70710677
    %v303 = vmul.f32 %v291, 0.70710677
    %v304 = vmul.f32 %v298, %v298
    %v305 = vmin.f32 16.0, %v304
    %v306 = vmul.f32 %v305, 2.1237322e-06
    %v307 = vadd.f32 %v306, 0.00028619796
    %v308 = vmul.f32 %v305, %v307
    %v309 = vadd.f32 %v308, 0.0036580483
    %v310 = vmul.f32 %v305, %v309
    %v311 = vadd.f32 %v310, 0.05243302
    %v312 = vmul.f32 %v305, %v311
    %v313 = vadd.f32 %v312, 0.18741608
    %v314 = vmul.f32 %v305, %v313
    %v315 = vadd.f32 %v314, 1.1283791
    %v316 = vmul.f32 %v298, %v315
    %v317 = vmul.f32 %v305, 3.8918573e-05
    %v318 = vadd.f32 %v317, 0.001143296
    %v319 = vmul.f32 %v305, %v318
    %v320 = vadd.f32 %v319, 0.014752088
    %v321 = vmul.f32 %v305, %v320
    %v322 = vadd.f32 %v321, 0.112945676
    %v323 = vmul.f32 %v305, %v322
    %v324 = vadd.f32 %v323, 0.4994258
    %v325 = vmul.f32 %v305, %v324
    %v326 = vadd.f32 %v325, 1.0
    %v327 = vrcp.pop %v326
    %v328 = vmul.f32 %v326, %v327
    %v329 = vsub.f32 1.0, %v328
    %v330 = vmul.f32 %v327, %v329
    %v331 = vadd.f32 %v327, %v330
    %vm332 = vweird.f32 %v326
    %vm333 = vweird.f32 %v327
    %vm334 = vmor %vm332, %vm333
    %v335 = vsel %vm334, %v327, %v331
    %v336 = vand.u32 2147483647, %v326
    %vm337 = vcmp.eq.f32.partialorder %v336, 8.507059e+37
    %v338 = vand.u32 %v326, 2147483648
    %v339 = vor.u32 1.1754944e-38, %v338
    %v340 = vsel %vm337, %v339, %v335
    %v341 = vmul.f32 %v316, %v340
    %v342 = vmin.f32 %v341, 1.0
    %v343 = vmax.f32 %v342, -1.0
    %v344 = vmul.f32 %v299, %v299
    %v345 = vmin.f32 16.0, %v344
    %v346 = vmul.f32 %v345, 2.1237322e-06
    %v347 = vadd.f32 %v346, 0.00028619796
    %v348 = vmul.f32 %v345, %v347
    %v349 = vadd.f32 %v348, 0.0036580483
    %v350 = vmul.f32 %v345, %v349
    %v351 = vadd.f32 %v350, 0.05243302
    %v352 = vmul.f32 %v345, %v351
    %v353 = vadd.f32 %v352, 0.18741608
    %v354 = vmul.f32 %v345, %v353
    %v355 = vadd.f32 %v354, 1.1283791
    %v356 = vmul.f32 %v299, %v355
    %v357 = vmul.f32 %v345, 3.8918573e-05
    %v358 = vadd.f32 %v357, 0.001143296
    %v359 = vmul.f32 %v345, %v358
    %v360 = vadd.f32 %v359, 0.014752088
    %v361 = vmul.f32 %v345, %v360
    %v362 = vadd.f32 %v361, 0.112945676
    %v363 = vmul.f32 %v345, %v362
    %v364 = vadd.f32 %v363, 0.4994258
    %v365 = vmul.f32 %v345, %v364
    %v366 = vadd.f32 %v365, 1.0
    %v367 = vrcp.pop %v366
    %v368 = vmul.f32 %v366, %v367
    %v369 = vsub.f32 1.0, %v368
    %v370 = vmul.f32 %v367, %v369
    %v371 = vadd.f32 %v367, %v370
    %vm372 = vweird.f32 %v366
    %vm373 = vweird.f32 %v367
    %vm374 = vmor %vm372, %vm373
    %v375 = vsel %vm374, %v367, %v371
    %v376 = vand.u32 2147483647, %v366
    %vm377 = vcmp.eq.f32.partialorder %v376, 8.507059e+37
    %v378 = vand.u32 %v366, 2147483648
    %v379 = vor.u32 1.1754944e-38, %v378
    %v380 = vsel %vm377, %v379, %v375
    %v381 = vmul.f32 %v356, %v380
    %v382 = vmin.f32 %v381, 1.0
    %v383 = vmax.f32 %v382, -1.0
    %v384 = vmul.f32 %v300, %v300
    %v385 = vmin.f32 16.0, %v384
    %v386 = vmul.f32 %v385, 2.1237322e-06
    %v387 = vadd.f32 %v386, 0.00028619796
    %v388 = vmul.f32 %v385, %v387
    %v389 = vadd.f32 %v388, 0.0036580483
    %v390 = vmul.f32 %v385, %v389
    %v391 = vadd.f32 %v390, 0.05243302
    %v392 = vmul.f32 %v385, %v391
    %v393 = vadd.f32 %v392, 0.18741608
    %v394 = vmul.f32 %v385, %v393
    %v395 = vadd.f32 %v394, 1.1283791
    %v396 = vmul.f32 %v300, %v395
    %v397 = vmul.f32 %v385, 3.8918573e-05
    %v398 = vadd.f32 %v397, 0.001143296
    %v399 = vmul.f32 %v385, %v398
    %v400 = vadd.f32 %v399, 0.014752088
    %v401 = vmul.f32 %v385, %v400
    %v402 = vadd.f32 %v401, 0.112945676
    %v403 = vmul.f32 %v385, %v402
    %v404 = vadd.f32 %v403, 0.4994258
    %v405 = vmul.f32 %v385, %v404
    %v406 = vadd.f32 %v405, 1.0
    %v407 = vrcp.pop %v406
    %v408 = vmul.f32 %v406, %v407
    %v409 = vsub.f32 1.0, %v408
    %v410 = vmul.f32 %v407, %v409
    %v411 = vadd.f32 %v407, %v410
    %vm412 = vweird.f32 %v406
    %vm413 = vweird.f32 %v407
    %vm414 = vmor %vm412, %vm413
    %v415 = vsel %vm414, %v407, %v411
    %v416 = vand.u32 2147483647, %v406
    %vm417 = vcmp.eq.f32.partialorder %v416, 8.507059e+37
    %v418 = vand.u32 %v406, 2147483648
    %v419 = vor.u32 1.1754944e-38, %v418
    %v420 = vsel %vm417, %v419, %v415
    %v421 = vmul.f32 %v396, %v420
    %v422 = vmin.f32 %v421, 1.0
    %v423 = vmax.f32 %v422, -1.0
    %v424 = vmul.f32 %v301, %v301
    %v425 = vmin.f32 16.0, %v424
    %v426 = vmul.f32 %v425, 2.1237322e-06
    %v427 = vadd.f32 %v426, 0.00028619796
    %v428 = vmul.f32 %v425, %v427
    %v429 = vadd.f32 %v428, 0.0036580483
    %v430 = vmul.f32 %v425, %v429
    %v431 = vadd.f32 %v430, 0.05243302
    %v432 = vmul.f32 %v425, %v431
    %v433 = vadd.f32 %v432, 0.18741608
    %v434 = vmul.f32 %v425, %v433
    %v435 = vadd.f32 %v434, 1.1283791
    %v436 = vmul.f32 %v301, %v435
    %v437 = vmul.f32 %v425, 3.8918573e-05
    %v438 = vadd.f32 %v437, 0.001143296
    %v439 = vmul.f32 %v425, %v438
    %v440 = vadd.f32 %v439, 0.014752088
    %v441 = vmul.f32 %v425, %v440
    %v442 = vadd.f32 %v441, 0.112945676
    %v443 = vmul.f32 %v425, %v442
    %v444 = vadd.f32 %v443, 0.4994258
    %v445 = vmul.f32 %v425, %v444
    %v446 = vadd.f32 %v445, 1.0
    %v447 = vrcp.pop %v446
    %v448 = vmul.f32 %v446, %v447
    %v449 = vsub.f32 1.0, %v448
    %v450 = vmul.f32 %v447, %v449
    %v451 = vadd.f32 %v447, %v450
    %vm452 = vweird.f32 %v446
    %vm453 = vweird.f32 %v447
    %vm454 = vmor %vm452, %vm453
    %v455 = vsel %vm454, %v447, %v451
    %v456 = vand.u32 2147483647, %v446
    %vm457 = vcmp.eq.f32.partialorder %v456, 8.507059e+37
    %v458 = vand.u32 %v446, 2147483648
    %v459 = vor.u32 1.1754944e-38, %v458
    %v460 = vsel %vm457, %v459, %v455
    %v461 = vmul.f32 %v436, %v460
    %v462 = vmin.f32 %v461, 1.0
    %v463 = vmax.f32 %v462, -1.0
    %v464 = vmul.f32 %v302, %v302
    %v465 = vmin.f32 16.0, %v464
    %v466 = vmul.f32 %v465, 2.1237322e-06
    %v467 = vadd.f32 %v466, 0.00028619796
    %v468 = vmul.f32 %v465, %v467
    %v469 = vadd.f32 %v468, 0.0036580483
    %v470 = vmul.f32 %v465, %v469
    %v471 = vadd.f32 %v470, 0.05243302
    %v472 = vmul.f32 %v465, %v471
    %v473 = vadd.f32 %v472, 0.18741608
    %v474 = vmul.f32 %v465, %v473
    %v475 = vadd.f32 %v474, 1.1283791
    %v476 = vmul.f32 %v302, %v475
    %v477 = vmul.f32 %v465, 3.8918573e-05
    %v478 = vadd.f32 %v477, 0.001143296
    %v479 = vmul.f32 %v465, %v478
    %v480 = vadd.f32 %v479, 0.014752088
    %v481 = vmul.f32 %v465, %v480
    %v482 = vadd.f32 %v481, 0.112945676
    %v483 = vmul.f32 %v465, %v482
    %v484 = vadd.f32 %v483, 0.4994258
    %v485 = vmul.f32 %v465, %v484
    %v486 = vadd.f32 %v485, 1.0
    %v487 = vrcp.pop %v486
    %v488 = vmul.f32 %v486, %v487
    %v489 = vsub.f32 1.0, %v488
    %v490 = vmul.f32 %v487, %v489
    %v491 = vadd.f32 %v487, %v490
    %vm492 = vweird.f32 %v486
    %vm493 = vweird.f32 %v487
    %vm494 = vmor %vm492, %vm493
    %v495 = vsel %vm494, %v487, %v491
    %v496 = vand.u32 2147483647, %v486
    %vm497 = vcmp.eq.f32.partialorder %v496, 8.507059e+37
    %v498 = vand.u32 %v486, 2147483648
    %v499 = vor.u32 1.1754944e-38, %v498
    %v500 = vsel %vm497, %v499, %v495
    %v501 = vmul.f32 %v476, %v500
    %v502 = vmin.f32 %v501, 1.0
    %v503 = vmax.f32 %v502, -1.0
    %v504 = vmul.f32 %v303, %v303
    %v505 = vmin.f32 16.0, %v504
    %v506 = vmul.f32 %v505, 2.1237322e-06
    %v507 = vadd.f32 %v506, 0.00028619796
    %v508 = vmul.f32 %v505, %v507
    %v509 = vadd.f32 %v508, 0.0036580483
    %v510 = vmul.f32 %v505, %v509
    %v511 = vadd.f32 %v510, 0.05243302
    %v512 = vmul.f32 %v505, %v511
    %v513 = vadd.f32 %v512, 0.18741608
    %v514 = vmul.f32 %v505, %v513
    %v515 = vadd.f32 %v514, 1.1283791
    %v516 = vmul.f32 %v303, %v515
    %v517 = vmul.f32 %v505, 3.8918573e-05
    %v518 = vadd.f32 %v517, 0.001143296
    %v519 = vmul.f32 %v505, %v518
    %v520 = vadd.f32 %v519, 0.014752088
    %v521 = vmul.f32 %v505, %v520
    %v522 = vadd.f32 %v521, 0.112945676
    %v523 = vmul.f32 %v505, %v522
    %v524 = vadd.f32 %v523, 0.4994258
    %v525 = vmul.f32 %v505, %v524
    %v526 = vadd.f32 %v525, 1.0
    %v527 = vrcp.pop %v526
    %v528 = vmul.f32 %v526, %v527
    %v529 = vsub.f32 1.0, %v528
    %v530 = vmul.f32 %v527, %v529
    %v531 = vadd.f32 %v527, %v530
    %vm532 = vweird.f32 %v526
    %vm533 = vweird.f32 %v527
    %vm534 = vmor %vm532, %vm533
    %v535 = vsel %vm534, %v527, %v531
    %v536 = vand.u32 2147483647, %v526
    %vm537 = vcmp.eq.f32.partialorder %v536, 8.507059e+37
    %v538 = vand.u32 %v526, 2147483648
    %v539 = vor.u32 1.1754944e-38, %v538
    %v540 = vsel %vm537, %v539, %v535
    %v541 = vmul.f32 %v516, %v540
    %v542 = vmin.f32 %v541, 1.0
    %v543 = vmax.f32 %v542, -1.0
    %v544 = vadd.f32 %v343, 1.0
    %v545 = vadd.f32 %v383, 1.0
    %v546 = vadd.f32 %v423, 1.0
    %v547 = vadd.f32 %v463, 1.0
    %v548 = vadd.f32 %v503, 1.0
    %v549 = vadd.f32 %v543, 1.0
    %v550 = vmul.f32 %v292, %v544
    %v551 = vmul.f32 %v293, %v545
    %v552 = vmul.f32 %v294, %v546
    %v553 = vmul.f32 %v295, %v547
    %v554 = vmul.f32 %v296, %v548
    %v555 = vmul.f32 %v297, %v549
    %v556 = vpack.c.bf16 %v550, %v550
    %v557 = vpack.c.bf16 %v551, %v551
    %v558 = vpack.c.bf16 %v552, %v552
    %v559 = vpack.c.bf16 %v553, %v553
    %v560 = vpack.c.bf16 %v554, %v554
    %v561 = vpack.c.bf16 %v555, %v555
    %562 = vst [vmem:[%s5] sm:$0xf] %v556
    %563 = vst [vmem:[%s5 + $0x4] sm:$0xf] %v557
    %564 = vst [vmem:[%s5 + $0x8] sm:$0xf] %v558
    %565 = vst [vmem:[%s5 + $0xc] sm:$0xf] %v559
    %566 = vst [vmem:[%s5 + $0x10] sm:$0xf] %v560
    %567 = vst [vmem:[%s5 + $0x14] sm:$0xf] %v561
  $region29: #{_lambda_.13} parent=0 // pred_fallthru
    _
  // Predicated region
  $region30: #{_lambda_.13} parent=0 // pred_check
    _
  $region31: #{_lambda_.13} parent=0 // pred_check_branch
    %569 = sbr.rel (0) target = $region33
  $region32: #{_lambda_.13} parent=0 // pred_region
    _
  $region33: #{_lambda_.13} parent=0 // pred_fallthru
    _
  // Predicated region
  $region34: #{_lambda_.13} parent=0 // pred_check
    _
  $region35: #{_lambda_.13} parent=0 // pred_check_branch
    %571 = sbr.rel (0) target = $region37
  $region36: #{_lambda_.13} parent=0 // pred_region
    _
  $region37: #{_lambda_.13} parent=0 // pred_fallthru
    _

// kernel: _lambda_.14
$region0: #{_lambda_.14}
  #allocation0 [shape = 'u32[]', space=smem, size = 0x4, offset = 0x4, fixed_abs, tag = 'smem constant byte address 0x4 - core index']
  #allocation1 [shape = 'u32[72,128]{1,0:T(1,128)}', space=vmem, size = 0x9000, scoped, tag = 'internal scratch']
  #allocation2 [shape = 'f32[48,128]{1,0:T(8,128)}', space=vmem, size = 0x6000, scoped, tag = 'scratch operand']
  %s0 = inlined_call_operand.vmem [shape: bf16[48,128], index: 0, kind: input, shape index: {}]
  %s1 = inlined_call_operand.vmem [shape: bf16[128,128], index: 1, kind: input, shape index: {}]
  %s2 = inlined_call_operand.vmem [shape: f32[1,128], index: 2, kind: input, shape index: {}]
  %s3 = inlined_call_operand.vmem [shape: bf16[48,128], index: 3, kind: input, shape index: {}]
  %s4 = inlined_call_operand.vmem [shape: bf16[48,128], index: 4, kind: output, shape index: {}]
  %s5 = sld [smem:[#allocation0]]
  $region34: #{_lambda_.14} parent=0
    _
  %s7 = ssub.s32 1, %s5
  %s8 = scalar_select 0, %s7, %s5
  // Predicated region
  $region2: #{_lambda_.14} parent=0 // pred_check
    _
  $region3: #{_lambda_.14} parent=0 // pred_check_branch
    %10 = sbr.rel (0) target = $region5
  $region4: #{_lambda_.14} parent=0 // pred_region
    _
  $region5: #{_lambda_.14} parent=0 // pred_fallthru
    _
  // Predicated region
  $region6: #{_lambda_.14} parent=0 // pred_check
    _
  $region7: #{_lambda_.14} parent=0 // pred_check_branch
    %12 = sbr.rel (0) target = $region9
  $region8: #{_lambda_.14} parent=0 // pred_region
    _
  $region9: #{_lambda_.14} parent=0 // pred_fallthru
    _
  // Predicated region
  $region10: #{_lambda_.14} parent=0 // pred_check
    _
  $region11: #{_lambda_.14} parent=0 // pred_check_branch
    %14 = sbr.rel (0) target = $region13
  $region12: #{_lambda_.14} parent=0 // pred_region
    _
  $region13: #{_lambda_.14} parent=0 // pred_fallthru
    _
  // Predicated region
  $region14: #{_lambda_.14} parent=0 // pred_check
    _
  $region15: #{_lambda_.14} parent=0 // pred_check_branch
    %16 = sbr.rel (0) target = $region17
  $region16: #{_lambda_.14} parent=0 // pred_region
    _
  $region17: #{_lambda_.14} parent=0 // pred_fallthru
    _
  %p17 = scmp.eq.s32.totalorder 0, 0
  // Predicated region
  $region18: #{_lambda_.14} parent=0 // pred_check
    %p18 = pneg %p17
  $region19: #{_lambda_.14} parent=0 // pred_check_branch
    %20 = sbr.rel (%p18) target = $region21
  $region20: #{_lambda_.14} parent=0 // pred_region
    %21 = vst [vmem:[#allocation2] sm:$0xff] 0.0
    %22 = vst [vmem:[#allocation2 + $0x8] sm:$0xff] 0.0
    %23 = vst [vmem:[#allocation2 + $0x10] sm:$0xff] 0.0
    %24 = vst [vmem:[#allocation2 + $0x18] sm:$0xff] 0.0
    %25 = vst [vmem:[#allocation2 + $0x20] sm:$0xff] 0.0
    %26 = vst [vmem:[#allocation2 + $0x28] sm:$0xff] 0.0
  $region21: #{_lambda_.14} parent=0 // pred_fallthru
    _
  %v27 = vld [vmem:[%s0] sm:$0xf]
  %v28 = vld [vmem:[%s0 + $0x4] sm:$0xf]
  %v29 = vld [vmem:[%s0 + $0x8] sm:$0xf]
  %v30 = vld [vmem:[%s0 + $0xc] sm:$0xf]
  %v31 = vld [vmem:[%s0 + $0x10] sm:$0xf]
  %v32 = vld [vmem:[%s0 + $0x14] sm:$0xf]
  %v33 = vld [vmem:[#allocation2] sm:$0xff]
  %v34 = vld [vmem:[#allocation2 + $0x8] sm:$0xff]
  %v35 = vld [vmem:[#allocation2 + $0x10] sm:$0xff]
  %v36 = vld [vmem:[#allocation2 + $0x18] sm:$0xff]
  %v37 = vld [vmem:[#allocation2 + $0x20] sm:$0xff]
  %v38 = vld [vmem:[#allocation2 + $0x28] sm:$0xff]
  %v39 = vld [vmem:[%s1] sm:$0xf]
  %v40 = vld [vmem:[%s1 + $0x4] sm:$0xf]
  %v41 = vld [vmem:[%s1 + $0x8] sm:$0xf]
  %v42 = vld [vmem:[%s1 + $0xc] sm:$0xf]
  %v43 = vld [vmem:[%s1 + $0x10] sm:$0xf]
  %v44 = vld [vmem:[%s1 + $0x14] sm:$0xf]
  %v45 = vld [vmem:[%s1 + $0x18] sm:$0xf]
  %v46 = vld [vmem:[%s1 + $0x1c] sm:$0xf]
  %v47 = vld [vmem:[%s1 + $0x20] sm:$0xf]
  %v48 = vld [vmem:[%s1 + $0x24] sm:$0xf]
  %v49 = vld [vmem:[%s1 + $0x28] sm:$0xf]
  %v50 = vld [vmem:[%s1 + $0x2c] sm:$0xf]
  %v51 = vld [vmem:[%s1 + $0x30] sm:$0xf]
  %v52 = vld [vmem:[%s1 + $0x34] sm:$0xf]
  %v53 = vld [vmem:[%s1 + $0x38] sm:$0xf]
  %v54 = vld [vmem:[%s1 + $0x3c] sm:$0xf]
  %v61 = vunpack.c.l.b16 %v27
  %v62 = vunpack.c.l.b16 %v28
  %v63 = vunpack.c.l.b16 %v29
  %v64 = vunpack.c.l.b16 %v30
  %v65 = vunpack.c.l.b16 %v31
  %v66 = vunpack.c.l.b16 %v32
  %v67 = vpack.c.b16 %v62, %v61
  %v68 = vpack.c.b16 %v64, %v63
  %v69 = vpack.c.b16 %v66, %v65
  %v89 = vunpack.c.l.b16 %v39
  %v90 = vunpack.c.l.b16 %v40
  %v91 = vunpack.c.l.b16 %v41
  %v92 = vunpack.c.l.b16 %v42
  %v93 = vunpack.c.l.b16 %v43
  %v94 = vunpack.c.l.b16 %v44
  %v95 = vunpack.c.l.b16 %v45
  %v96 = vunpack.c.l.b16 %v46
  %v97 = vunpack.c.l.b16 %v47
  %v98 = vunpack.c.l.b16 %v48
  %v99 = vunpack.c.l.b16 %v49
  %v100 = vunpack.c.l.b16 %v50
  %v101 = vunpack.c.l.b16 %v51
  %v102 = vunpack.c.l.b16 %v52
  %v103 = vunpack.c.l.b16 %v53
  %v104 = vunpack.c.l.b16 %v54
  %v105 = vpack.c.b16 %v90, %v89
  %v106 = vpack.c.b16 %v92, %v91
  %v107 = vpack.c.b16 %v94, %v93
  %v108 = vpack.c.b16 %v96, %v95
  %v109 = vpack.c.b16 %v98, %v97
  %v110 = vpack.c.b16 %v100, %v99
  %v111 = vpack.c.b16 %v102, %v101
  %v112 = vpack.c.b16 %v104, %v103
  %121 = vmatpush.bf16.msra.mxu0 %v112
  %122 = vmatpush.bf16.msra.mxu0 %v111
  %123 = vmatpush.bf16.msra.mxu0 %v110
  %124 = vmatpush.bf16.msra.mxu0 %v109
  %125 = vmatpush.bf16.msra.mxu0 %v108
  %126 = vmatpush.bf16.msra.mxu0 %v107
  %127 = vmatpush.bf16.msra.mxu0 %v106
  %128 = vmatpush.bf16.msra.mxu0 %v105
  %129 = vmatmul.bf16.gmra.mxu0 %v67
  %v130 = vpop.f32.mrf.mxu0
  %v131 = vadd.f32 0.0, %v130
  %v132 = vpop.f32.mrf.mxu0
  %v133 = vadd.f32 0.0, %v132
  %134 = vmatmul.bf16.gmra.mxu0 %v68
  %v135 = vpop.f32.mrf.mxu0
  %v136 = vadd.f32 0.0, %v135
  %v137 = vpop.f32.mrf.mxu0
  %v138 = vadd.f32 0.0, %v137
  %139 = vmatmul.bf16.gmra.mxu0 %v69
  %v140 = vpop.f32.mrf.mxu0
  %v141 = vadd.f32 0.0, %v140
  %v142 = vpop.f32.mrf.mxu0
  %v143 = vadd.f32 0.0, %v142
  %144 = vdwg.mxu0
  %v145 = vadd.f32 %v33, %v131
  %v146 = vadd.f32 %v34, %v133
  %v147 = vadd.f32 %v35, %v136
  %v148 = vadd.f32 %v36, %v138
  %v149 = vadd.f32 %v37, %v141
  %v150 = vadd.f32 %v38, %v143
  %151 = vst [vmem:[#allocation2] sm:$0xff] %v145
  %152 = vst [vmem:[#allocation2 + $0x8] sm:$0xff] %v146
  %153 = vst [vmem:[#allocation2 + $0x10] sm:$0xff] %v147
  %154 = vst [vmem:[#allocation2 + $0x18] sm:$0xff] %v148
  %155 = vst [vmem:[#allocation2 + $0x20] sm:$0xff] %v149
  %156 = vst [vmem:[#allocation2 + $0x28] sm:$0xff] %v150
  // Predicated region
  $region22: #{_lambda_.14} parent=0 // pred_check
    %p157 = pneg %p17
  $region23: #{_lambda_.14} parent=0 // pred_check_branch
    %159 = sbr.rel (%p157) target = $region25
  $region24: #{_lambda_.14} parent=0 // pred_region
    %v160 = vld [vmem:[#allocation2] sm:$0xff]
    %v161 = vld [vmem:[#allocation2 + $0x8] sm:$0xff]
    %v162 = vld [vmem:[#allocation2 + $0x10] sm:$0xff]
    %v163 = vld [vmem:[#allocation2 + $0x18] sm:$0xff]
    %v164 = vld [vmem:[#allocation2 + $0x20] sm:$0xff]
    %v165 = vld [vmem:[#allocation2 + $0x28] sm:$0xff]
    %v166 = vld [vmem:[%s2] sm:$0x1]
    %v168 = vperm.slane %v166, 0
    %v170 = vadd.f32 %v160, %v168
    %v171 = vadd.f32 %v161, %v168
    %v172 = vadd.f32 %v162, %v168
    %v173 = vadd.f32 %v163, %v168
    %v174 = vadd.f32 %v164, %v168
    %v175 = vadd.f32 %v165, %v168
    %v176 = vld [vmem:[%s3] sm:$0xf]
    %v177 = vld [vmem:[%s3 + $0x4] sm:$0xf]
    %v178 = vld [vmem:[%s3 + $0x8] sm:$0xf]
    %v179 = vld [vmem:[%s3 + $0xc] sm:$0xf]
    %v180 = vld [vmem:[%s3 + $0x10] sm:$0xf]
    %v181 = vld [vmem:[%s3 + $0x14] sm:$0xf]
    %v182 = vunpack.c.l.bf16 %v176
    %v183 = vunpack.c.l.bf16 %v177
    %v184 = vunpack.c.l.bf16 %v178
    %v185 = vunpack.c.l.bf16 %v179
    %v186 = vunpack.c.l.bf16 %v180
    %v187 = vunpack.c.l.bf16 %v181
    %v188 = vadd.f32 %v170, %v182
    %v189 = vadd.f32 %v171, %v183
    %v190 = vadd.f32 %v172, %v184
    %v191 = vadd.f32 %v173, %v185
    %v192 = vadd.f32 %v174, %v186
    %v193 = vadd.f32 %v175, %v187
    %v194 = vpack.c.bf16 %v188, %v188
    %v195 = vpack.c.bf16 %v189, %v189
    %v196 = vpack.c.bf16 %v190, %v190
    %v197 = vpack.c.bf16 %v191, %v191
    %v198 = vpack.c.bf16 %v192, %v192
    %v199 = vpack.c.bf16 %v193, %v193
    %200 = vst [vmem:[%s4] sm:$0xf] %v194
    %201 = vst [vmem:[%s4 + $0x4] sm:$0xf] %v195
    %202 = vst [vmem:[%s4 + $0x8] sm:$0xf] %v196
    %203 = vst [vmem:[%s4 + $0xc] sm:$0xf] %v197
    %204 = vst [vmem:[%s4 + $0x10] sm:$0xf] %v198
    %205 = vst [vmem:[%s4 + $0x14] sm:$0xf] %v199
  $region25: #{_lambda_.14} parent=0 // pred_fallthru
    _
  // Predicated region
  $region26: #{_lambda_.14} parent=0 // pred_check
    _
  $region27: #{_lambda_.14} parent=0 // pred_check_branch
    %207 = sbr.rel (0) target = $region29
  $region28: #{_lambda_.14} parent=0 // pred_region
    _
  $region29: #{_lambda_.14} parent=0 // pred_fallthru
    _
  // Predicated region
  $region30: #{_lambda_.14} parent=0 // pred_check
    _
  $region31: #{_lambda_.14} parent=0 // pred_check_branch
    %209 = sbr.rel (0) target = $region33
  $region32: #{_lambda_.14} parent=0 // pred_region
    _
  $region33: #{_lambda_.14} parent=0 // pred_fallthru
    _

// kernel: _lambda_.19
$region0: #{_lambda_.19}
  #allocation0 [shape = 'u32[]', space=smem, size = 0x4, offset = 0x4, fixed_abs, tag = 'smem constant byte address 0x4 - core index']
  #allocation1 [shape = 'u32[72,128]{1,0:T(1,128)}', space=vmem, size = 0x9000, scoped, tag = 'internal scratch']
  #allocation2 [shape = 'f32[16,128]{1,0:T(8,128)}', space=vmem, size = 0x2000, scoped, tag = 'scratch operand']
  %s0 = inlined_call_operand.vmem [shape: bf16[16,32], index: 0, kind: input, shape index: {}]
  %s1 = inlined_call_operand.vmem [shape: bf16[32,128], index: 1, kind: input, shape index: {}]
  %s2 = inlined_call_operand.vmem [shape: f32[1,128], index: 2, kind: input, shape index: {}]
  %s3 = inlined_call_operand.vmem [shape: f32[1,32], index: 3, kind: input, shape index: {}]
  %s4 = inlined_call_operand.vmem [shape: f32[1,32], index: 4, kind: input, shape index: {}]
  %s5 = inlined_call_operand.vmem [shape: f32[16,128], index: 5, kind: output, shape index: {}]
  %s6 = sld [smem:[#allocation0]]
  $region38: #{_lambda_.19} parent=0
    _
  %s8 = ssub.s32 1, %s6
  %s9 = scalar_select 0, %s8, %s6
  // Predicated region
  $region2: #{_lambda_.19} parent=0 // pred_check
    _
  $region3: #{_lambda_.19} parent=0 // pred_check_branch
    %11 = sbr.rel (0) target = $region5
  $region4: #{_lambda_.19} parent=0 // pred_region
    _
  $region5: #{_lambda_.19} parent=0 // pred_fallthru
    _
  // Predicated region
  $region6: #{_lambda_.19} parent=0 // pred_check
    _
  $region7: #{_lambda_.19} parent=0 // pred_check_branch
    %13 = sbr.rel (0) target = $region9
  $region8: #{_lambda_.19} parent=0 // pred_region
    _
  $region9: #{_lambda_.19} parent=0 // pred_fallthru
    _
  // Predicated region
  $region10: #{_lambda_.19} parent=0 // pred_check
    _
  $region11: #{_lambda_.19} parent=0 // pred_check_branch
    %15 = sbr.rel (0) target = $region13
  $region12: #{_lambda_.19} parent=0 // pred_region
    _
  $region13: #{_lambda_.19} parent=0 // pred_fallthru
    _
  // Predicated region
  $region14: #{_lambda_.19} parent=0 // pred_check
    _
  $region15: #{_lambda_.19} parent=0 // pred_check_branch
    %17 = sbr.rel (0) target = $region17
  $region16: #{_lambda_.19} parent=0 // pred_region
    _
  $region17: #{_lambda_.19} parent=0 // pred_fallthru
    _
  // Predicated region
  $region18: #{_lambda_.19} parent=0 // pred_check
    _
  $region19: #{_lambda_.19} parent=0 // pred_check_branch
    %19 = sbr.rel (0) target = $region21
  $region20: #{_lambda_.19} parent=0 // pred_region
    _
  $region21: #{_lambda_.19} parent=0 // pred_fallthru
    _
  %p21 = scmp.eq.s32.totalorder 0, 0
  // Predicated region
  $region22: #{_lambda_.19} parent=0 // pred_check
    %p22 = pneg %p21
  $region23: #{_lambda_.19} parent=0 // pred_check_branch
    %24 = sbr.rel (%p22) target = $region25
  $region24: #{_lambda_.19} parent=0 // pred_region
    %25 = vst [vmem:[#allocation2] sm:$0xff] 0.0
    %26 = vst [vmem:[#allocation2 + $0x8] sm:$0xff] 0.0
  $region25: #{_lambda_.19} parent=0 // pred_fallthru
    _
  %v27 = vld [vmem:[%s0] sm:$0xf]
  %v28 = vld [vmem:[%s0 + $0x4] sm:$0xf]
  %v29 = vunpack.c.l.bf16 %v27
  %v30 = vunpack.c.l.bf16 %v28
  %vm31 = vcmask 261120
  %v32 = vsel %vm31, %v29, 0.0
  %33 = vadd.xlane.f32.xlu0 %v32
  %v34 = vpop.xlane.xlu0 %33
  %v35 = vsel %vm31, %v30, 0.0
  %36 = vadd.xlane.f32.xlu0 %v35
  %v37 = vpop.xlane.xlu0 %36
  %v38 = vrcp.pop 32.0
  %v39 = vmul.f32 32.0, %v38
  %v40 = vsub.f32 1.0, %v39
  %v41 = vmul.f32 %v38, %v40
  %v42 = vadd.f32 %v38, %v41
  %vm43 = vweird.f32 %v38
  %v44 = vsel %vm43, %v38, %v42
  %v45 = vmul.f32 %v34, %v44
  %v46 = vmul.f32 %v37, %v44
  %v47 = vsub.f32 %v29, %v45
  %v48 = vsub.f32 %v30, %v46
  %v49 = vmul.f32 %v47, %v47
  %v50 = vmul.f32 %v48, %v48
  %v51 = vsel %vm31, %v49, 0.0
  %52 = vadd.xlane.f32.xlu0 %v51
  %v53 = vpop.xlane.xlu0 %52
  %v54 = vsel %vm31, %v50, 0.0
  %55 = vadd.xlane.f32.xlu0 %v54
  %v56 = vpop.xlane.xlu0 %55
  %v57 = vmul.f32 %v53, %v44
  %v58 = vmul.f32 %v56, %v44
  %v59 = vadd.f32 %v57, 1e-06
  %v60 = vadd.f32 %v58, 1e-06
  %v61 = vrsqrt.pop %v59
  %v62 = vmul.f32 %v61, %v59
  %v63 = vmul.f32 %v62, %v61
  %v64 = vmul.f32 0.5, %v63
  %v65 = vsub.f32 1.5, %v64
  %v66 = vmul.f32 %v61, %v65
  %vm67 = vweird.f32 %v59
  %vm68 = vweird.f32 %v61
  %vm69 = vmor %vm67, %vm68
  %v70 = vsel %vm69, %v61, %v66
  %v71 = vrsqrt.pop %v60
  %v72 = vmul.f32 %v71, %v60
  %v73 = vmul.f32 %v72, %v71
  %v74 = vmul.f32 0.5, %v73
  %v75 = vsub.f32 1.5, %v74
  %v76 = vmul.f32 %v71, %v75
  %vm77 = vweird.f32 %v60
  %vm78 = vweird.f32 %v71
  %vm79 = vmor %vm77, %vm78
  %v80 = vsel %vm79, %v71, %v76
  %v81 = vmul.f32 %v47, %v70
  %v82 = vmul.f32 %v48, %v80
  %v83 = vld [vmem:[%s3] sm:$0x1]
  %v85 = vperm.slane %v83, 0
  %v87 = vmul.f32 %v81, %v85
  %v88 = vmul.f32 %v82, %v85
  %v89 = vld [vmem:[%s4] sm:$0x1]
  %v91 = vperm.slane %v89, 0
  %v93 = vadd.f32 %v87, %v91
  %v94 = vadd.f32 %v88, %v91
  %v95 = vpack.c.bf16 %v94, %v93
  %v96 = vld [vmem:[#allocation2] sm:$0xff]
  %v97 = vld [vmem:[#allocation2 + $0x8] sm:$0xff]
  %v98 = vld [vmem:[%s1] sm:$0xf]
  %v99 = vld [vmem:[%s1 + $0x4] sm:$0xf]
  %v100 = vld [vmem:[%s1 + $0x8] sm:$0xf]
  %v101 = vld [vmem:[%s1 + $0xc] sm:$0xf]
  %v106 = vunpack.c.l.b16 %v98
  %v107 = vunpack.c.l.b16 %v99
  %v108 = vunpack.c.l.b16 %v100
  %v109 = vunpack.c.l.b16 %v101
  %v110 = vpack.c.b16 %v107, %v106
  %v111 = vpack.c.b16 %v109, %v108
  %v115 = vsel %vm31, %v95, 0
  %117 = vmatpush.bf16.msra.mxu0 0
  %118 = vmatpush.bf16.msra.mxu0 0
  %119 = vmatpush.bf16.msra.mxu0 0
  %120 = vmatpush.bf16.msra.mxu0 0
  %121 = vmatpush.bf16.msra.mxu0 0
  %122 = vmatpush.bf16.msra.mxu0 0
  %123 = vmatpush.bf16.msra.mxu0 %v111
  %124 = vmatpush.bf16.msra.mxu0 %v110
  %125 = vmatmul.bf16.gmra.mxu0 %v115
  %v126 = vpop.f32.mrf.mxu0
  %v127 = vadd.f32 0.0, %v126
  %v128 = vpop.f32.mrf.mxu0
  %v129 = vadd.f32 0.0, %v128
  %130 = vdwg.mxu0
  %v131 = vadd.f32 %v96, %v127
  %v132 = vadd.f32 %v97, %v129
  %133 = vst [vmem:[#allocation2] sm:$0xff] %v131
  %134 = vst [vmem:[#allocation2 + $0x8] sm:$0xff] %v132
  // Predicated region
  $region26: #{_lambda_.19} parent=0 // pred_check
    %p135 = pneg %p21
  $region27: #{_lambda_.19} parent=0 // pred_check_branch
    %137 = sbr.rel (%p135) target = $region29
  $region28: #{_lambda_.19} parent=0 // pred_region
    %v138 = vld [vmem:[#allocation2] sm:$0xff]
    %v139 = vld [vmem:[#allocation2 + $0x8] sm:$0xff]
    %v140 = vld [vmem:[%s2] sm:$0x1]
    %v142 = vperm.slane %v140, 0
    %v144 = vadd.f32 %v138, %v142
    %v145 = vadd.f32 %v139, %v142
    %146 = vst [vmem:[%s5] sm:$0xff] %v144
    %147 = vst [vmem:[%s5 + $0x8] sm:$0xff] %v145
  $region29: #{_lambda_.19} parent=0 // pred_fallthru
    _
  // Predicated region
  $region30: #{_lambda_.19} parent=0 // pred_check
    _
  $region31: #{_lambda_.19} parent=0 // pred_check_branch
    %149 = sbr.rel (0) target = $region33
  $region32: #{_lambda_.19} parent=0 // pred_region
    _
  $region33: #{_lambda_.19} parent=0 // pred_fallthru
    _
  // Predicated region
  $region34: #{_lambda_.19} parent=0 // pred_check
    _
  $region35: #{_lambda_.19} parent=0 // pred_check_branch
    %151 = sbr.rel (0) target = $region37
  $region36: #{_lambda_.19} parent=0 // pred_region
    _
  $region37: #{_lambda_.19} parent=0 // pred_fallthru
    _

</llo_original>
